<compile_context>
chip_gen: v6e
topology: v6e:2x2x1
jax: 0.10.0
libtpu: 0.0.40
codegen_flags: <defaults>
</compile_context>

<pallas_src>
import functools

import numpy as np
import jax
import jax.numpy as jnp
from jax import lax
from jax.experimental import pallas as pl
from jax.experimental.pallas import tpu as pltpu


def _round_up(a, b):
    return ((a + b - 1) // b) * b


def _vmem_limit_bytes():
    """Scoped-VMEM limit handed to Mosaic, derived from chip capacity."""
    try:
        cap = int(pltpu.get_tpu_info().vmem_capacity_bytes)
    except Exception:            # conservative fallback: v7x per-core VMEM
        cap = 64 << 20
    return max(16 << 20, min(cap * 3 // 4, 96 << 20))


def _full_spec_1d(arr):
    nd = arr.ndim
    return pl.BlockSpec(arr.shape, lambda i, _nd=nd: (0,) * _nd)


def _full_spec_2d(arr):
    nd = arr.ndim
    return pl.BlockSpec(arr.shape, lambda b, c, _nd=nd: (0,) * _nd)


def _pad_rows(a, n_pad):
    n = a.shape[0]
    return a if n == n_pad else jnp.pad(a, ((0, n_pad - n), (0, 0)))


# ---------------------------------------------------------------------------
# Phase 1: h-independent, batched over all T*B rows (embarrassingly parallel).
# ---------------------------------------------------------------------------
def _rin_precompute_kernel(
    x_ref, xhat_ref, m_ref, d_ref,        # [NB, F] row blocks
    wtd_ref, btd_ref,                      # [F, H], [1, H]
    wv_ref, bv_ref,                        # [F, F], [1, F]
    wihm_ref, bi3_ref,                     # [F, 3H], [1, 3H]
    xu_ref,                                # out: [NB, F]   (module `xus`)
    gamma_ref,                             # out: [NB, H]   temporal decay
    gim_ref,                               # out: [NB, 3H]  m@Wih_m + GRU biases
):
    f32 = jnp.float32
    x = x_ref[...]
    xh = xhat_ref[...]
    mm = m_ref[...]

    gamma_ref[...] = jnp.exp(-jnp.maximum(
        jnp.dot(d_ref[...], wtd_ref[...], preferred_element_type=f32)
        + btd_ref[...], 0.0))
    xbar = mm * x + (1.0 - mm) * xh
    xu_ref[...] = (jnp.dot(xbar, wv_ref[...], preferred_element_type=f32)
                   + bv_ref[...])
    gim_ref[...] = (jnp.dot(mm, wihm_ref[...], preferred_element_type=f32)
                    + bi3_ref[...])


# ---------------------------------------------------------------------------
# Phase 2: the recurrence, Tc timesteps per chunk, one batch-split per b.
# ---------------------------------------------------------------------------
def _rin_recurrent_kernel(
    x_ref, m_ref, xu_ref,        # [Bs, Tc, F]
    gamma_ref,                   # [Bs, Tc, H]
    gim_ref,                     # [Bs, Tc, 3H]
    wh_ref,                      # [H, F+3H]  (Whist | Whh_r | Whh_z | Whh_n)
    bhist_ref,                   # [1, F]
    wr_ref, br_ref,              # [F, F], [1, F]
    wihx_ref,                    # [F, 3H]    (Wih_rx | Wih_zx | Wih_nx)
    bhn_ref,                     # [1, H]
    conv_ref,                    # SMEM (3,) = [w0, w1, bias] of Conv1d(2,1,1)
    # outputs
    ximp_ref, xr_ref,            # [Bs, Tc, F]
    num_ref, den_ref,            # [Bs, Tc, 1] per-(row,t) loss partials
    hout_ref,                    # [1, Bs, H]  final hidden state of this split
    # scratch
    h_sc,                        # [Bs, H]     hidden carry across time chunks
    *, T_total, Tc, F, H,
):
    f32 = jnp.float32
    c = pl.program_id(1)
    n_chunks = pl.num_programs(1)
    Bs = x_ref.shape[0]

    @pl.when(c == 0)
    def _():
        h_sc[...] = jnp.zeros_like(h_sc)

    # Resident weights / scalars hoisted out of the time loop.
    wh = wh_ref[...]
    bhist = bhist_ref[...]
    wr = wr_ref[...]
    br = br_ref[...]
    wihx = wihx_ref[...]
    bhn = bhn_ref[...]
    w0 = conv_ref[0]
    w1 = conv_ref[1]
    cb = conv_ref[2]

    def step(t, h):
        ts = pl.ds(t, 1)
        x_t = x_ref[:, ts, :].reshape(Bs, F)
        m_t = m_ref[:, ts, :].reshape(Bs, F)
        xu_t = xu_ref[:, ts, :].reshape(Bs, F)
        gamma_t = gamma_ref[:, ts, :].reshape(Bs, H)
        gim_t = gim_ref[:, ts, :].reshape(Bs, 3 * H)

        h = h * gamma_t                                    # temporal decay
        # Single fused MXU push for both h-matmuls (hist + GRU hidden gates).
        hm = jnp.dot(h, wh, preferred_element_type=f32)    # [Bs, F+3H]
        x_h = hm[:, :F] + bhist
        gh = hm[:, F:]                                     # [Bs, 3H]

        one_m = 1.0 - m_t
        mx = m_t * x_t
        x_r = mx + one_m * x_h
        xr_t = jnp.dot(x_r, wr, preferred_element_type=f32) + br
        x_comb = w0 * xu_t + w1 * xr_t + cb                # Conv1d(2,1,1) mix
        x_imp = mx + one_m * x_comb

        # GRUCell(input=[x_imp, m]); mask-side terms + biases precomputed.
        gi = jnp.dot(x_imp, wihx, preferred_element_type=f32) + gim_t
        r = jax.nn.sigmoid(gi[:, :H] + gh[:, :H])
        z = jax.nn.sigmoid(gi[:, H:2 * H] + gh[:, H:2 * H])
        n = jnp.tanh(gi[:, 2 * H:] + r * (gh[:, 2 * H:] + bhn))
        h = (1.0 - z) * n + z * h

        ximp_ref[:, ts, :] = x_imp.reshape(Bs, 1, F)
        xr_ref[:, ts, :] = xr_t.reshape(Bs, 1, F)
        # Deferred masked-L1 loss: only lane-reduced partials stored per step;
        # the cross-row reduce and division happen once in the wrapper.
        num_ref[:, ts, :] = jnp.sum(jnp.abs(x_t - x_comb) * m_t, axis=-1,
                                    keepdims=True).reshape(Bs, 1, 1)
        den_ref[:, ts, :] = jnp.sum(m_t, axis=-1,
                                    keepdims=True).reshape(Bs, 1, 1)
        return h

    h0 = h_sc[...]
    if T_total % Tc == 0:
        # Partial unroll lets the scheduler overlap stores / VPU work with the
        # next step's MXU pushes.
        h_last = lax.fori_loop(0, Tc, step, h0, unroll=min(Tc, 8))
    else:
        steps = jnp.minimum(Tc, T_total - c * Tc)          # ragged last chunk
        h_last = lax.fori_loop(0, steps, step, h0)
    h_sc[...] = h_last

    @pl.when(c == n_chunks - 1)
    def _():
        hout_ref[...] = h_last.reshape(1, Bs, H)


def rin_forward(x, x_hat, u, m, d, params):
    """Mirrors RIN.forward(x, x_hat, u, m, d, h=None, get_y=False), unc_flag=0."""
    del u  # unc_flag == 0 path: u is unused
    B, T, F = x.shape
    H = params["btd"].shape[1]
    f32 = jnp.float32

    if T == 0:  # degenerate guard: the time loop never produces loss / h
        z = jnp.zeros((B, 0, F), f32)
        return z, 0, 0, jnp.float32(0.0), z, z, jnp.zeros((B, H), f32)

    # ---- host-side (one-time) weight fusion --------------------------------
    wihx3 = jnp.concatenate(
        [params["wih_rx"], params["wih_zx"], params["wih_nx"]], axis=1)  # [F,3H]
    wihm3 = jnp.concatenate(
        [params["wih_rm"], params["wih_zm"], params["wih_nm"]], axis=1)  # [F,3H]
    bi3 = jnp.concatenate(
        [params["bg_r"], params["bg_z"], params["bi_n"]], axis=1)        # [1,3H]
    wh_fused = jnp.concatenate(
        [params["whist"], params["whh_r"], params["whh_z"], params["whh_n"]],
        axis=1)                                                          # [H,F+3H]

    vmem_limit = _vmem_limit_bytes()

    # ---- phase 1: batched h-independent precompute over all T*B rows -------
    N = B * T
    p1_row_bytes = 4 * (5 * F + 4 * H) * 2            # in + out, double-buffered
    p1_weight_bytes = 4 * (F * H + H + F * F + F + F * 3 * H + 3 * H)
    p1_budget = vmem_limit - p1_weight_bytes - (2 << 20)
    nb_budget = max(8, (p1_budget // p1_row_bytes) // 8 * 8)
    NB = min(nb_budget, _round_up(N, 8))
    if N > 8:                                          # >=2 blocks for megacore
        NB = min(NB, _round_up(pl.cdiv(N, 2), 8))
    N_pad = _round_up(N, NB)
    n_row_blocks = N_pad // NB

    def p1_rows(width):
        return pl.BlockSpec((NB, width), lambda i: (i, 0))

    x2 = _pad_rows(x.reshape(N, F), N_pad)
    xh2 = _pad_rows(x_hat.reshape(N, F), N_pad)
    m2 = _pad_rows(m.reshape(N, F), N_pad)
    d2 = _pad_rows(d.reshape(N, F), N_pad)

    xu2, gamma2, gim2 = pl.pallas_call(
        _rin_precompute_kernel,
        out_shape=(jax.ShapeDtypeStruct((N_pad, F), f32),
                   jax.ShapeDtypeStruct((N_pad, H), f32),
                   jax.ShapeDtypeStruct((N_pad, 3 * H), f32)),
        grid_spec=pltpu.PrefetchScalarGridSpec(
            num_scalar_prefetch=0,
            grid=(n_row_blocks,),
            in_specs=[p1_rows(F), p1_rows(F), p1_rows(F), p1_rows(F),
                      _full_spec_1d(params["wtd"]), _full_spec_1d(params["btd"]),
                      _full_spec_1d(params["wv"]), _full_spec_1d(params["bv"]),
                      _full_spec_1d(wihm3), _full_spec_1d(bi3)],
            out_specs=(p1_rows(F), p1_rows(H), p1_rows(3 * H)),
        ),
        compiler_params=pltpu.CompilerParams(
            dimension_semantics=("parallel",),
            vmem_limit_bytes=vmem_limit),
    )(x2, xh2, m2, d2, params["wtd"], params["btd"], params["wv"],
      params["bv"], wihm3, bi3)

    # Free reshapes only (no transpose / stack round-trips through HBM).
    xus = xu2[:N].reshape(B, T, F)                      # module `xus` output
    gamma = gamma2[:N].reshape(B, T, H)
    gim = gim2[:N].reshape(B, T, 3 * H)

    # ---- phase 2: the recurrence, (batch-split, time-chunk) grid ------------
    n_bsplit = 2 if (B % 2 == 0 and B >= 2) else 1      # v7x: one split per TC
    Bs = B // n_bsplit

    p2_step_bytes = 4 * Bs * (5 * F + 4 * H + 2) * 2    # double-buffered
    p2_weight_bytes = (4 * (H * (F + 3 * H) + F + F * F + F + F * 3 * H + H)
                       + 4 * Bs * H)
    p2_budget = vmem_limit - p2_weight_bytes - (2 << 20)
    tc_budget = max(8, (p2_budget // p2_step_bytes) // 8 * 8)
    if T <= tc_budget:
        Tc, n_chunks, T_pad = T, 1, T
    else:
        Tc = min(tc_budget, 512)
        n_chunks = pl.cdiv(T, Tc)
        T_pad = n_chunks * Tc

    xs, ms, xuss, gammas, gims = x, m, xus, gamma, gim
    if T_pad != T:
        pad = ((0, 0), (0, T_pad - T), (0, 0))
        xs = jnp.pad(xs, pad)
        ms = jnp.pad(ms, pad)
        xuss = jnp.pad(xuss, pad)
        gammas = jnp.pad(gammas, pad)
        gims = jnp.pad(gims, pad)

    in_f = pl.BlockSpec((Bs, Tc, F), lambda b, c: (b, c, 0))
    in_h = pl.BlockSpec((Bs, Tc, H), lambda b, c: (b, c, 0))
    in_3h = pl.BlockSpec((Bs, Tc, 3 * H), lambda b, c: (b, c, 0))
    out_1 = pl.BlockSpec((Bs, Tc, 1), lambda b, c: (b, c, 0))
    out_hh = pl.BlockSpec((1, Bs, H), lambda b, c: (b, 0, 0))

    mm_flops = 2 * T * B * (H * (F + 3 * H) + F * F + 3 * F * H)
    cost = pl.CostEstimate(
        flops=int(mm_flops + 40 * T * B * max(F, H)),
        transcendentals=int(3 * T * B * H),
        bytes_accessed=int(4 * (B * T_pad * (5 * F + 4 * H + 2) + B * H)))

    kernel = functools.partial(_rin_recurrent_kernel,
                               T_total=T, Tc=Tc, F=F, H=H)
    ximp_o, xr_o, num_o, den_o, h_o = pl.pallas_call(
        kernel,
        out_shape=(jax.ShapeDtypeStruct((B, T_pad, F), f32),
                   jax.ShapeDtypeStruct((B, T_pad, F), f32),
                   jax.ShapeDtypeStruct((B, T_pad, 1), f32),
                   jax.ShapeDtypeStruct((B, T_pad, 1), f32),
                   jax.ShapeDtypeStruct((n_bsplit, Bs, H), f32)),
        grid_spec=pltpu.PrefetchScalarGridSpec(
            num_scalar_prefetch=0,
            grid=(n_bsplit, n_chunks),
            in_specs=[
                in_f, in_f, in_f, in_h, in_3h,
                _full_spec_2d(wh_fused), _full_spec_2d(params["bhist"]),
                _full_spec_2d(params["wr"]), _full_spec_2d(params["br"]),
                _full_spec_2d(wihx3), _full_spec_2d(params["bh_n"]),
                pl.BlockSpec(memory_space=pltpu.MemorySpace.SMEM),  # conv scalars
            ],
            out_specs=(in_f, in_f, out_1, out_1, out_hh),
            scratch_shapes=[pltpu.VMEM((Bs, H), f32)],   # hidden-state carry
        ),
        compiler_params=pltpu.CompilerParams(
            dimension_semantics=("parallel", "arbitrary"),
            vmem_limit_bytes=vmem_limit),
        cost_estimate=cost,
    )(xs, ms, xuss, gammas, gims, wh_fused, params["bhist"], params["wr"],
      params["br"], wihx3, params["bh_n"], params["conv"])

    x_imp = ximp_o[:, :T]
    xrs = xr_o[:, :T]
    # Deferred masked-L1 loss: reduce the per-(row, t) partials here (tiny op).
    num_t = jnp.sum(num_o[:, :T, 0], axis=0)            # (T,)
    den_t = jnp.sum(den_o[:, :T, 0], axis=0)             # (T,)
    x_loss = jnp.sum(num_t / (den_t + 1e-5))
    h_final = h_o.reshape(B, H)
    y_out, y_score = 0, 0                                # get_y=False / task!='C'
    return x_imp, y_out, y_score, x_loss, xus, xrs, h_final


# ---------------------------------------------------------------------------
# Pure-JAX reference (line-by-line port of RIN.forward, unc_flag=0, get_y=False)
# ---------------------------------------------------------------------------
def rin_reference(x, x_hat, u, m, d, p):
    del u
    B, T, F = x.shape
    H = p["btd"].shape[1]
    h = jnp.zeros((B, H), jnp.float32)
    loss = jnp.float32(0.0)
    ximps, xus, xrs = [], [], []
    for t in range(T):
        x_t, xh_t, m_t, d_t = x[:, t], x_hat[:, t], m[:, t], d[:, t]
        gamma_h = jnp.exp(-jnp.maximum(d_t @ p["wtd"] + p["btd"], 0.0))
        h = h * gamma_h
        x_h = h @ p["whist"] + p["bhist"]
        x_r_t = m_t * x_t + (1.0 - m_t) * x_h
        xbar = m_t * x_t + (1.0 - m_t) * xh_t
        xu = xbar @ p["wv"] + p["bv"]
        xr = x_r_t @ p["wr"] + p["br"]
        xc = p["conv"][0] * xu + p["conv"][1] * xr + p["conv"][2]
        loss = loss + jnp.sum(jnp.abs(x_t - xc) * m_t) / (jnp.sum(m_t) + 1e-5)
        ximp = m_t * x_t + (1.0 - m_t) * xc
        r = jax.nn.sigmoid(ximp @ p["wih_rx"] + m_t @ p["wih_rm"]
                           + h @ p["whh_r"] + p["bg_r"])
        z = jax.nn.sigmoid(ximp @ p["wih_zx"] + m_t @ p["wih_zm"]
                           + h @ p["whh_z"] + p["bg_z"])
        n = jnp.tanh(ximp @ p["wih_nx"] + m_t @ p["wih_nm"] + p["bi_n"]
                     + r * (h @ p["whh_n"] + p["bh_n"]))
        h = (1.0 - z) * n + z * h
        ximps.append(ximp)
        xus.append(xu)
        xrs.append(xr)
    return (jnp.stack(ximps, 1), jnp.stack(xus, 1), jnp.stack(xrs, 1), loss, h)


def init_params(key, F, H):
    """Deterministic synthetic init (uniform +/- 1/sqrt(fan_in), PyTorch-ish)."""
    ks = jax.random.split(key, 24)

    def uni(k, shape, fan):
        s = 1.0 / float(np.sqrt(fan))
        return jax.random.uniform(k, shape, jnp.float32, -s, s)

    mask = 1.0 - jnp.eye(F, dtype=jnp.float32)   # ones - eye (feature reg mask)
    p = {}
    p["wtd"] = uni(ks[0], (F, H), F)             # temp_decay_h, transposed [F,H]
    p["btd"] = uni(ks[1], (1, H), H)
    p["whist"] = uni(ks[2], (H, F), H)           # hist: Linear(H->F), [H,F]
    p["bhist"] = uni(ks[3], (1, F), F)
    p["wv"] = uni(ks[4], (F, F), F) * mask       # feat_reg_v (masked), [F,F]
    p["bv"] = uni(ks[5], (1, F), F)
    p["wr"] = uni(ks[6], (F, F), F) * mask       # feat_reg_r (masked), [F,F]
    p["br"] = uni(ks[7], (1, F), F)
    p["conv"] = uni(ks[8], (3,), 2)              # Conv1d(2,1,1): [w0, w1, bias]
    # GRUCell(2F -> H): input weights split per gate / per input half, [F,H]
    p["wih_rx"] = uni(ks[9], (F, H), 2 * F)
    p["wih_rm"] = uni(ks[10], (F, H), 2 * F)
    p["wih_zx"] = uni(ks[11], (F, H), 2 * F)
    p["wih_zm"] = uni(ks[12], (F, H), 2 * F)
    p["wih_nx"] = uni(ks[13], (F, H), 2 * F)
    p["wih_nm"] = uni(ks[14], (F, H), 2 * F)
    p["whh_r"] = uni(ks[15], (H, H), H)
    p["whh_z"] = uni(ks[16], (H, H), H)
    p["whh_n"] = uni(ks[17], (H, H), H)
    p["bg_r"] = uni(ks[18], (1, H), H)           # b_ir + b_hr (combined)
    p["bg_z"] = uni(ks[19], (1, H), H)           # b_iz + b_hz (combined)
    p["bi_n"] = uni(ks[20], (1, H), H)
    p["bh_n"] = uni(ks[21], (1, H), H)
    return p


if __name__ == "__main__":
    key = jax.random.PRNGKey(0)
    B, T, F, H = 2, 8, 4, 32
    kx, kxh, ku, km, kd, kp = jax.random.split(key, 6)

    x = jax.random.normal(kx, (B, T, F), jnp.float32)
    x_hat = jax.random.normal(kxh, (B, T, F), jnp.float32)
    u_in = jax.random.uniform(ku, (B, T, F), jnp.float32)
    m = jax.random.bernoulli(km, 0.7, (B, T, F)).astype(jnp.float32)
    d = jax.random.uniform(kd, (B, T, F), jnp.float32)
    params = init_params(kp, F, H)

    fwd = jax.jit(rin_forward)
    x_imp, y_out, y_score, x_loss, xus, xrs, h_final = fwd(
        x, x_hat, u_in, m, d, params)
    jax.block_until_ready((x_imp, x_loss, xus, xrs, h_final))

    ximp_ref, xus_ref, xrs_ref, loss_ref, h_ref = rin_reference(
        x, x_hat, u_in, m, d, params)

    np.testing.assert_allclose(np.asarray(x_imp), np.asarray(ximp_ref),
                               rtol=1e-4, atol=1e-4)
    np.testing.assert_allclose(np.asarray(xus), np.asarray(xus_ref),
                               rtol=1e-4, atol=1e-4)
    np.testing.assert_allclose(np.asarray(xrs), np.asarray(xrs_ref),
                               rtol=1e-4, atol=1e-4)
    np.testing.assert_allclose(np.asarray(x_loss), np.asarray(loss_ref),
                               rtol=1e-4, atol=1e-4)
    np.testing.assert_allclose(np.asarray(h_final), np.asarray(h_ref),
                               rtol=1e-4, atol=1e-4)
    print("KERNEL_OK")
</pallas_src>

<mosaic_0001>
module attributes {stable_mosaic.version = 11 : i64} {
  func.func @_rin_precompute_kernel(%arg0: i32, %arg1: memref<8x4xf32, #tpu.memory_space<vmem>>, %arg2: memref<8x4xf32, #tpu.memory_space<vmem>>, %arg3: memref<8x4xf32, #tpu.memory_space<vmem>>, %arg4: memref<8x4xf32, #tpu.memory_space<vmem>>, %arg5: memref<4x32xf32, #tpu.memory_space<vmem>>, %arg6: memref<1x32xf32, #tpu.memory_space<vmem>>, %arg7: memref<4x4xf32, #tpu.memory_space<vmem>>, %arg8: memref<1x4xf32, #tpu.memory_space<vmem>>, %arg9: memref<4x96xf32, #tpu.memory_space<vmem>>, %arg10: memref<1x96xf32, #tpu.memory_space<vmem>>, %arg11: memref<8x4xf32, #tpu.memory_space<vmem>>, %arg12: memref<8x32xf32, #tpu.memory_space<vmem>>, %arg13: memref<8x96xf32, #tpu.memory_space<vmem>>) attributes {dimension_semantics = [#tpu.dimension_semantics<parallel>], iteration_bounds = array<i64: 2>, scalar_prefetch = 0 : i64, scratch_operands = 0 : i64, tpu.core_type = #tpu.core_type<tc>, window_params = [{transform_indices = @transform_0, window_bounds = array<i64: 8, 4>}, {transform_indices = @transform_1, window_bounds = array<i64: 8, 4>}, {transform_indices = @transform_2, window_bounds = array<i64: 8, 4>}, {transform_indices = @transform_3, window_bounds = array<i64: 8, 4>}, {pipeline_mode = #tpu.pipeline_mode<synchronous>, transform_indices = @transform_4, window_bounds = array<i64: 4, 32>}, {pipeline_mode = #tpu.pipeline_mode<synchronous>, transform_indices = @transform_5, window_bounds = array<i64: 1, 32>}, {pipeline_mode = #tpu.pipeline_mode<synchronous>, transform_indices = @transform_6, window_bounds = array<i64: 4, 4>}, {pipeline_mode = #tpu.pipeline_mode<synchronous>, transform_indices = @transform_7, window_bounds = array<i64: 1, 4>}, {pipeline_mode = #tpu.pipeline_mode<synchronous>, transform_indices = @transform_8, window_bounds = array<i64: 4, 96>}, {pipeline_mode = #tpu.pipeline_mode<synchronous>, transform_indices = @transform_9, window_bounds = array<i64: 1, 96>}, {transform_indices = @transform_10, window_bounds = array<i64: 8, 4>}, {transform_indices = @transform_11, window_bounds = array<i64: 8, 32>}, {transform_indices = @transform_12, window_bounds = array<i64: 8, 96>}]} {
    %c0 = arith.constant 0 : index
    %c0_0 = arith.constant 0 : index
    %0 = vector.load %arg1[%c0, %c0_0] : memref<8x4xf32, #tpu.memory_space<vmem>>, vector<8x4xf32>
    %c0_1 = arith.constant 0 : index
    %c0_2 = arith.constant 0 : index
    %1 = vector.load %arg2[%c0_1, %c0_2] : memref<8x4xf32, #tpu.memory_space<vmem>>, vector<8x4xf32>
    %c0_3 = arith.constant 0 : index
    %c0_4 = arith.constant 0 : index
    %2 = vector.load %arg3[%c0_3, %c0_4] : memref<8x4xf32, #tpu.memory_space<vmem>>, vector<8x4xf32>
    %c0_5 = arith.constant 0 : index
    %c0_6 = arith.constant 0 : index
    %3 = vector.load %arg4[%c0_5, %c0_6] : memref<8x4xf32, #tpu.memory_space<vmem>>, vector<8x4xf32>
    %c0_7 = arith.constant 0 : index
    %c0_8 = arith.constant 0 : index
    %4 = vector.load %arg5[%c0_7, %c0_8] : memref<4x32xf32, #tpu.memory_space<vmem>>, vector<4x32xf32>
    %cst = arith.constant dense<0.000000e+00> : vector<8x32xf32>
    %5 = tpu.matmul %3, %4, %cst {dimension_numbers = #tpu.dot_dimension_numbers<[1], [0], [0], [1], [0, 0, 1, 1], [], []>} : vector<8x4xf32>, vector<4x32xf32>, vector<8x32xf32> -> vector<8x32xf32>
    %c0_9 = arith.constant 0 : index
    %c0_10 = arith.constant 0 : index
    %6 = vector.load %arg6[%c0_9, %c0_10] : memref<1x32xf32, #tpu.memory_space<vmem>>, vector<1x32xf32>
    %7 = vector.broadcast %6 : vector<1x32xf32> to vector<8x32xf32>
    %8 = arith.addf %5, %7 : vector<8x32xf32>
    %cst_11 = arith.constant 0.000000e+00 : f32
    %9 = vector.broadcast %cst_11 : f32 to vector<8x32xf32>
    %10 = arith.maximumf %8, %9 : vector<8x32xf32>
    %cst_12 = arith.constant 0.000000e+00 : f32
    %11 = vector.broadcast %cst_12 : f32 to vector<8x32xf32>
    %12 = arith.subf %11, %10 : vector<8x32xf32>
    %13 = math.exp %12 : vector<8x32xf32>
    %c0_13 = arith.constant 0 : index
    %c0_14 = arith.constant 0 : index
    %14 = vector.load %arg12[%c0_13, %c0_14] : memref<8x32xf32, #tpu.memory_space<vmem>>, vector<8x32xf32>
    tpu.vector_store %arg12[%c0_13, %c0_14], %13 {strides = array<i32>} : memref<8x32xf32, #tpu.memory_space<vmem>>, vector<8x32xf32>,
    %15 = arith.mulf %2, %0 : vector<8x4xf32>
    %cst_15 = arith.constant 1.000000e+00 : f32
    %16 = vector.broadcast %cst_15 : f32 to vector<8x4xf32>
    %17 = arith.subf %16, %2 : vector<8x4xf32>
    %18 = arith.mulf %17, %1 : vector<8x4xf32>
    %19 = arith.addf %15, %18 : vector<8x4xf32>
    %c0_16 = arith.constant 0 : index
    %c0_17 = arith.constant 0 : index
    %20 = vector.load %arg7[%c0_16, %c0_17] : memref<4x4xf32, #tpu.memory_space<vmem>>, vector<4x4xf32>
    %cst_18 = arith.constant dense<0.000000e+00> : vector<8x4xf32>
    %21 = tpu.matmul %19, %20, %cst_18 {dimension_numbers = #tpu.dot_dimension_numbers<[1], [0], [0], [1], [0, 0, 1, 1], [], []>} : vector<8x4xf32>, vector<4x4xf32>, vector<8x4xf32> -> vector<8x4xf32>
    %c0_19 = arith.constant 0 : index
    %c0_20 = arith.constant 0 : index
    %22 = vector.load %arg8[%c0_19, %c0_20] : memref<1x4xf32, #tpu.memory_space<vmem>>, vector<1x4xf32>
    %23 = vector.broadcast %22 : vector<1x4xf32> to vector<8x4xf32>
    %24 = arith.addf %21, %23 : vector<8x4xf32>
    %c0_21 = arith.constant 0 : index
    %c0_22 = arith.constant 0 : index
    %25 = vector.load %arg11[%c0_21, %c0_22] : memref<8x4xf32, #tpu.memory_space<vmem>>, vector<8x4xf32>
    tpu.vector_store %arg11[%c0_21, %c0_22], %24 {strides = array<i32>} : memref<8x4xf32, #tpu.memory_space<vmem>>, vector<8x4xf32>,
    %c0_23 = arith.constant 0 : index
    %c0_24 = arith.constant 0 : index
    %26 = vector.load %arg9[%c0_23, %c0_24] : memref<4x96xf32, #tpu.memory_space<vmem>>, vector<4x96xf32>
    %cst_25 = arith.constant dense<0.000000e+00> : vector<8x96xf32>
    %27 = tpu.matmul %2, %26, %cst_25 {dimension_numbers = #tpu.dot_dimension_numbers<[1], [0], [0], [1], [0, 0, 1, 1], [], []>} : vector<8x4xf32>, vector<4x96xf32>, vector<8x96xf32> -> vector<8x96xf32>
    %c0_26 = arith.constant 0 : index
    %c0_27 = arith.constant 0 : index
    %28 = vector.load %arg10[%c0_26, %c0_27] : memref<1x96xf32, #tpu.memory_space<vmem>>, vector<1x96xf32>
    %29 = vector.broadcast %28 : vector<1x96xf32> to vector<8x96xf32>
    %30 = arith.addf %27, %29 : vector<8x96xf32>
    %c0_28 = arith.constant 0 : index
    %c0_29 = arith.constant 0 : index
    %31 = vector.load %arg13[%c0_28, %c0_29] : memref<8x96xf32, #tpu.memory_space<vmem>>, vector<8x96xf32>
    tpu.vector_store %arg13[%c0_28, %c0_29], %30 {strides = array<i32>} : memref<8x96xf32, #tpu.memory_space<vmem>>, vector<8x96xf32>,
    return
  }
  func.func @transform_0(%arg0: i32) -> (i32, i32) {
    %c0_i32 = arith.constant 0 : i32
    %c0_i32_0 = arith.constant 0 : i32
    return %arg0, %c0_i32 : i32, i32
  }
  func.func @transform_1(%arg0: i32) -> (i32, i32) {
    %c0_i32 = arith.constant 0 : i32
    %c0_i32_0 = arith.constant 0 : i32
    return %arg0, %c0_i32 : i32, i32
  }
  func.func @transform_2(%arg0: i32) -> (i32, i32) {
    %c0_i32 = arith.constant 0 : i32
    %c0_i32_0 = arith.constant 0 : i32
    return %arg0, %c0_i32 : i32, i32
  }
  func.func @transform_3(%arg0: i32) -> (i32, i32) {
    %c0_i32 = arith.constant 0 : i32
    %c0_i32_0 = arith.constant 0 : i32
    return %arg0, %c0_i32 : i32, i32
  }
  func.func @transform_4(%arg0: i32) -> (i32, i32) {
    %c0_i32 = arith.constant 0 : i32
    %c0_i32_0 = arith.constant 0 : i32
    %c0_i32_1 = arith.constant 0 : i32
    return %c0_i32, %c0_i32_0 : i32, i32
  }
  func.func @transform_5(%arg0: i32) -> (i32, i32) {
    %c0_i32 = arith.constant 0 : i32
    %c0_i32_0 = arith.constant 0 : i32
    %c0_i32_1 = arith.constant 0 : i32
    return %c0_i32, %c0_i32_0 : i32, i32
  }
  func.func @transform_6(%arg0: i32) -> (i32, i32) {
    %c0_i32 = arith.constant 0 : i32
    %c0_i32_0 = arith.constant 0 : i32
    %c0_i32_1 = arith.constant 0 : i32
    return %c0_i32, %c0_i32_0 : i32, i32
  }
  func.func @transform_7(%arg0: i32) -> (i32, i32) {
    %c0_i32 = arith.constant 0 : i32
    %c0_i32_0 = arith.constant 0 : i32
    %c0_i32_1 = arith.constant 0 : i32
    return %c0_i32, %c0_i32_0 : i32, i32
  }
  func.func @transform_8(%arg0: i32) -> (i32, i32) {
    %c0_i32 = arith.constant 0 : i32
    %c0_i32_0 = arith.constant 0 : i32
    %c0_i32_1 = arith.constant 0 : i32
    return %c0_i32, %c0_i32_0 : i32, i32
  }
  func.func @transform_9(%arg0: i32) -> (i32, i32) {
    %c0_i32 = arith.constant 0 : i32
    %c0_i32_0 = arith.constant 0 : i32
    %c0_i32_1 = arith.constant 0 : i32
    return %c0_i32, %c0_i32_0 : i32, i32
  }
  func.func @transform_10(%arg0: i32) -> (i32, i32) {
    %c0_i32 = arith.constant 0 : i32
    %c0_i32_0 = arith.constant 0 : i32
    return %arg0, %c0_i32 : i32, i32
  }
  func.func @transform_11(%arg0: i32) -> (i32, i32) {
    %c0_i32 = arith.constant 0 : i32
    %c0_i32_0 = arith.constant 0 : i32
    return %arg0, %c0_i32 : i32, i32
  }
  func.func @transform_12(%arg0: i32) -> (i32, i32) {
    %c0_i32 = arith.constant 0 : i32
    %c0_i32_0 = arith.constant 0 : i32
    return %arg0, %c0_i32 : i32, i32
  }
}

module attributes {stable_mosaic.version = 11 : i64} {
  func.func @_rin_recurrent_kernel(%arg0: i32, %arg1: i32, %arg2: memref<1x8x4xf32, #tpu.memory_space<vmem>>, %arg3: memref<1x8x4xf32, #tpu.memory_space<vmem>>, %arg4: memref<1x8x4xf32, #tpu.memory_space<vmem>>, %arg5: memref<1x8x32xf32, #tpu.memory_space<vmem>>, %arg6: memref<1x8x96xf32, #tpu.memory_space<vmem>>, %arg7: memref<32x100xf32, #tpu.memory_space<vmem>>, %arg8: memref<1x4xf32, #tpu.memory_space<vmem>>, %arg9: memref<4x4xf32, #tpu.memory_space<vmem>>, %arg10: memref<1x4xf32, #tpu.memory_space<vmem>>, %arg11: memref<4x96xf32, #tpu.memory_space<vmem>>, %arg12: memref<1x32xf32, #tpu.memory_space<vmem>>, %arg13: memref<3xf32, #tpu.memory_space<smem>>, %arg14: memref<1x8x4xf32, #tpu.memory_space<vmem>>, %arg15: memref<1x8x4xf32, #tpu.memory_space<vmem>>, %arg16: memref<1x8x1xf32, #tpu.memory_space<vmem>>, %arg17: memref<1x8x1xf32, #tpu.memory_space<vmem>>, %arg18: memref<1x1x32xf32, #tpu.memory_space<vmem>>, %arg19: memref<1x32xf32, #tpu.memory_space<vmem>>) attributes {dimension_semantics = [#tpu.dimension_semantics<parallel>, #tpu.dimension_semantics<arbitrary>], iteration_bounds = array<i64: 2, 1>, scalar_prefetch = 0 : i64, scratch_operands = 1 : i64, tpu.core_type = #tpu.core_type<tc>, window_params = [{transform_indices = @transform_0, window_bounds = array<i64: 1, 8, 4>}, {transform_indices = @transform_1, window_bounds = array<i64: 1, 8, 4>}, {transform_indices = @transform_2, window_bounds = array<i64: 1, 8, 4>}, {transform_indices = @transform_3, window_bounds = array<i64: 1, 8, 32>}, {transform_indices = @transform_4, window_bounds = array<i64: 1, 8, 96>}, {pipeline_mode = #tpu.pipeline_mode<synchronous>, transform_indices = @transform_5, window_bounds = array<i64: 32, 100>}, {pipeline_mode = #tpu.pipeline_mode<synchronous>, transform_indices = @transform_6, window_bounds = array<i64: 1, 4>}, {pipeline_mode = #tpu.pipeline_mode<synchronous>, transform_indices = @transform_7, window_bounds = array<i64: 4, 4>}, {pipeline_mode = #tpu.pipeline_mode<synchronous>, transform_indices = @transform_8, window_bounds = array<i64: 1, 4>}, {pipeline_mode = #tpu.pipeline_mode<synchronous>, transform_indices = @transform_9, window_bounds = array<i64: 4, 96>}, {pipeline_mode = #tpu.pipeline_mode<synchronous>, transform_indices = @transform_10, window_bounds = array<i64: 1, 32>}, {transform_indices = @transform_11, window_bounds = array<i64: 3>}, {transform_indices = @transform_12, window_bounds = array<i64: 1, 8, 4>}, {transform_indices = @transform_13, window_bounds = array<i64: 1, 8, 4>}, {transform_indices = @transform_14, window_bounds = array<i64: 1, 8, 1>}, {transform_indices = @transform_15, window_bounds = array<i64: 1, 8, 1>}, {transform_indices = @transform_16, window_bounds = array<i64: 1, 1, 32>}]} {
    %c0_i32 = arith.constant 0 : i32
    %0 = arith.cmpi eq, %arg1, %c0_i32 : i32
    %1 = arith.extui %0 : i1 to i32
    %c0_i32_0 = arith.constant 0 : i32
    %2 = arith.cmpi ne, %1, %c0_i32_0 : i32
    scf.if %2 {
      %cst_235 = arith.constant 0.000000e+00 : f32
      %689 = vector.broadcast %cst_235 : f32 to vector<1x32xf32>
      %c0_236 = arith.constant 0 : index
      %c0_237 = arith.constant 0 : index
      %690 = vector.load %arg19[%c0_236, %c0_237] : memref<1x32xf32, #tpu.memory_space<vmem>>, vector<1x32xf32>
      tpu.vector_store %arg19[%c0_236, %c0_237], %689 {strides = array<i32>} : memref<1x32xf32, #tpu.memory_space<vmem>>, vector<1x32xf32>,
    } else {
    }
    %c0 = arith.constant 0 : index
    %c0_1 = arith.constant 0 : index
    %3 = vector.load %arg7[%c0, %c0_1] : memref<32x100xf32, #tpu.memory_space<vmem>>, vector<32x100xf32>
    %c0_2 = arith.constant 0 : index
    %c0_3 = arith.constant 0 : index
    %4 = vector.load %arg8[%c0_2, %c0_3] : memref<1x4xf32, #tpu.memory_space<vmem>>, vector<1x4xf32>
    %c0_4 = arith.constant 0 : index
    %c0_5 = arith.constant 0 : index
    %5 = vector.load %arg9[%c0_4, %c0_5] : memref<4x4xf32, #tpu.memory_space<vmem>>, vector<4x4xf32>
    %c0_6 = arith.constant 0 : index
    %c0_7 = arith.constant 0 : index
    %6 = vector.load %arg10[%c0_6, %c0_7] : memref<1x4xf32, #tpu.memory_space<vmem>>, vector<1x4xf32>
    %c0_8 = arith.constant 0 : index
    %c0_9 = arith.constant 0 : index
    %7 = vector.load %arg11[%c0_8, %c0_9] : memref<4x96xf32, #tpu.memory_space<vmem>>, vector<4x96xf32>
    %c0_10 = arith.constant 0 : index
    %c0_11 = arith.constant 0 : index
    %8 = vector.load %arg12[%c0_10, %c0_11] : memref<1x32xf32, #tpu.memory_space<vmem>>, vector<1x32xf32>
    %c0_12 = arith.constant 0 : index
    %9 = memref.load %arg13[%c0_12] : memref<3xf32, #tpu.memory_space<smem>>
    %c1 = arith.constant 1 : index
    %10 = memref.load %arg13[%c1] : memref<3xf32, #tpu.memory_space<smem>>
    %c2 = arith.constant 2 : index
    %11 = memref.load %arg13[%c2] : memref<3xf32, #tpu.memory_space<smem>>
    %c0_13 = arith.constant 0 : index
    %c0_14 = arith.constant 0 : index
    %12 = vector.load %arg19[%c0_13, %c0_14] : memref<1x32xf32, #tpu.memory_space<vmem>>, vector<1x32xf32>
    %c0_i32_15 = arith.constant 0 : i32
    %c0_16 = arith.constant 0 : index
    %13 = arith.index_cast %c0_i32_15 : i32 to index
    %c0_17 = arith.constant 0 : index
    %14 = vector.load %arg2[%c0_16, %13, %c0_17] : memref<1x8x4xf32, #tpu.memory_space<vmem>>, vector<1x1x4xf32>
    %15 = vector.shape_cast %14 : vector<1x1x4xf32> to vector<1x4xf32>
    %c0_18 = arith.constant 0 : index
    %16 = arith.index_cast %c0_i32_15 : i32 to index
    %c0_19 = arith.constant 0 : index
    %17 = vector.load %arg3[%c0_18, %16, %c0_19] : memref<1x8x4xf32, #tpu.memory_space<vmem>>, vector<1x1x4xf32>
    %18 = vector.shape_cast %17 : vector<1x1x4xf32> to vector<1x4xf32>
    %c0_20 = arith.constant 0 : index
    %19 = arith.index_cast %c0_i32_15 : i32 to index
    %c0_21 = arith.constant 0 : index
    %20 = vector.load %arg4[%c0_20, %19, %c0_21] : memref<1x8x4xf32, #tpu.memory_space<vmem>>, vector<1x1x4xf32>
    %21 = vector.shape_cast %20 : vector<1x1x4xf32> to vector<1x4xf32>
    %c0_22 = arith.constant 0 : index
    %22 = arith.index_cast %c0_i32_15 : i32 to index
    %c0_23 = arith.constant 0 : index
    %23 = vector.load %arg5[%c0_22, %22, %c0_23] : memref<1x8x32xf32, #tpu.memory_space<vmem>>, vector<1x1x32xf32>
    %24 = vector.shape_cast %23 : vector<1x1x32xf32> to vector<1x32xf32>
    %c0_24 = arith.constant 0 : index
    %25 = arith.index_cast %c0_i32_15 : i32 to index
    %c0_25 = arith.constant 0 : index
    %26 = vector.load %arg6[%c0_24, %25, %c0_25] : memref<1x8x96xf32, #tpu.memory_space<vmem>>, vector<1x1x96xf32>
    %27 = vector.shape_cast %26 : vector<1x1x96xf32> to vector<1x96xf32>
    %28 = arith.mulf %12, %24 : vector<1x32xf32>
    %cst = arith.constant dense<0.000000e+00> : vector<1x100xf32>
    %29 = tpu.matmul %28, %3, %cst {dimension_numbers = #tpu.dot_dimension_numbers<[1], [0], [0], [1], [0, 0, 1, 1], [], []>} : vector<1x32xf32>, vector<32x100xf32>, vector<1x100xf32> -> vector<1x100xf32>
    %30 = vector.extract_strided_slice %29 {offsets = [0, 0], sizes = [1, 4], strides = [1, 1]} : vector<1x100xf32> to vector<1x4xf32>
    %31 = arith.addf %30, %4 : vector<1x4xf32>
    %32 = vector.extract_strided_slice %29 {offsets = [0, 4], sizes = [1, 96], strides = [1, 1]} : vector<1x100xf32> to vector<1x96xf32>
    %cst_26 = arith.constant 1.000000e+00 : f32
    %33 = vector.broadcast %cst_26 : f32 to vector<1x4xf32>
    %34 = arith.subf %33, %18 : vector<1x4xf32>
    %35 = arith.mulf %18, %15 : vector<1x4xf32>
    %36 = arith.mulf %34, %31 : vector<1x4xf32>
    %37 = arith.addf %35, %36 : vector<1x4xf32>
    %cst_27 = arith.constant dense<0.000000e+00> : vector<1x4xf32>
    %38 = tpu.matmul %37, %5, %cst_27 {dimension_numbers = #tpu.dot_dimension_numbers<[1], [0], [0], [1], [0, 0, 1, 1], [], []>} : vector<1x4xf32>, vector<4x4xf32>, vector<1x4xf32> -> vector<1x4xf32>
    %39 = arith.addf %38, %6 : vector<1x4xf32>
    %40 = vector.broadcast %9 : f32 to vector<1x4xf32>
    %41 = arith.mulf %40, %21 : vector<1x4xf32>
    %42 = vector.broadcast %10 : f32 to vector<1x4xf32>
    %43 = arith.mulf %42, %39 : vector<1x4xf32>
    %44 = arith.addf %41, %43 : vector<1x4xf32>
    %45 = vector.broadcast %11 : f32 to vector<1x4xf32>
    %46 = arith.addf %44, %45 : vector<1x4xf32>
    %47 = arith.mulf %34, %46 : vector<1x4xf32>
    %48 = arith.addf %35, %47 : vector<1x4xf32>
    %cst_28 = arith.constant dense<0.000000e+00> : vector<1x96xf32>
    %49 = tpu.matmul %48, %7, %cst_28 {dimension_numbers = #tpu.dot_dimension_numbers<[1], [0], [0], [1], [0, 0, 1, 1], [], []>} : vector<1x4xf32>, vector<4x96xf32>, vector<1x96xf32> -> vector<1x96xf32>
    %50 = arith.addf %49, %27 : vector<1x96xf32>
    %51 = vector.extract_strided_slice %50 {offsets = [0, 0], sizes = [1, 32], strides = [1, 1]} : vector<1x96xf32> to vector<1x32xf32>
    %52 = vector.extract_strided_slice %32 {offsets = [0, 0], sizes = [1, 32], strides = [1, 1]} : vector<1x96xf32> to vector<1x32xf32>
    %53 = arith.addf %51, %52 : vector<1x32xf32>
    %54 = arith.negf %53 : vector<1x32xf32>
    %55 = math.exp %54 : vector<1x32xf32>
    %cst_29 = arith.constant 1.000000e+00 : f32
    %56 = vector.broadcast %cst_29 : f32 to vector<1x32xf32>
    %57 = arith.addf %56, %55 : vector<1x32xf32>
    %58 = arith.divf %56, %57 : vector<1x32xf32>
    %59 = vector.extract_strided_slice %50 {offsets = [0, 32], sizes = [1, 32], strides = [1, 1]} : vector<1x96xf32> to vector<1x32xf32>
    %60 = vector.extract_strided_slice %32 {offsets = [0, 32], sizes = [1, 32], strides = [1, 1]} : vector<1x96xf32> to vector<1x32xf32>
    %61 = arith.addf %59, %60 : vector<1x32xf32>
    %62 = arith.negf %61 : vector<1x32xf32>
    %63 = math.exp %62 : vector<1x32xf32>
    %cst_30 = arith.constant 1.000000e+00 : f32
    %64 = vector.broadcast %cst_30 : f32 to vector<1x32xf32>
    %65 = arith.addf %64, %63 : vector<1x32xf32>
    %66 = arith.divf %64, %65 : vector<1x32xf32>
    %67 = vector.extract_strided_slice %50 {offsets = [0, 64], sizes = [1, 32], strides = [1, 1]} : vector<1x96xf32> to vector<1x32xf32>
    %68 = vector.extract_strided_slice %32 {offsets = [0, 64], sizes = [1, 32], strides = [1, 1]} : vector<1x96xf32> to vector<1x32xf32>
    %69 = arith.addf %68, %8 : vector<1x32xf32>
    %70 = arith.mulf %58, %69 : vector<1x32xf32>
    %71 = arith.addf %67, %70 : vector<1x32xf32>
    %72 = math.tanh %71 : vector<1x32xf32>
    %cst_31 = arith.constant 1.000000e+00 : f32
    %73 = vector.broadcast %cst_31 : f32 to vector<1x32xf32>
    %74 = arith.subf %73, %66 : vector<1x32xf32>
    %75 = arith.mulf %74, %72 : vector<1x32xf32>
    %76 = arith.mulf %66, %28 : vector<1x32xf32>
    %77 = arith.addf %75, %76 : vector<1x32xf32>
    %78 = vector.shape_cast %48 : vector<1x4xf32> to vector<1x1x4xf32>
    %c0_32 = arith.constant 0 : index
    %79 = arith.index_cast %c0_i32_15 : i32 to index
    %c0_33 = arith.constant 0 : index
    %80 = vector.load %arg14[%c0_32, %79, %c0_33] : memref<1x8x4xf32, #tpu.memory_space<vmem>>, vector<1x1x4xf32>
    tpu.vector_store %arg14[%c0_32, %79, %c0_33], %78 {strides = array<i32>} : memref<1x8x4xf32, #tpu.memory_space<vmem>>, vector<1x1x4xf32>,
    %81 = vector.shape_cast %39 : vector<1x4xf32> to vector<1x1x4xf32>
    %c0_34 = arith.constant 0 : index
    %82 = arith.index_cast %c0_i32_15 : i32 to index
    %c0_35 = arith.constant 0 : index
    %83 = vector.load %arg15[%c0_34, %82, %c0_35] : memref<1x8x4xf32, #tpu.memory_space<vmem>>, vector<1x1x4xf32>
    tpu.vector_store %arg15[%c0_34, %82, %c0_35], %81 {strides = array<i32>} : memref<1x8x4xf32, #tpu.memory_space<vmem>>, vector<1x1x4xf32>,
    %84 = arith.subf %15, %46 : vector<1x4xf32>
    %85 = math.absf %84 : vector<1x4xf32>
    %86 = arith.mulf %85, %18 : vector<1x4xf32>
    %cst_36 = arith.constant dense<0.000000e+00> : vector<1xf32>
    %87 = vector.multi_reduction <add>, %86, %cst_36 [1] : vector<1x4xf32> to vector<1xf32>
    %88 = vector.shape_cast %87 : vector<1xf32> to vector<1x1xf32>
    %89 = vector.shape_cast %88 : vector<1x1xf32> to vector<1x1x1xf32>
    %c0_37 = arith.constant 0 : index
    %90 = arith.index_cast %c0_i32_15 : i32 to index
    %c0_38 = arith.constant 0 : index
    %91 = vector.load %arg16[%c0_37, %90, %c0_38] : memref<1x8x1xf32, #tpu.memory_space<vmem>>, vector<1x1x1xf32>
    tpu.vector_store %arg16[%c0_37, %90, %c0_38], %89 {strides = array<i32>} : memref<1x8x1xf32, #tpu.memory_space<vmem>>, vector<1x1x1xf32>,
    %cst_39 = arith.constant dense<0.000000e+00> : vector<1xf32>
    %92 = vector.multi_reduction <add>, %18, %cst_39 [1] : vector<1x4xf32> to vector<1xf32>
    %93 = vector.shape_cast %92 : vector<1xf32> to vector<1x1xf32>
    %94 = vector.shape_cast %93 : vector<1x1xf32> to vector<1x1x1xf32>
    %c0_40 = arith.constant 0 : index
    %95 = arith.index_cast %c0_i32_15 : i32 to index
    %c0_41 = arith.constant 0 : index
    %96 = vector.load %arg17[%c0_40, %95, %c0_41] : memref<1x8x1xf32, #tpu.memory_space<vmem>>, vector<1x1x1xf32>
    tpu.vector_store %arg17[%c0_40, %95, %c0_41], %94 {strides = array<i32>} : memref<1x8x1xf32, #tpu.memory_space<vmem>>, vector<1x1x1xf32>,
    %c1_i32 = arith.constant 1 : i32
    %c0_42 = arith.constant 0 : index
    %97 = arith.index_cast %c1_i32 : i32 to index
    %c0_43 = arith.constant 0 : index
    %98 = vector.load %arg2[%c0_42, %97, %c0_43] : memref<1x8x4xf32, #tpu.memory_space<vmem>>, vector<1x1x4xf32>
    %99 = vector.shape_cast %98 : vector<1x1x4xf32> to vector<1x4xf32>
    %c0_44 = arith.constant 0 : index
    %100 = arith.index_cast %c1_i32 : i32 to index
    %c0_45 = arith.constant 0 : index
    %101 = vector.load %arg3[%c0_44, %100, %c0_45] : memref<1x8x4xf32, #tpu.memory_space<vmem>>, vector<1x1x4xf32>
    %102 = vector.shape_cast %101 : vector<1x1x4xf32> to vector<1x4xf32>
    %c0_46 = arith.constant 0 : index
    %103 = arith.index_cast %c1_i32 : i32 to index
    %c0_47 = arith.constant 0 : index
    %104 = vector.load %arg4[%c0_46, %103, %c0_47] : memref<1x8x4xf32, #tpu.memory_space<vmem>>, vector<1x1x4xf32>
    %105 = vector.shape_cast %104 : vector<1x1x4xf32> to vector<1x4xf32>
    %c0_48 = arith.constant 0 : index
    %106 = arith.index_cast %c1_i32 : i32 to index
    %c0_49 = arith.constant 0 : index
    %107 = vector.load %arg5[%c0_48, %106, %c0_49] : memref<1x8x32xf32, #tpu.memory_space<vmem>>, vector<1x1x32xf32>
    %108 = vector.shape_cast %107 : vector<1x1x32xf32> to vector<1x32xf32>
    %c0_50 = arith.constant 0 : index
    %109 = arith.index_cast %c1_i32 : i32 to index
    %c0_51 = arith.constant 0 : index
    %110 = vector.load %arg6[%c0_50, %109, %c0_51] : memref<1x8x96xf32, #tpu.memory_space<vmem>>, vector<1x1x96xf32>
    %111 = vector.shape_cast %110 : vector<1x1x96xf32> to vector<1x96xf32>
    %112 = arith.mulf %77, %108 : vector<1x32xf32>
    %cst_52 = arith.constant dense<0.000000e+00> : vector<1x100xf32>
    %113 = tpu.matmul %112, %3, %cst_52 {dimension_numbers = #tpu.dot_dimension_numbers<[1], [0], [0], [1], [0, 0, 1, 1], [], []>} : vector<1x32xf32>, vector<32x100xf32>, vector<1x100xf32> -> vector<1x100xf32>
    %114 = vector.extract_strided_slice %113 {offsets = [0, 0], sizes = [1, 4], strides = [1, 1]} : vector<1x100xf32> to vector<1x4xf32>
    %115 = arith.addf %114, %4 : vector<1x4xf32>
    %116 = vector.extract_strided_slice %113 {offsets = [0, 4], sizes = [1, 96], strides = [1, 1]} : vector<1x100xf32> to vector<1x96xf32>
    %cst_53 = arith.constant 1.000000e+00 : f32
    %117 = vector.broadcast %cst_53 : f32 to vector<1x4xf32>
    %118 = arith.subf %117, %102 : vector<1x4xf32>
    %119 = arith.mulf %102, %99 : vector<1x4xf32>
    %120 = arith.mulf %118, %115 : vector<1x4xf32>
    %121 = arith.addf %119, %120 : vector<1x4xf32>
    %cst_54 = arith.constant dense<0.000000e+00> : vector<1x4xf32>
    %122 = tpu.matmul %121, %5, %cst_54 {dimension_numbers = #tpu.dot_dimension_numbers<[1], [0], [0], [1], [0, 0, 1, 1], [], []>} : vector<1x4xf32>, vector<4x4xf32>, vector<1x4xf32> -> vector<1x4xf32>
    %123 = arith.addf %122, %6 : vector<1x4xf32>
    %124 = vector.broadcast %9 : f32 to vector<1x4xf32>
    %125 = arith.mulf %124, %105 : vector<1x4xf32>
    %126 = vector.broadcast %10 : f32 to vector<1x4xf32>
    %127 = arith.mulf %126, %123 : vector<1x4xf32>
    %128 = arith.addf %125, %127 : vector<1x4xf32>
    %129 = vector.broadcast %11 : f32 to vector<1x4xf32>
    %130 = arith.addf %128, %129 : vector<1x4xf32>
    %131 = arith.mulf %118, %130 : vector<1x4xf32>
    %132 = arith.addf %119, %131 : vector<1x4xf32>
    %cst_55 = arith.constant dense<0.000000e+00> : vector<1x96xf32>
    %133 = tpu.matmul %132, %7, %cst_55 {dimension_numbers = #tpu.dot_dimension_numbers<[1], [0], [0], [1], [0, 0, 1, 1], [], []>} : vector<1x4xf32>, vector<4x96xf32>, vector<1x96xf32> -> vector<1x96xf32>
    %134 = arith.addf %133, %111 : vector<1x96xf32>
    %135 = vector.extract_strided_slice %134 {offsets = [0, 0], sizes = [1, 32], strides = [1, 1]} : vector<1x96xf32> to vector<1x32xf32>
    %136 = vector.extract_strided_slice %116 {offsets = [0, 0], sizes = [1, 32], strides = [1, 1]} : vector<1x96xf32> to vector<1x32xf32>
    %137 = arith.addf %135, %136 : vector<1x32xf32>
    %138 = arith.negf %137 : vector<1x32xf32>
    %139 = math.exp %138 : vector<1x32xf32>
    %cst_56 = arith.constant 1.000000e+00 : f32
    %140 = vector.broadcast %cst_56 : f32 to vector<1x32xf32>
    %141 = arith.addf %140, %139 : vector<1x32xf32>
    %142 = arith.divf %140, %141 : vector<1x32xf32>
    %143 = vector.extract_strided_slice %134 {offsets = [0, 32], sizes = [1, 32], strides = [1, 1]} : vector<1x96xf32> to vector<1x32xf32>
    %144 = vector.extract_strided_slice %116 {offsets = [0, 32], sizes = [1, 32], strides = [1, 1]} : vector<1x96xf32> to vector<1x32xf32>
    %145 = arith.addf %143, %144 : vector<1x32xf32>
    %146 = arith.negf %145 : vector<1x32xf32>
    %147 = math.exp %146 : vector<1x32xf32>
    %cst_57 = arith.constant 1.000000e+00 : f32
    %148 = vector.broadcast %cst_57 : f32 to vector<1x32xf32>
    %149 = arith.addf %148, %147 : vector<1x32xf32>
    %150 = arith.divf %148, %149 : vector<1x32xf32>
    %151 = vector.extract_strided_slice %134 {offsets = [0, 64], sizes = [1, 32], strides = [1, 1]} : vector<1x96xf32> to vector<1x32xf32>
    %152 = vector.extract_strided_slice %116 {offsets = [0, 64], sizes = [1, 32], strides = [1, 1]} : vector<1x96xf32> to vector<1x32xf32>
    %153 = arith.addf %152, %8 : vector<1x32xf32>
    %154 = arith.mulf %142, %153 : vector<1x32xf32>
    %155 = arith.addf %151, %154 : vector<1x32xf32>
    %156 = math.tanh %155 : vector<1x32xf32>
    %cst_58 = arith.constant 1.000000e+00 : f32
    %157 = vector.broadcast %cst_58 : f32 to vector<1x32xf32>
    %158 = arith.subf %157, %150 : vector<1x32xf32>
    %159 = arith.mulf %158, %156 : vector<1x32xf32>
    %160 = arith.mulf %150, %112 : vector<1x32xf32>
    %161 = arith.addf %159, %160 : vector<1x32xf32>
    %162 = vector.shape_cast %132 : vector<1x4xf32> to vector<1x1x4xf32>
    %c0_59 = arith.constant 0 : index
    %163 = arith.index_cast %c1_i32 : i32 to index
    %c0_60 = arith.constant 0 : index
    %164 = vector.load %arg14[%c0_59, %163, %c0_60] : memref<1x8x4xf32, #tpu.memory_space<vmem>>, vector<1x1x4xf32>
    tpu.vector_store %arg14[%c0_59, %163, %c0_60], %162 {strides = array<i32>} : memref<1x8x4xf32, #tpu.memory_space<vmem>>, vector<1x1x4xf32>,
    %165 = vector.shape_cast %123 : vector<1x4xf32> to vector<1x1x4xf32>
    %c0_61 = arith.constant 0 : index
    %166 = arith.index_cast %c1_i32 : i32 to index
    %c0_62 = arith.constant 0 : index
    %167 = vector.load %arg15[%c0_61, %166, %c0_62] : memref<1x8x4xf32, #tpu.memory_space<vmem>>, vector<1x1x4xf32>
    tpu.vector_store %arg15[%c0_61, %166, %c0_62], %165 {strides = array<i32>} : memref<1x8x4xf32, #tpu.memory_space<vmem>>, vector<1x1x4xf32>,
    %168 = arith.subf %99, %130 : vector<1x4xf32>
    %169 = math.absf %168 : vector<1x4xf32>
    %170 = arith.mulf %169, %102 : vector<1x4xf32>
    %cst_63 = arith.constant dense<0.000000e+00> : vector<1xf32>
    %171 = vector.multi_reduction <add>, %170, %cst_63 [1] : vector<1x4xf32> to vector<1xf32>
    %172 = vector.shape_cast %171 : vector<1xf32> to vector<1x1xf32>
    %173 = vector.shape_cast %172 : vector<1x1xf32> to vector<1x1x1xf32>
    %c0_64 = arith.constant 0 : index
    %174 = arith.index_cast %c1_i32 : i32 to index
    %c0_65 = arith.constant 0 : index
    %175 = vector.load %arg16[%c0_64, %174, %c0_65] : memref<1x8x1xf32, #tpu.memory_space<vmem>>, vector<1x1x1xf32>
    tpu.vector_store %arg16[%c0_64, %174, %c0_65], %173 {strides = array<i32>} : memref<1x8x1xf32, #tpu.memory_space<vmem>>, vector<1x1x1xf32>,
    %cst_66 = arith.constant dense<0.000000e+00> : vector<1xf32>
    %176 = vector.multi_reduction <add>, %102, %cst_66 [1] : vector<1x4xf32> to vector<1xf32>
    %177 = vector.shape_cast %176 : vector<1xf32> to vector<1x1xf32>
    %178 = vector.shape_cast %177 : vector<1x1xf32> to vector<1x1x1xf32>
    %c0_67 = arith.constant 0 : index
    %179 = arith.index_cast %c1_i32 : i32 to index
    %c0_68 = arith.constant 0 : index
    %180 = vector.load %arg17[%c0_67, %179, %c0_68] : memref<1x8x1xf32, #tpu.memory_space<vmem>>, vector<1x1x1xf32>
    tpu.vector_store %arg17[%c0_67, %179, %c0_68], %178 {strides = array<i32>} : memref<1x8x1xf32, #tpu.memory_space<vmem>>, vector<1x1x1xf32>,
    %c2_i32 = arith.constant 2 : i32
    %c0_69 = arith.constant 0 : index
    %181 = arith.index_cast %c2_i32 : i32 to index
    %c0_70 = arith.constant 0 : index
    %182 = vector.load %arg2[%c0_69, %181, %c0_70] : memref<1x8x4xf32, #tpu.memory_space<vmem>>, vector<1x1x4xf32>
    %183 = vector.shape_cast %182 : vector<1x1x4xf32> to vector<1x4xf32>
    %c0_71 = arith.constant 0 : index
    %184 = arith.index_cast %c2_i32 : i32 to index
    %c0_72 = arith.constant 0 : index
    %185 = vector.load %arg3[%c0_71, %184, %c0_72] : memref<1x8x4xf32, #tpu.memory_space<vmem>>, vector<1x1x4xf32>
    %186 = vector.shape_cast %185 : vector<1x1x4xf32> to vector<1x4xf32>
    %c0_73 = arith.constant 0 : index
    %187 = arith.index_cast %c2_i32 : i32 to index
    %c0_74 = arith.constant 0 : index
    %188 = vector.load %arg4[%c0_73, %187, %c0_74] : memref<1x8x4xf32, #tpu.memory_space<vmem>>, vector<1x1x4xf32>
    %189 = vector.shape_cast %188 : vector<1x1x4xf32> to vector<1x4xf32>
    %c0_75 = arith.constant 0 : index
    %190 = arith.index_cast %c2_i32 : i32 to index
    %c0_76 = arith.constant 0 : index
    %191 = vector.load %arg5[%c0_75, %190, %c0_76] : memref<1x8x32xf32, #tpu.memory_space<vmem>>, vector<1x1x32xf32>
    %192 = vector.shape_cast %191 : vector<1x1x32xf32> to vector<1x32xf32>
    %c0_77 = arith.constant 0 : index
    %193 = arith.index_cast %c2_i32 : i32 to index
    %c0_78 = arith.constant 0 : index
    %194 = vector.load %arg6[%c0_77, %193, %c0_78] : memref<1x8x96xf32, #tpu.memory_space<vmem>>, vector<1x1x96xf32>
    %195 = vector.shape_cast %194 : vector<1x1x96xf32> to vector<1x96xf32>
    %196 = arith.mulf %161, %192 : vector<1x32xf32>
    %cst_79 = arith.constant dense<0.000000e+00> : vector<1x100xf32>
    %197 = tpu.matmul %196, %3, %cst_79 {dimension_numbers = #tpu.dot_dimension_numbers<[1], [0], [0], [1], [0, 0, 1, 1], [], []>} : vector<1x32xf32>, vector<32x100xf32>, vector<1x100xf32> -> vector<1x100xf32>
    %198 = vector.extract_strided_slice %197 {offsets = [0, 0], sizes = [1, 4], strides = [1, 1]} : vector<1x100xf32> to vector<1x4xf32>
    %199 = arith.addf %198, %4 : vector<1x4xf32>
    %200 = vector.extract_strided_slice %197 {offsets = [0, 4], sizes = [1, 96], strides = [1, 1]} : vector<1x100xf32> to vector<1x96xf32>
    %cst_80 = arith.constant 1.000000e+00 : f32
    %201 = vector.broadcast %cst_80 : f32 to vector<1x4xf32>
    %202 = arith.subf %201, %186 : vector<1x4xf32>
    %203 = arith.mulf %186, %183 : vector<1x4xf32>
    %204 = arith.mulf %202, %199 : vector<1x4xf32>
    %205 = arith.addf %203, %204 : vector<1x4xf32>
    %cst_81 = arith.constant dense<0.000000e+00> : vector<1x4xf32>
    %206 = tpu.matmul %205, %5, %cst_81 {dimension_numbers = #tpu.dot_dimension_numbers<[1], [0], [0], [1], [0, 0, 1, 1], [], []>} : vector<1x4xf32>, vector<4x4xf32>, vector<1x4xf32> -> vector<1x4xf32>
    %207 = arith.addf %206, %6 : vector<1x4xf32>
    %208 = vector.broadcast %9 : f32 to vector<1x4xf32>
    %209 = arith.mulf %208, %189 : vector<1x4xf32>
    %210 = vector.broadcast %10 : f32 to vector<1x4xf32>
    %211 = arith.mulf %210, %207 : vector<1x4xf32>
    %212 = arith.addf %209, %211 : vector<1x4xf32>
    %213 = vector.broadcast %11 : f32 to vector<1x4xf32>
    %214 = arith.addf %212, %213 : vector<1x4xf32>
    %215 = arith.mulf %202, %214 : vector<1x4xf32>
    %216 = arith.addf %203, %215 : vector<1x4xf32>
    %cst_82 = arith.constant dense<0.000000e+00> : vector<1x96xf32>
    %217 = tpu.matmul %216, %7, %cst_82 {dimension_numbers = #tpu.dot_dimension_numbers<[1], [0], [0], [1], [0, 0, 1, 1], [], []>} : vector<1x4xf32>, vector<4x96xf32>, vector<1x96xf32> -> vector<1x96xf32>
    %218 = arith.addf %217, %195 : vector<1x96xf32>
    %219 = vector.extract_strided_slice %218 {offsets = [0, 0], sizes = [1, 32], strides = [1, 1]} : vector<1x96xf32> to vector<1x32xf32>
    %220 = vector.extract_strided_slice %200 {offsets = [0, 0], sizes = [1, 32], strides = [1, 1]} : vector<1x96xf32> to vector<1x32xf32>
    %221 = arith.addf %219, %220 : vector<1x32xf32>
    %222 = arith.negf %221 : vector<1x32xf32>
    %223 = math.exp %222 : vector<1x32xf32>
    %cst_83 = arith.constant 1.000000e+00 : f32
    %224 = vector.broadcast %cst_83 : f32 to vector<1x32xf32>
    %225 = arith.addf %224, %223 : vector<1x32xf32>
    %226 = arith.divf %224, %225 : vector<1x32xf32>
    %227 = vector.extract_strided_slice %218 {offsets = [0, 32], sizes = [1, 32], strides = [1, 1]} : vector<1x96xf32> to vector<1x32xf32>
    %228 = vector.extract_strided_slice %200 {offsets = [0, 32], sizes = [1, 32], strides = [1, 1]} : vector<1x96xf32> to vector<1x32xf32>
    %229 = arith.addf %227, %228 : vector<1x32xf32>
    %230 = arith.negf %229 : vector<1x32xf32>
    %231 = math.exp %230 : vector<1x32xf32>
    %cst_84 = arith.constant 1.000000e+00 : f32
    %232 = vector.broadcast %cst_84 : f32 to vector<1x32xf32>
    %233 = arith.addf %232, %231 : vector<1x32xf32>
    %234 = arith.divf %232, %233 : vector<1x32xf32>
    %235 = vector.extract_strided_slice %218 {offsets = [0, 64], sizes = [1, 32], strides = [1, 1]} : vector<1x96xf32> to vector<1x32xf32>
    %236 = vector.extract_strided_slice %200 {offsets = [0, 64], sizes = [1, 32], strides = [1, 1]} : vector<1x96xf32> to vector<1x32xf32>
    %237 = arith.addf %236, %8 : vector<1x32xf32>
    %238 = arith.mulf %226, %237 : vector<1x32xf32>
    %239 = arith.addf %235, %238 : vector<1x32xf32>
    %240 = math.tanh %239 : vector<1x32xf32>
    %cst_85 = arith.constant 1.000000e+00 : f32
    %241 = vector.broadcast %cst_85 : f32 to vector<1x32xf32>
    %242 = arith.subf %241, %234 : vector<1x32xf32>
    %243 = arith.mulf %242, %240 : vector<1x32xf32>
    %244 = arith.mulf %234, %196 : vector<1x32xf32>
    %245 = arith.addf %243, %244 : vector<1x32xf32>
    %246 = vector.shape_cast %216 : vector<1x4xf32> to vector<1x1x4xf32>
    %c0_86 = arith.constant 0 : index
    %247 = arith.index_cast %c2_i32 : i32 to index
    %c0_87 = arith.constant 0 : index
    %248 = vector.load %arg14[%c0_86, %247, %c0_87] : memref<1x8x4xf32, #tpu.memory_space<vmem>>, vector<1x1x4xf32>
    tpu.vector_store %arg14[%c0_86, %247, %c0_87], %246 {strides = array<i32>} : memref<1x8x4xf32, #tpu.memory_space<vmem>>, vector<1x1x4xf32>,
    %249 = vector.shape_cast %207 : vector<1x4xf32> to vector<1x1x4xf32>
    %c0_88 = arith.constant 0 : index
    %250 = arith.index_cast %c2_i32 : i32 to index
    %c0_89 = arith.constant 0 : index
    %251 = vector.load %arg15[%c0_88, %250, %c0_89] : memref<1x8x4xf32, #tpu.memory_space<vmem>>, vector<1x1x4xf32>
    tpu.vector_store %arg15[%c0_88, %250, %c0_89], %249 {strides = array<i32>} : memref<1x8x4xf32, #tpu.memory_space<vmem>>, vector<1x1x4xf32>,
    %252 = arith.subf %183, %214 : vector<1x4xf32>
    %253 = math.absf %252 : vector<1x4xf32>
    %254 = arith.mulf %253, %186 : vector<1x4xf32>
    %cst_90 = arith.constant dense<0.000000e+00> : vector<1xf32>
    %255 = vector.multi_reduction <add>, %254, %cst_90 [1] : vector<1x4xf32> to vector<1xf32>
    %256 = vector.shape_cast %255 : vector<1xf32> to vector<1x1xf32>
    %257 = vector.shape_cast %256 : vector<1x1xf32> to vector<1x1x1xf32>
    %c0_91 = arith.constant 0 : index
    %258 = arith.index_cast %c2_i32 : i32 to index
    %c0_92 = arith.constant 0 : index
    %259 = vector.load %arg16[%c0_91, %258, %c0_92] : memref<1x8x1xf32, #tpu.memory_space<vmem>>, vector<1x1x1xf32>
    tpu.vector_store %arg16[%c0_91, %258, %c0_92], %257 {strides = array<i32>} : memref<1x8x1xf32, #tpu.memory_space<vmem>>, vector<1x1x1xf32>,
    %cst_93 = arith.constant dense<0.000000e+00> : vector<1xf32>
    %260 = vector.multi_reduction <add>, %186, %cst_93 [1] : vector<1x4xf32> to vector<1xf32>
    %261 = vector.shape_cast %260 : vector<1xf32> to vector<1x1xf32>
    %262 = vector.shape_cast %261 : vector<1x1xf32> to vector<1x1x1xf32>
    %c0_94 = arith.constant 0 : index
    %263 = arith.index_cast %c2_i32 : i32 to index
    %c0_95 = arith.constant 0 : index
    %264 = vector.load %arg17[%c0_94, %263, %c0_95] : memref<1x8x1xf32, #tpu.memory_space<vmem>>, vector<1x1x1xf32>
    tpu.vector_store %arg17[%c0_94, %263, %c0_95], %262 {strides = array<i32>} : memref<1x8x1xf32, #tpu.memory_space<vmem>>, vector<1x1x1xf32>,
    %c3_i32 = arith.constant 3 : i32
    %c0_96 = arith.constant 0 : index
    %265 = arith.index_cast %c3_i32 : i32 to index
    %c0_97 = arith.constant 0 : index
    %266 = vector.load %arg2[%c0_96, %265, %c0_97] : memref<1x8x4xf32, #tpu.memory_space<vmem>>, vector<1x1x4xf32>
    %267 = vector.shape_cast %266 : vector<1x1x4xf32> to vector<1x4xf32>
    %c0_98 = arith.constant 0 : index
    %268 = arith.index_cast %c3_i32 : i32 to index
    %c0_99 = arith.constant 0 : index
    %269 = vector.load %arg3[%c0_98, %268, %c0_99] : memref<1x8x4xf32, #tpu.memory_space<vmem>>, vector<1x1x4xf32>
    %270 = vector.shape_cast %269 : vector<1x1x4xf32> to vector<1x4xf32>
    %c0_100 = arith.constant 0 : index
    %271 = arith.index_cast %c3_i32 : i32 to index
    %c0_101 = arith.constant 0 : index
    %272 = vector.load %arg4[%c0_100, %271, %c0_101] : memref<1x8x4xf32, #tpu.memory_space<vmem>>, vector<1x1x4xf32>
    %273 = vector.shape_cast %272 : vector<1x1x4xf32> to vector<1x4xf32>
    %c0_102 = arith.constant 0 : index
    %274 = arith.index_cast %c3_i32 : i32 to index
    %c0_103 = arith.constant 0 : index
    %275 = vector.load %arg5[%c0_102, %274, %c0_103] : memref<1x8x32xf32, #tpu.memory_space<vmem>>, vector<1x1x32xf32>
    %276 = vector.shape_cast %275 : vector<1x1x32xf32> to vector<1x32xf32>
    %c0_104 = arith.constant 0 : index
    %277 = arith.index_cast %c3_i32 : i32 to index
    %c0_105 = arith.constant 0 : index
    %278 = vector.load %arg6[%c0_104, %277, %c0_105] : memref<1x8x96xf32, #tpu.memory_space<vmem>>, vector<1x1x96xf32>
    %279 = vector.shape_cast %278 : vector<1x1x96xf32> to vector<1x96xf32>
    %280 = arith.mulf %245, %276 : vector<1x32xf32>
    %cst_106 = arith.constant dense<0.000000e+00> : vector<1x100xf32>
    %281 = tpu.matmul %280, %3, %cst_106 {dimension_numbers = #tpu.dot_dimension_numbers<[1], [0], [0], [1], [0, 0, 1, 1], [], []>} : vector<1x32xf32>, vector<32x100xf32>, vector<1x100xf32> -> vector<1x100xf32>
    %282 = vector.extract_strided_slice %281 {offsets = [0, 0], sizes = [1, 4], strides = [1, 1]} : vector<1x100xf32> to vector<1x4xf32>
    %283 = arith.addf %282, %4 : vector<1x4xf32>
    %284 = vector.extract_strided_slice %281 {offsets = [0, 4], sizes = [1, 96], strides = [1, 1]} : vector<1x100xf32> to vector<1x96xf32>
    %cst_107 = arith.constant 1.000000e+00 : f32
    %285 = vector.broadcast %cst_107 : f32 to vector<1x4xf32>
    %286 = arith.subf %285, %270 : vector<1x4xf32>
    %287 = arith.mulf %270, %267 : vector<1x4xf32>
    %288 = arith.mulf %286, %283 : vector<1x4xf32>
    %289 = arith.addf %287, %288 : vector<1x4xf32>
    %cst_108 = arith.constant dense<0.000000e+00> : vector<1x4xf32>
    %290 = tpu.matmul %289, %5, %cst_108 {dimension_numbers = #tpu.dot_dimension_numbers<[1], [0], [0], [1], [0, 0, 1, 1], [], []>} : vector<1x4xf32>, vector<4x4xf32>, vector<1x4xf32> -> vector<1x4xf32>
    %291 = arith.addf %290, %6 : vector<1x4xf32>
    %292 = vector.broadcast %9 : f32 to vector<1x4xf32>
    %293 = arith.mulf %292, %273 : vector<1x4xf32>
    %294 = vector.broadcast %10 : f32 to vector<1x4xf32>
    %295 = arith.mulf %294, %291 : vector<1x4xf32>
    %296 = arith.addf %293, %295 : vector<1x4xf32>
    %297 = vector.broadcast %11 : f32 to vector<1x4xf32>
    %298 = arith.addf %296, %297 : vector<1x4xf32>
    %299 = arith.mulf %286, %298 : vector<1x4xf32>
    %300 = arith.addf %287, %299 : vector<1x4xf32>
    %cst_109 = arith.constant dense<0.000000e+00> : vector<1x96xf32>
    %301 = tpu.matmul %300, %7, %cst_109 {dimension_numbers = #tpu.dot_dimension_numbers<[1], [0], [0], [1], [0, 0, 1, 1], [], []>} : vector<1x4xf32>, vector<4x96xf32>, vector<1x96xf32> -> vector<1x96xf32>
    %302 = arith.addf %301, %279 : vector<1x96xf32>
    %303 = vector.extract_strided_slice %302 {offsets = [0, 0], sizes = [1, 32], strides = [1, 1]} : vector<1x96xf32> to vector<1x32xf32>
    %304 = vector.extract_strided_slice %284 {offsets = [0, 0], sizes = [1, 32], strides = [1, 1]} : vector<1x96xf32> to vector<1x32xf32>
    %305 = arith.addf %303, %304 : vector<1x32xf32>
    %306 = arith.negf %305 : vector<1x32xf32>
    %307 = math.exp %306 : vector<1x32xf32>
    %cst_110 = arith.constant 1.000000e+00 : f32
    %308 = vector.broadcast %cst_110 : f32 to vector<1x32xf32>
    %309 = arith.addf %308, %307 : vector<1x32xf32>
    %310 = arith.divf %308, %309 : vector<1x32xf32>
    %311 = vector.extract_strided_slice %302 {offsets = [0, 32], sizes = [1, 32], strides = [1, 1]} : vector<1x96xf32> to vector<1x32xf32>
    %312 = vector.extract_strided_slice %284 {offsets = [0, 32], sizes = [1, 32], strides = [1, 1]} : vector<1x96xf32> to vector<1x32xf32>
    %313 = arith.addf %311, %312 : vector<1x32xf32>
    %314 = arith.negf %313 : vector<1x32xf32>
    %315 = math.exp %314 : vector<1x32xf32>
    %cst_111 = arith.constant 1.000000e+00 : f32
    %316 = vector.broadcast %cst_111 : f32 to vector<1x32xf32>
    %317 = arith.addf %316, %315 : vector<1x32xf32>
    %318 = arith.divf %316, %317 : vector<1x32xf32>
    %319 = vector.extract_strided_slice %302 {offsets = [0, 64], sizes = [1, 32], strides = [1, 1]} : vector<1x96xf32> to vector<1x32xf32>
    %320 = vector.extract_strided_slice %284 {offsets = [0, 64], sizes = [1, 32], strides = [1, 1]} : vector<1x96xf32> to vector<1x32xf32>
    %321 = arith.addf %320, %8 : vector<1x32xf32>
    %322 = arith.mulf %310, %321 : vector<1x32xf32>
    %323 = arith.addf %319, %322 : vector<1x32xf32>
    %324 = math.tanh %323 : vector<1x32xf32>
    %cst_112 = arith.constant 1.000000e+00 : f32
    %325 = vector.broadcast %cst_112 : f32 to vector<1x32xf32>
    %326 = arith.subf %325, %318 : vector<1x32xf32>
    %327 = arith.mulf %326, %324 : vector<1x32xf32>
    %328 = arith.mulf %318, %280 : vector<1x32xf32>
    %329 = arith.addf %327, %328 : vector<1x32xf32>
    %330 = vector.shape_cast %300 : vector<1x4xf32> to vector<1x1x4xf32>
    %c0_113 = arith.constant 0 : index
    %331 = arith.index_cast %c3_i32 : i32 to index
    %c0_114 = arith.constant 0 : index
    %332 = vector.load %arg14[%c0_113, %331, %c0_114] : memref<1x8x4xf32, #tpu.memory_space<vmem>>, vector<1x1x4xf32>
    tpu.vector_store %arg14[%c0_113, %331, %c0_114], %330 {strides = array<i32>} : memref<1x8x4xf32, #tpu.memory_space<vmem>>, vector<1x1x4xf32>,
    %333 = vector.shape_cast %291 : vector<1x4xf32> to vector<1x1x4xf32>
    %c0_115 = arith.constant 0 : index
    %334 = arith.index_cast %c3_i32 : i32 to index
    %c0_116 = arith.constant 0 : index
    %335 = vector.load %arg15[%c0_115, %334, %c0_116] : memref<1x8x4xf32, #tpu.memory_space<vmem>>, vector<1x1x4xf32>
    tpu.vector_store %arg15[%c0_115, %334, %c0_116], %333 {strides = array<i32>} : memref<1x8x4xf32, #tpu.memory_space<vmem>>, vector<1x1x4xf32>,
    %336 = arith.subf %267, %298 : vector<1x4xf32>
    %337 = math.absf %336 : vector<1x4xf32>
    %338 = arith.mulf %337, %270 : vector<1x4xf32>
    %cst_117 = arith.constant dense<0.000000e+00> : vector<1xf32>
    %339 = vector.multi_reduction <add>, %338, %cst_117 [1] : vector<1x4xf32> to vector<1xf32>
    %340 = vector.shape_cast %339 : vector<1xf32> to vector<1x1xf32>
    %341 = vector.shape_cast %340 : vector<1x1xf32> to vector<1x1x1xf32>
    %c0_118 = arith.constant 0 : index
    %342 = arith.index_cast %c3_i32 : i32 to index
    %c0_119 = arith.constant 0 : index
    %343 = vector.load %arg16[%c0_118, %342, %c0_119] : memref<1x8x1xf32, #tpu.memory_space<vmem>>, vector<1x1x1xf32>
    tpu.vector_store %arg16[%c0_118, %342, %c0_119], %341 {strides = array<i32>} : memref<1x8x1xf32, #tpu.memory_space<vmem>>, vector<1x1x1xf32>,
    %cst_120 = arith.constant dense<0.000000e+00> : vector<1xf32>
    %344 = vector.multi_reduction <add>, %270, %cst_120 [1] : vector<1x4xf32> to vector<1xf32>
    %345 = vector.shape_cast %344 : vector<1xf32> to vector<1x1xf32>
    %346 = vector.shape_cast %345 : vector<1x1xf32> to vector<1x1x1xf32>
    %c0_121 = arith.constant 0 : index
    %347 = arith.index_cast %c3_i32 : i32 to index
    %c0_122 = arith.constant 0 : index
    %348 = vector.load %arg17[%c0_121, %347, %c0_122] : memref<1x8x1xf32, #tpu.memory_space<vmem>>, vector<1x1x1xf32>
    tpu.vector_store %arg17[%c0_121, %347, %c0_122], %346 {strides = array<i32>} : memref<1x8x1xf32, #tpu.memory_space<vmem>>, vector<1x1x1xf32>,
    %c4_i32 = arith.constant 4 : i32
    %c0_123 = arith.constant 0 : index
    %349 = arith.index_cast %c4_i32 : i32 to index
    %c0_124 = arith.constant 0 : index
    %350 = vector.load %arg2[%c0_123, %349, %c0_124] : memref<1x8x4xf32, #tpu.memory_space<vmem>>, vector<1x1x4xf32>
    %351 = vector.shape_cast %350 : vector<1x1x4xf32> to vector<1x4xf32>
    %c0_125 = arith.constant 0 : index
    %352 = arith.index_cast %c4_i32 : i32 to index
    %c0_126 = arith.constant 0 : index
    %353 = vector.load %arg3[%c0_125, %352, %c0_126] : memref<1x8x4xf32, #tpu.memory_space<vmem>>, vector<1x1x4xf32>
    %354 = vector.shape_cast %353 : vector<1x1x4xf32> to vector<1x4xf32>
    %c0_127 = arith.constant 0 : index
    %355 = arith.index_cast %c4_i32 : i32 to index
    %c0_128 = arith.constant 0 : index
    %356 = vector.load %arg4[%c0_127, %355, %c0_128] : memref<1x8x4xf32, #tpu.memory_space<vmem>>, vector<1x1x4xf32>
    %357 = vector.shape_cast %356 : vector<1x1x4xf32> to vector<1x4xf32>
    %c0_129 = arith.constant 0 : index
    %358 = arith.index_cast %c4_i32 : i32 to index
    %c0_130 = arith.constant 0 : index
    %359 = vector.load %arg5[%c0_129, %358, %c0_130] : memref<1x8x32xf32, #tpu.memory_space<vmem>>, vector<1x1x32xf32>
    %360 = vector.shape_cast %359 : vector<1x1x32xf32> to vector<1x32xf32>
    %c0_131 = arith.constant 0 : index
    %361 = arith.index_cast %c4_i32 : i32 to index
    %c0_132 = arith.constant 0 : index
    %362 = vector.load %arg6[%c0_131, %361, %c0_132] : memref<1x8x96xf32, #tpu.memory_space<vmem>>, vector<1x1x96xf32>
    %363 = vector.shape_cast %362 : vector<1x1x96xf32> to vector<1x96xf32>
    %364 = arith.mulf %329, %360 : vector<1x32xf32>
    %cst_133 = arith.constant dense<0.000000e+00> : vector<1x100xf32>
    %365 = tpu.matmul %364, %3, %cst_133 {dimension_numbers = #tpu.dot_dimension_numbers<[1], [0], [0], [1], [0, 0, 1, 1], [], []>} : vector<1x32xf32>, vector<32x100xf32>, vector<1x100xf32> -> vector<1x100xf32>
    %366 = vector.extract_strided_slice %365 {offsets = [0, 0], sizes = [1, 4], strides = [1, 1]} : vector<1x100xf32> to vector<1x4xf32>
    %367 = arith.addf %366, %4 : vector<1x4xf32>
    %368 = vector.extract_strided_slice %365 {offsets = [0, 4], sizes = [1, 96], strides = [1, 1]} : vector<1x100xf32> to vector<1x96xf32>
    %cst_134 = arith.constant 1.000000e+00 : f32
    %369 = vector.broadcast %cst_134 : f32 to vector<1x4xf32>
    %370 = arith.subf %369, %354 : vector<1x4xf32>
    %371 = arith.mulf %354, %351 : vector<1x4xf32>
    %372 = arith.mulf %370, %367 : vector<1x4xf32>
    %373 = arith.addf %371, %372 : vector<1x4xf32>
    %cst_135 = arith.constant dense<0.000000e+00> : vector<1x4xf32>
    %374 = tpu.matmul %373, %5, %cst_135 {dimension_numbers = #tpu.dot_dimension_numbers<[1], [0], [0], [1], [0, 0, 1, 1], [], []>} : vector<1x4xf32>, vector<4x4xf32>, vector<1x4xf32> -> vector<1x4xf32>
    %375 = arith.addf %374, %6 : vector<1x4xf32>
    %376 = vector.broadcast %9 : f32 to vector<1x4xf32>
    %377 = arith.mulf %376, %357 : vector<1x4xf32>
    %378 = vector.broadcast %10 : f32 to vector<1x4xf32>
    %379 = arith.mulf %378, %375 : vector<1x4xf32>
    %380 = arith.addf %377, %379 : vector<1x4xf32>
    %381 = vector.broadcast %11 : f32 to vector<1x4xf32>
    %382 = arith.addf %380, %381 : vector<1x4xf32>
    %383 = arith.mulf %370, %382 : vector<1x4xf32>
    %384 = arith.addf %371, %383 : vector<1x4xf32>
    %cst_136 = arith.constant dense<0.000000e+00> : vector<1x96xf32>
    %385 = tpu.matmul %384, %7, %cst_136 {dimension_numbers = #tpu.dot_dimension_numbers<[1], [0], [0], [1], [0, 0, 1, 1], [], []>} : vector<1x4xf32>, vector<4x96xf32>, vector<1x96xf32> -> vector<1x96xf32>
    %386 = arith.addf %385, %363 : vector<1x96xf32>
    %387 = vector.extract_strided_slice %386 {offsets = [0, 0], sizes = [1, 32], strides = [1, 1]} : vector<1x96xf32> to vector<1x32xf32>
    %388 = vector.extract_strided_slice %368 {offsets = [0, 0], sizes = [1, 32], strides = [1, 1]} : vector<1x96xf32> to vector<1x32xf32>
    %389 = arith.addf %387, %388 : vector<1x32xf32>
    %390 = arith.negf %389 : vector<1x32xf32>
    %391 = math.exp %390 : vector<1x32xf32>
    %cst_137 = arith.constant 1.000000e+00 : f32
    %392 = vector.broadcast %cst_137 : f32 to vector<1x32xf32>
    %393 = arith.addf %392, %391 : vector<1x32xf32>
    %394 = arith.divf %392, %393 : vector<1x32xf32>
    %395 = vector.extract_strided_slice %386 {offsets = [0, 32], sizes = [1, 32], strides = [1, 1]} : vector<1x96xf32> to vector<1x32xf32>
    %396 = vector.extract_strided_slice %368 {offsets = [0, 32], sizes = [1, 32], strides = [1, 1]} : vector<1x96xf32> to vector<1x32xf32>
    %397 = arith.addf %395, %396 : vector<1x32xf32>
    %398 = arith.negf %397 : vector<1x32xf32>
    %399 = math.exp %398 : vector<1x32xf32>
    %cst_138 = arith.constant 1.000000e+00 : f32
    %400 = vector.broadcast %cst_138 : f32 to vector<1x32xf32>
    %401 = arith.addf %400, %399 : vector<1x32xf32>
    %402 = arith.divf %400, %401 : vector<1x32xf32>
    %403 = vector.extract_strided_slice %386 {offsets = [0, 64], sizes = [1, 32], strides = [1, 1]} : vector<1x96xf32> to vector<1x32xf32>
    %404 = vector.extract_strided_slice %368 {offsets = [0, 64], sizes = [1, 32], strides = [1, 1]} : vector<1x96xf32> to vector<1x32xf32>
    %405 = arith.addf %404, %8 : vector<1x32xf32>
    %406 = arith.mulf %394, %405 : vector<1x32xf32>
    %407 = arith.addf %403, %406 : vector<1x32xf32>
    %408 = math.tanh %407 : vector<1x32xf32>
    %cst_139 = arith.constant 1.000000e+00 : f32
    %409 = vector.broadcast %cst_139 : f32 to vector<1x32xf32>
    %410 = arith.subf %409, %402 : vector<1x32xf32>
    %411 = arith.mulf %410, %408 : vector<1x32xf32>
    %412 = arith.mulf %402, %364 : vector<1x32xf32>
    %413 = arith.addf %411, %412 : vector<1x32xf32>
    %414 = vector.shape_cast %384 : vector<1x4xf32> to vector<1x1x4xf32>
    %c0_140 = arith.constant 0 : index
    %415 = arith.index_cast %c4_i32 : i32 to index
    %c0_141 = arith.constant 0 : index
    %416 = vector.load %arg14[%c0_140, %415, %c0_141] : memref<1x8x4xf32, #tpu.memory_space<vmem>>, vector<1x1x4xf32>
    tpu.vector_store %arg14[%c0_140, %415, %c0_141], %414 {strides = array<i32>} : memref<1x8x4xf32, #tpu.memory_space<vmem>>, vector<1x1x4xf32>,
    %417 = vector.shape_cast %375 : vector<1x4xf32> to vector<1x1x4xf32>
    %c0_142 = arith.constant 0 : index
    %418 = arith.index_cast %c4_i32 : i32 to index
    %c0_143 = arith.constant 0 : index
    %419 = vector.load %arg15[%c0_142, %418, %c0_143] : memref<1x8x4xf32, #tpu.memory_space<vmem>>, vector<1x1x4xf32>
    tpu.vector_store %arg15[%c0_142, %418, %c0_143], %417 {strides = array<i32>} : memref<1x8x4xf32, #tpu.memory_space<vmem>>, vector<1x1x4xf32>,
    %420 = arith.subf %351, %382 : vector<1x4xf32>
    %421 = math.absf %420 : vector<1x4xf32>
    %422 = arith.mulf %421, %354 : vector<1x4xf32>
    %cst_144 = arith.constant dense<0.000000e+00> : vector<1xf32>
    %423 = vector.multi_reduction <add>, %422, %cst_144 [1] : vector<1x4xf32> to vector<1xf32>
    %424 = vector.shape_cast %423 : vector<1xf32> to vector<1x1xf32>
    %425 = vector.shape_cast %424 : vector<1x1xf32> to vector<1x1x1xf32>
    %c0_145 = arith.constant 0 : index
    %426 = arith.index_cast %c4_i32 : i32 to index
    %c0_146 = arith.constant 0 : index
    %427 = vector.load %arg16[%c0_145, %426, %c0_146] : memref<1x8x1xf32, #tpu.memory_space<vmem>>, vector<1x1x1xf32>
    tpu.vector_store %arg16[%c0_145, %426, %c0_146], %425 {strides = array<i32>} : memref<1x8x1xf32, #tpu.memory_space<vmem>>, vector<1x1x1xf32>,
    %cst_147 = arith.constant dense<0.000000e+00> : vector<1xf32>
    %428 = vector.multi_reduction <add>, %354, %cst_147 [1] : vector<1x4xf32> to vector<1xf32>
    %429 = vector.shape_cast %428 : vector<1xf32> to vector<1x1xf32>
    %430 = vector.shape_cast %429 : vector<1x1xf32> to vector<1x1x1xf32>
    %c0_148 = arith.constant 0 : index
    %431 = arith.index_cast %c4_i32 : i32 to index
    %c0_149 = arith.constant 0 : index
    %432 = vector.load %arg17[%c0_148, %431, %c0_149] : memref<1x8x1xf32, #tpu.memory_space<vmem>>, vector<1x1x1xf32>
    tpu.vector_store %arg17[%c0_148, %431, %c0_149], %430 {strides = array<i32>} : memref<1x8x1xf32, #tpu.memory_space<vmem>>, vector<1x1x1xf32>,
    %c5_i32 = arith.constant 5 : i32
    %c0_150 = arith.constant 0 : index
    %433 = arith.index_cast %c5_i32 : i32 to index
    %c0_151 = arith.constant 0 : index
    %434 = vector.load %arg2[%c0_150, %433, %c0_151] : memref<1x8x4xf32, #tpu.memory_space<vmem>>, vector<1x1x4xf32>
    %435 = vector.shape_cast %434 : vector<1x1x4xf32> to vector<1x4xf32>
    %c0_152 = arith.constant 0 : index
    %436 = arith.index_cast %c5_i32 : i32 to index
    %c0_153 = arith.constant 0 : index
    %437 = vector.load %arg3[%c0_152, %436, %c0_153] : memref<1x8x4xf32, #tpu.memory_space<vmem>>, vector<1x1x4xf32>
    %438 = vector.shape_cast %437 : vector<1x1x4xf32> to vector<1x4xf32>
    %c0_154 = arith.constant 0 : index
    %439 = arith.index_cast %c5_i32 : i32 to index
    %c0_155 = arith.constant 0 : index
    %440 = vector.load %arg4[%c0_154, %439, %c0_155] : memref<1x8x4xf32, #tpu.memory_space<vmem>>, vector<1x1x4xf32>
    %441 = vector.shape_cast %440 : vector<1x1x4xf32> to vector<1x4xf32>
    %c0_156 = arith.constant 0 : index
    %442 = arith.index_cast %c5_i32 : i32 to index
    %c0_157 = arith.constant 0 : index
    %443 = vector.load %arg5[%c0_156, %442, %c0_157] : memref<1x8x32xf32, #tpu.memory_space<vmem>>, vector<1x1x32xf32>
    %444 = vector.shape_cast %443 : vector<1x1x32xf32> to vector<1x32xf32>
    %c0_158 = arith.constant 0 : index
    %445 = arith.index_cast %c5_i32 : i32 to index
    %c0_159 = arith.constant 0 : index
    %446 = vector.load %arg6[%c0_158, %445, %c0_159] : memref<1x8x96xf32, #tpu.memory_space<vmem>>, vector<1x1x96xf32>
    %447 = vector.shape_cast %446 : vector<1x1x96xf32> to vector<1x96xf32>
    %448 = arith.mulf %413, %444 : vector<1x32xf32>
    %cst_160 = arith.constant dense<0.000000e+00> : vector<1x100xf32>
    %449 = tpu.matmul %448, %3, %cst_160 {dimension_numbers = #tpu.dot_dimension_numbers<[1], [0], [0], [1], [0, 0, 1, 1], [], []>} : vector<1x32xf32>, vector<32x100xf32>, vector<1x100xf32> -> vector<1x100xf32>
    %450 = vector.extract_strided_slice %449 {offsets = [0, 0], sizes = [1, 4], strides = [1, 1]} : vector<1x100xf32> to vector<1x4xf32>
    %451 = arith.addf %450, %4 : vector<1x4xf32>
    %452 = vector.extract_strided_slice %449 {offsets = [0, 4], sizes = [1, 96], strides = [1, 1]} : vector<1x100xf32> to vector<1x96xf32>
    %cst_161 = arith.constant 1.000000e+00 : f32
    %453 = vector.broadcast %cst_161 : f32 to vector<1x4xf32>
    %454 = arith.subf %453, %438 : vector<1x4xf32>
    %455 = arith.mulf %438, %435 : vector<1x4xf32>
    %456 = arith.mulf %454, %451 : vector<1x4xf32>
    %457 = arith.addf %455, %456 : vector<1x4xf32>
    %cst_162 = arith.constant dense<0.000000e+00> : vector<1x4xf32>
    %458 = tpu.matmul %457, %5, %cst_162 {dimension_numbers = #tpu.dot_dimension_numbers<[1], [0], [0], [1], [0, 0, 1, 1], [], []>} : vector<1x4xf32>, vector<4x4xf32>, vector<1x4xf32> -> vector<1x4xf32>
    %459 = arith.addf %458, %6 : vector<1x4xf32>
    %460 = vector.broadcast %9 : f32 to vector<1x4xf32>
    %461 = arith.mulf %460, %441 : vector<1x4xf32>
    %462 = vector.broadcast %10 : f32 to vector<1x4xf32>
    %463 = arith.mulf %462, %459 : vector<1x4xf32>
    %464 = arith.addf %461, %463 : vector<1x4xf32>
    %465 = vector.broadcast %11 : f32 to vector<1x4xf32>
    %466 = arith.addf %464, %465 : vector<1x4xf32>
    %467 = arith.mulf %454, %466 : vector<1x4xf32>
    %468 = arith.addf %455, %467 : vector<1x4xf32>
    %cst_163 = arith.constant dense<0.000000e+00> : vector<1x96xf32>
    %469 = tpu.matmul %468, %7, %cst_163 {dimension_numbers = #tpu.dot_dimension_numbers<[1], [0], [0], [1], [0, 0, 1, 1], [], []>} : vector<1x4xf32>, vector<4x96xf32>, vector<1x96xf32> -> vector<1x96xf32>
    %470 = arith.addf %469, %447 : vector<1x96xf32>
    %471 = vector.extract_strided_slice %470 {offsets = [0, 0], sizes = [1, 32], strides = [1, 1]} : vector<1x96xf32> to vector<1x32xf32>
    %472 = vector.extract_strided_slice %452 {offsets = [0, 0], sizes = [1, 32], strides = [1, 1]} : vector<1x96xf32> to vector<1x32xf32>
    %473 = arith.addf %471, %472 : vector<1x32xf32>
    %474 = arith.negf %473 : vector<1x32xf32>
    %475 = math.exp %474 : vector<1x32xf32>
    %cst_164 = arith.constant 1.000000e+00 : f32
    %476 = vector.broadcast %cst_164 : f32 to vector<1x32xf32>
    %477 = arith.addf %476, %475 : vector<1x32xf32>
    %478 = arith.divf %476, %477 : vector<1x32xf32>
    %479 = vector.extract_strided_slice %470 {offsets = [0, 32], sizes = [1, 32], strides = [1, 1]} : vector<1x96xf32> to vector<1x32xf32>
    %480 = vector.extract_strided_slice %452 {offsets = [0, 32], sizes = [1, 32], strides = [1, 1]} : vector<1x96xf32> to vector<1x32xf32>
    %481 = arith.addf %479, %480 : vector<1x32xf32>
    %482 = arith.negf %481 : vector<1x32xf32>
    %483 = math.exp %482 : vector<1x32xf32>
    %cst_165 = arith.constant 1.000000e+00 : f32
    %484 = vector.broadcast %cst_165 : f32 to vector<1x32xf32>
    %485 = arith.addf %484, %483 : vector<1x32xf32>
    %486 = arith.divf %484, %485 : vector<1x32xf32>
    %487 = vector.extract_strided_slice %470 {offsets = [0, 64], sizes = [1, 32], strides = [1, 1]} : vector<1x96xf32> to vector<1x32xf32>
    %488 = vector.extract_strided_slice %452 {offsets = [0, 64], sizes = [1, 32], strides = [1, 1]} : vector<1x96xf32> to vector<1x32xf32>
    %489 = arith.addf %488, %8 : vector<1x32xf32>
    %490 = arith.mulf %478, %489 : vector<1x32xf32>
    %491 = arith.addf %487, %490 : vector<1x32xf32>
    %492 = math.tanh %491 : vector<1x32xf32>
    %cst_166 = arith.constant 1.000000e+00 : f32
    %493 = vector.broadcast %cst_166 : f32 to vector<1x32xf32>
    %494 = arith.subf %493, %486 : vector<1x32xf32>
    %495 = arith.mulf %494, %492 : vector<1x32xf32>
    %496 = arith.mulf %486, %448 : vector<1x32xf32>
    %497 = arith.addf %495, %496 : vector<1x32xf32>
    %498 = vector.shape_cast %468 : vector<1x4xf32> to vector<1x1x4xf32>
    %c0_167 = arith.constant 0 : index
    %499 = arith.index_cast %c5_i32 : i32 to index
    %c0_168 = arith.constant 0 : index
    %500 = vector.load %arg14[%c0_167, %499, %c0_168] : memref<1x8x4xf32, #tpu.memory_space<vmem>>, vector<1x1x4xf32>
    tpu.vector_store %arg14[%c0_167, %499, %c0_168], %498 {strides = array<i32>} : memref<1x8x4xf32, #tpu.memory_space<vmem>>, vector<1x1x4xf32>,
    %501 = vector.shape_cast %459 : vector<1x4xf32> to vector<1x1x4xf32>
    %c0_169 = arith.constant 0 : index
    %502 = arith.index_cast %c5_i32 : i32 to index
    %c0_170 = arith.constant 0 : index
    %503 = vector.load %arg15[%c0_169, %502, %c0_170] : memref<1x8x4xf32, #tpu.memory_space<vmem>>, vector<1x1x4xf32>
    tpu.vector_store %arg15[%c0_169, %502, %c0_170], %501 {strides = array<i32>} : memref<1x8x4xf32, #tpu.memory_space<vmem>>, vector<1x1x4xf32>,
    %504 = arith.subf %435, %466 : vector<1x4xf32>
    %505 = math.absf %504 : vector<1x4xf32>
    %506 = arith.mulf %505, %438 : vector<1x4xf32>
    %cst_171 = arith.constant dense<0.000000e+00> : vector<1xf32>
    %507 = vector.multi_reduction <add>, %506, %cst_171 [1] : vector<1x4xf32> to vector<1xf32>
    %508 = vector.shape_cast %507 : vector<1xf32> to vector<1x1xf32>
    %509 = vector.shape_cast %508 : vector<1x1xf32> to vector<1x1x1xf32>
    %c0_172 = arith.constant 0 : index
    %510 = arith.index_cast %c5_i32 : i32 to index
    %c0_173 = arith.constant 0 : index
    %511 = vector.load %arg16[%c0_172, %510, %c0_173] : memref<1x8x1xf32, #tpu.memory_space<vmem>>, vector<1x1x1xf32>
    tpu.vector_store %arg16[%c0_172, %510, %c0_173], %509 {strides = array<i32>} : memref<1x8x1xf32, #tpu.memory_space<vmem>>, vector<1x1x1xf32>,
    %cst_174 = arith.constant dense<0.000000e+00> : vector<1xf32>
    %512 = vector.multi_reduction <add>, %438, %cst_174 [1] : vector<1x4xf32> to vector<1xf32>
    %513 = vector.shape_cast %512 : vector<1xf32> to vector<1x1xf32>
    %514 = vector.shape_cast %513 : vector<1x1xf32> to vector<1x1x1xf32>
    %c0_175 = arith.constant 0 : index
    %515 = arith.index_cast %c5_i32 : i32 to index
    %c0_176 = arith.constant 0 : index
    %516 = vector.load %arg17[%c0_175, %515, %c0_176] : memref<1x8x1xf32, #tpu.memory_space<vmem>>, vector<1x1x1xf32>
    tpu.vector_store %arg17[%c0_175, %515, %c0_176], %514 {strides = array<i32>} : memref<1x8x1xf32, #tpu.memory_space<vmem>>, vector<1x1x1xf32>,
    %c6_i32 = arith.constant 6 : i32
    %c0_177 = arith.constant 0 : index
    %517 = arith.index_cast %c6_i32 : i32 to index
    %c0_178 = arith.constant 0 : index
    %518 = vector.load %arg2[%c0_177, %517, %c0_178] : memref<1x8x4xf32, #tpu.memory_space<vmem>>, vector<1x1x4xf32>
    %519 = vector.shape_cast %518 : vector<1x1x4xf32> to vector<1x4xf32>
    %c0_179 = arith.constant 0 : index
    %520 = arith.index_cast %c6_i32 : i32 to index
    %c0_180 = arith.constant 0 : index
    %521 = vector.load %arg3[%c0_179, %520, %c0_180] : memref<1x8x4xf32, #tpu.memory_space<vmem>>, vector<1x1x4xf32>
    %522 = vector.shape_cast %521 : vector<1x1x4xf32> to vector<1x4xf32>
    %c0_181 = arith.constant 0 : index
    %523 = arith.index_cast %c6_i32 : i32 to index
    %c0_182 = arith.constant 0 : index
    %524 = vector.load %arg4[%c0_181, %523, %c0_182] : memref<1x8x4xf32, #tpu.memory_space<vmem>>, vector<1x1x4xf32>
    %525 = vector.shape_cast %524 : vector<1x1x4xf32> to vector<1x4xf32>
    %c0_183 = arith.constant 0 : index
    %526 = arith.index_cast %c6_i32 : i32 to index
    %c0_184 = arith.constant 0 : index
    %527 = vector.load %arg5[%c0_183, %526, %c0_184] : memref<1x8x32xf32, #tpu.memory_space<vmem>>, vector<1x1x32xf32>
    %528 = vector.shape_cast %527 : vector<1x1x32xf32> to vector<1x32xf32>
    %c0_185 = arith.constant 0 : index
    %529 = arith.index_cast %c6_i32 : i32 to index
    %c0_186 = arith.constant 0 : index
    %530 = vector.load %arg6[%c0_185, %529, %c0_186] : memref<1x8x96xf32, #tpu.memory_space<vmem>>, vector<1x1x96xf32>
    %531 = vector.shape_cast %530 : vector<1x1x96xf32> to vector<1x96xf32>
    %532 = arith.mulf %497, %528 : vector<1x32xf32>
    %cst_187 = arith.constant dense<0.000000e+00> : vector<1x100xf32>
    %533 = tpu.matmul %532, %3, %cst_187 {dimension_numbers = #tpu.dot_dimension_numbers<[1], [0], [0], [1], [0, 0, 1, 1], [], []>} : vector<1x32xf32>, vector<32x100xf32>, vector<1x100xf32> -> vector<1x100xf32>
    %534 = vector.extract_strided_slice %533 {offsets = [0, 0], sizes = [1, 4], strides = [1, 1]} : vector<1x100xf32> to vector<1x4xf32>
    %535 = arith.addf %534, %4 : vector<1x4xf32>
    %536 = vector.extract_strided_slice %533 {offsets = [0, 4], sizes = [1, 96], strides = [1, 1]} : vector<1x100xf32> to vector<1x96xf32>
    %cst_188 = arith.constant 1.000000e+00 : f32
    %537 = vector.broadcast %cst_188 : f32 to vector<1x4xf32>
    %538 = arith.subf %537, %522 : vector<1x4xf32>
    %539 = arith.mulf %522, %519 : vector<1x4xf32>
    %540 = arith.mulf %538, %535 : vector<1x4xf32>
    %541 = arith.addf %539, %540 : vector<1x4xf32>
    %cst_189 = arith.constant dense<0.000000e+00> : vector<1x4xf32>
    %542 = tpu.matmul %541, %5, %cst_189 {dimension_numbers = #tpu.dot_dimension_numbers<[1], [0], [0], [1], [0, 0, 1, 1], [], []>} : vector<1x4xf32>, vector<4x4xf32>, vector<1x4xf32> -> vector<1x4xf32>
    %543 = arith.addf %542, %6 : vector<1x4xf32>
    %544 = vector.broadcast %9 : f32 to vector<1x4xf32>
    %545 = arith.mulf %544, %525 : vector<1x4xf32>
    %546 = vector.broadcast %10 : f32 to vector<1x4xf32>
    %547 = arith.mulf %546, %543 : vector<1x4xf32>
    %548 = arith.addf %545, %547 : vector<1x4xf32>
    %549 = vector.broadcast %11 : f32 to vector<1x4xf32>
    %550 = arith.addf %548, %549 : vector<1x4xf32>
    %551 = arith.mulf %538, %550 : vector<1x4xf32>
    %552 = arith.addf %539, %551 : vector<1x4xf32>
    %cst_190 = arith.constant dense<0.000000e+00> : vector<1x96xf32>
    %553 = tpu.matmul %552, %7, %cst_190 {dimension_numbers = #tpu.dot_dimension_numbers<[1], [0], [0], [1], [0, 0, 1, 1], [], []>} : vector<1x4xf32>, vector<4x96xf32>, vector<1x96xf32> -> vector<1x96xf32>
    %554 = arith.addf %553, %531 : vector<1x96xf32>
    %555 = vector.extract_strided_slice %554 {offsets = [0, 0], sizes = [1, 32], strides = [1, 1]} : vector<1x96xf32> to vector<1x32xf32>
    %556 = vector.extract_strided_slice %536 {offsets = [0, 0], sizes = [1, 32], strides = [1, 1]} : vector<1x96xf32> to vector<1x32xf32>
    %557 = arith.addf %555, %556 : vector<1x32xf32>
    %558 = arith.negf %557 : vector<1x32xf32>
    %559 = math.exp %558 : vector<1x32xf32>
    %cst_191 = arith.constant 1.000000e+00 : f32
    %560 = vector.broadcast %cst_191 : f32 to vector<1x32xf32>
    %561 = arith.addf %560, %559 : vector<1x32xf32>
    %562 = arith.divf %560, %561 : vector<1x32xf32>
    %563 = vector.extract_strided_slice %554 {offsets = [0, 32], sizes = [1, 32], strides = [1, 1]} : vector<1x96xf32> to vector<1x32xf32>
    %564 = vector.extract_strided_slice %536 {offsets = [0, 32], sizes = [1, 32], strides = [1, 1]} : vector<1x96xf32> to vector<1x32xf32>
    %565 = arith.addf %563, %564 : vector<1x32xf32>
    %566 = arith.negf %565 : vector<1x32xf32>
    %567 = math.exp %566 : vector<1x32xf32>
    %cst_192 = arith.constant 1.000000e+00 : f32
    %568 = vector.broadcast %cst_192 : f32 to vector<1x32xf32>
    %569 = arith.addf %568, %567 : vector<1x32xf32>
    %570 = arith.divf %568, %569 : vector<1x32xf32>
    %571 = vector.extract_strided_slice %554 {offsets = [0, 64], sizes = [1, 32], strides = [1, 1]} : vector<1x96xf32> to vector<1x32xf32>
    %572 = vector.extract_strided_slice %536 {offsets = [0, 64], sizes = [1, 32], strides = [1, 1]} : vector<1x96xf32> to vector<1x32xf32>
    %573 = arith.addf %572, %8 : vector<1x32xf32>
    %574 = arith.mulf %562, %573 : vector<1x32xf32>
    %575 = arith.addf %571, %574 : vector<1x32xf32>
    %576 = math.tanh %575 : vector<1x32xf32>
    %cst_193 = arith.constant 1.000000e+00 : f32
    %577 = vector.broadcast %cst_193 : f32 to vector<1x32xf32>
    %578 = arith.subf %577, %570 : vector<1x32xf32>
    %579 = arith.mulf %578, %576 : vector<1x32xf32>
    %580 = arith.mulf %570, %532 : vector<1x32xf32>
    %581 = arith.addf %579, %580 : vector<1x32xf32>
    %582 = vector.shape_cast %552 : vector<1x4xf32> to vector<1x1x4xf32>
    %c0_194 = arith.constant 0 : index
    %583 = arith.index_cast %c6_i32 : i32 to index
    %c0_195 = arith.constant 0 : index
    %584 = vector.load %arg14[%c0_194, %583, %c0_195] : memref<1x8x4xf32, #tpu.memory_space<vmem>>, vector<1x1x4xf32>
    tpu.vector_store %arg14[%c0_194, %583, %c0_195], %582 {strides = array<i32>} : memref<1x8x4xf32, #tpu.memory_space<vmem>>, vector<1x1x4xf32>,
    %585 = vector.shape_cast %543 : vector<1x4xf32> to vector<1x1x4xf32>
    %c0_196 = arith.constant 0 : index
    %586 = arith.index_cast %c6_i32 : i32 to index
    %c0_197 = arith.constant 0 : index
    %587 = vector.load %arg15[%c0_196, %586, %c0_197] : memref<1x8x4xf32, #tpu.memory_space<vmem>>, vector<1x1x4xf32>
    tpu.vector_store %arg15[%c0_196, %586, %c0_197], %585 {strides = array<i32>} : memref<1x8x4xf32, #tpu.memory_space<vmem>>, vector<1x1x4xf32>,
    %588 = arith.subf %519, %550 : vector<1x4xf32>
    %589 = math.absf %588 : vector<1x4xf32>
    %590 = arith.mulf %589, %522 : vector<1x4xf32>
    %cst_198 = arith.constant dense<0.000000e+00> : vector<1xf32>
    %591 = vector.multi_reduction <add>, %590, %cst_198 [1] : vector<1x4xf32> to vector<1xf32>
    %592 = vector.shape_cast %591 : vector<1xf32> to vector<1x1xf32>
    %593 = vector.shape_cast %592 : vector<1x1xf32> to vector<1x1x1xf32>
    %c0_199 = arith.constant 0 : index
    %594 = arith.index_cast %c6_i32 : i32 to index
    %c0_200 = arith.constant 0 : index
    %595 = vector.load %arg16[%c0_199, %594, %c0_200] : memref<1x8x1xf32, #tpu.memory_space<vmem>>, vector<1x1x1xf32>
    tpu.vector_store %arg16[%c0_199, %594, %c0_200], %593 {strides = array<i32>} : memref<1x8x1xf32, #tpu.memory_space<vmem>>, vector<1x1x1xf32>,
    %cst_201 = arith.constant dense<0.000000e+00> : vector<1xf32>
    %596 = vector.multi_reduction <add>, %522, %cst_201 [1] : vector<1x4xf32> to vector<1xf32>
    %597 = vector.shape_cast %596 : vector<1xf32> to vector<1x1xf32>
    %598 = vector.shape_cast %597 : vector<1x1xf32> to vector<1x1x1xf32>
    %c0_202 = arith.constant 0 : index
    %599 = arith.index_cast %c6_i32 : i32 to index
    %c0_203 = arith.constant 0 : index
    %600 = vector.load %arg17[%c0_202, %599, %c0_203] : memref<1x8x1xf32, #tpu.memory_space<vmem>>, vector<1x1x1xf32>
    tpu.vector_store %arg17[%c0_202, %599, %c0_203], %598 {strides = array<i32>} : memref<1x8x1xf32, #tpu.memory_space<vmem>>, vector<1x1x1xf32>,
    %c7_i32 = arith.constant 7 : i32
    %c0_204 = arith.constant 0 : index
    %601 = arith.index_cast %c7_i32 : i32 to index
    %c0_205 = arith.constant 0 : index
    %602 = vector.load %arg2[%c0_204, %601, %c0_205] : memref<1x8x4xf32, #tpu.memory_space<vmem>>, vector<1x1x4xf32>
    %603 = vector.shape_cast %602 : vector<1x1x4xf32> to vector<1x4xf32>
    %c0_206 = arith.constant 0 : index
    %604 = arith.index_cast %c7_i32 : i32 to index
    %c0_207 = arith.constant 0 : index
    %605 = vector.load %arg3[%c0_206, %604, %c0_207] : memref<1x8x4xf32, #tpu.memory_space<vmem>>, vector<1x1x4xf32>
    %606 = vector.shape_cast %605 : vector<1x1x4xf32> to vector<1x4xf32>
    %c0_208 = arith.constant 0 : index
    %607 = arith.index_cast %c7_i32 : i32 to index
    %c0_209 = arith.constant 0 : index
    %608 = vector.load %arg4[%c0_208, %607, %c0_209] : memref<1x8x4xf32, #tpu.memory_space<vmem>>, vector<1x1x4xf32>
    %609 = vector.shape_cast %608 : vector<1x1x4xf32> to vector<1x4xf32>
    %c0_210 = arith.constant 0 : index
    %610 = arith.index_cast %c7_i32 : i32 to index
    %c0_211 = arith.constant 0 : index
    %611 = vector.load %arg5[%c0_210, %610, %c0_211] : memref<1x8x32xf32, #tpu.memory_space<vmem>>, vector<1x1x32xf32>
    %612 = vector.shape_cast %611 : vector<1x1x32xf32> to vector<1x32xf32>
    %c0_212 = arith.constant 0 : index
    %613 = arith.index_cast %c7_i32 : i32 to index
    %c0_213 = arith.constant 0 : index
    %614 = vector.load %arg6[%c0_212, %613, %c0_213] : memref<1x8x96xf32, #tpu.memory_space<vmem>>, vector<1x1x96xf32>
    %615 = vector.shape_cast %614 : vector<1x1x96xf32> to vector<1x96xf32>
    %616 = arith.mulf %581, %612 : vector<1x32xf32>
    %cst_214 = arith.constant dense<0.000000e+00> : vector<1x100xf32>
    %617 = tpu.matmul %616, %3, %cst_214 {dimension_numbers = #tpu.dot_dimension_numbers<[1], [0], [0], [1], [0, 0, 1, 1], [], []>} : vector<1x32xf32>, vector<32x100xf32>, vector<1x100xf32> -> vector<1x100xf32>
    %618 = vector.extract_strided_slice %617 {offsets = [0, 0], sizes = [1, 4], strides = [1, 1]} : vector<1x100xf32> to vector<1x4xf32>
    %619 = arith.addf %618, %4 : vector<1x4xf32>
    %620 = vector.extract_strided_slice %617 {offsets = [0, 4], sizes = [1, 96], strides = [1, 1]} : vector<1x100xf32> to vector<1x96xf32>
    %cst_215 = arith.constant 1.000000e+00 : f32
    %621 = vector.broadcast %cst_215 : f32 to vector<1x4xf32>
    %622 = arith.subf %621, %606 : vector<1x4xf32>
    %623 = arith.mulf %606, %603 : vector<1x4xf32>
    %624 = arith.mulf %622, %619 : vector<1x4xf32>
    %625 = arith.addf %623, %624 : vector<1x4xf32>
    %cst_216 = arith.constant dense<0.000000e+00> : vector<1x4xf32>
    %626 = tpu.matmul %625, %5, %cst_216 {dimension_numbers = #tpu.dot_dimension_numbers<[1], [0], [0], [1], [0, 0, 1, 1], [], []>} : vector<1x4xf32>, vector<4x4xf32>, vector<1x4xf32> -> vector<1x4xf32>
    %627 = arith.addf %626, %6 : vector<1x4xf32>
    %628 = vector.broadcast %9 : f32 to vector<1x4xf32>
    %629 = arith.mulf %628, %609 : vector<1x4xf32>
    %630 = vector.broadcast %10 : f32 to vector<1x4xf32>
    %631 = arith.mulf %630, %627 : vector<1x4xf32>
    %632 = arith.addf %629, %631 : vector<1x4xf32>
    %633 = vector.broadcast %11 : f32 to vector<1x4xf32>
    %634 = arith.addf %632, %633 : vector<1x4xf32>
    %635 = arith.mulf %622, %634 : vector<1x4xf32>
    %636 = arith.addf %623, %635 : vector<1x4xf32>
    %cst_217 = arith.constant dense<0.000000e+00> : vector<1x96xf32>
    %637 = tpu.matmul %636, %7, %cst_217 {dimension_numbers = #tpu.dot_dimension_numbers<[1], [0], [0], [1], [0, 0, 1, 1], [], []>} : vector<1x4xf32>, vector<4x96xf32>, vector<1x96xf32> -> vector<1x96xf32>
    %638 = arith.addf %637, %615 : vector<1x96xf32>
    %639 = vector.extract_strided_slice %638 {offsets = [0, 0], sizes = [1, 32], strides = [1, 1]} : vector<1x96xf32> to vector<1x32xf32>
    %640 = vector.extract_strided_slice %620 {offsets = [0, 0], sizes = [1, 32], strides = [1, 1]} : vector<1x96xf32> to vector<1x32xf32>
    %641 = arith.addf %639, %640 : vector<1x32xf32>
    %642 = arith.negf %641 : vector<1x32xf32>
    %643 = math.exp %642 : vector<1x32xf32>
    %cst_218 = arith.constant 1.000000e+00 : f32
    %644 = vector.broadcast %cst_218 : f32 to vector<1x32xf32>
    %645 = arith.addf %644, %643 : vector<1x32xf32>
    %646 = arith.divf %644, %645 : vector<1x32xf32>
    %647 = vector.extract_strided_slice %638 {offsets = [0, 32], sizes = [1, 32], strides = [1, 1]} : vector<1x96xf32> to vector<1x32xf32>
    %648 = vector.extract_strided_slice %620 {offsets = [0, 32], sizes = [1, 32], strides = [1, 1]} : vector<1x96xf32> to vector<1x32xf32>
    %649 = arith.addf %647, %648 : vector<1x32xf32>
    %650 = arith.negf %649 : vector<1x32xf32>
    %651 = math.exp %650 : vector<1x32xf32>
    %cst_219 = arith.constant 1.000000e+00 : f32
    %652 = vector.broadcast %cst_219 : f32 to vector<1x32xf32>
    %653 = arith.addf %652, %651 : vector<1x32xf32>
    %654 = arith.divf %652, %653 : vector<1x32xf32>
    %655 = vector.extract_strided_slice %638 {offsets = [0, 64], sizes = [1, 32], strides = [1, 1]} : vector<1x96xf32> to vector<1x32xf32>
    %656 = vector.extract_strided_slice %620 {offsets = [0, 64], sizes = [1, 32], strides = [1, 1]} : vector<1x96xf32> to vector<1x32xf32>
    %657 = arith.addf %656, %8 : vector<1x32xf32>
    %658 = arith.mulf %646, %657 : vector<1x32xf32>
    %659 = arith.addf %655, %658 : vector<1x32xf32>
    %660 = math.tanh %659 : vector<1x32xf32>
    %cst_220 = arith.constant 1.000000e+00 : f32
    %661 = vector.broadcast %cst_220 : f32 to vector<1x32xf32>
    %662 = arith.subf %661, %654 : vector<1x32xf32>
    %663 = arith.mulf %662, %660 : vector<1x32xf32>
    %664 = arith.mulf %654, %616 : vector<1x32xf32>
    %665 = arith.addf %663, %664 : vector<1x32xf32>
    %666 = vector.shape_cast %636 : vector<1x4xf32> to vector<1x1x4xf32>
    %c0_221 = arith.constant 0 : index
    %667 = arith.index_cast %c7_i32 : i32 to index
    %c0_222 = arith.constant 0 : index
    %668 = vector.load %arg14[%c0_221, %667, %c0_222] : memref<1x8x4xf32, #tpu.memory_space<vmem>>, vector<1x1x4xf32>
    tpu.vector_store %arg14[%c0_221, %667, %c0_222], %666 {strides = array<i32>} : memref<1x8x4xf32, #tpu.memory_space<vmem>>, vector<1x1x4xf32>,
    %669 = vector.shape_cast %627 : vector<1x4xf32> to vector<1x1x4xf32>
    %c0_223 = arith.constant 0 : index
    %670 = arith.index_cast %c7_i32 : i32 to index
    %c0_224 = arith.constant 0 : index
    %671 = vector.load %arg15[%c0_223, %670, %c0_224] : memref<1x8x4xf32, #tpu.memory_space<vmem>>, vector<1x1x4xf32>
    tpu.vector_store %arg15[%c0_223, %670, %c0_224], %669 {strides = array<i32>} : memref<1x8x4xf32, #tpu.memory_space<vmem>>, vector<1x1x4xf32>,
    %672 = arith.subf %603, %634 : vector<1x4xf32>
    %673 = math.absf %672 : vector<1x4xf32>
    %674 = arith.mulf %673, %606 : vector<1x4xf32>
    %cst_225 = arith.constant dense<0.000000e+00> : vector<1xf32>
    %675 = vector.multi_reduction <add>, %674, %cst_225 [1] : vector<1x4xf32> to vector<1xf32>
    %676 = vector.shape_cast %675 : vector<1xf32> to vector<1x1xf32>
    %677 = vector.shape_cast %676 : vector<1x1xf32> to vector<1x1x1xf32>
    %c0_226 = arith.constant 0 : index
    %678 = arith.index_cast %c7_i32 : i32 to index
    %c0_227 = arith.constant 0 : index
    %679 = vector.load %arg16[%c0_226, %678, %c0_227] : memref<1x8x1xf32, #tpu.memory_space<vmem>>, vector<1x1x1xf32>
    tpu.vector_store %arg16[%c0_226, %678, %c0_227], %677 {strides = array<i32>} : memref<1x8x1xf32, #tpu.memory_space<vmem>>, vector<1x1x1xf32>,
    %cst_228 = arith.constant dense<0.000000e+00> : vector<1xf32>
    %680 = vector.multi_reduction <add>, %606, %cst_228 [1] : vector<1x4xf32> to vector<1xf32>
    %681 = vector.shape_cast %680 : vector<1xf32> to vector<1x1xf32>
    %682 = vector.shape_cast %681 : vector<1x1xf32> to vector<1x1x1xf32>
    %c0_229 = arith.constant 0 : index
    %683 = arith.index_cast %c7_i32 : i32 to index
    %c0_230 = arith.constant 0 : index
    %684 = vector.load %arg17[%c0_229, %683, %c0_230] : memref<1x8x1xf32, #tpu.memory_space<vmem>>, vector<1x1x1xf32>
    tpu.vector_store %arg17[%c0_229, %683, %c0_230], %682 {strides = array<i32>} : memref<1x8x1xf32, #tpu.memory_space<vmem>>, vector<1x1x1xf32>,
    %c8_i32 = arith.constant 8 : i32
    %c0_231 = arith.constant 0 : index
    %c0_232 = arith.constant 0 : index
    %685 = vector.load %arg19[%c0_231, %c0_232] : memref<1x32xf32, #tpu.memory_space<vmem>>, vector<1x32xf32>
    tpu.vector_store %arg19[%c0_231, %c0_232], %665 {strides = array<i32>} : memref<1x32xf32, #tpu.memory_space<vmem>>, vector<1x32xf32>,
    %c0_i32_233 = arith.constant 0 : i32
    %686 = arith.cmpi eq, %arg1, %c0_i32_233 : i32
    %687 = arith.extui %686 : i1 to i32
    %c0_i32_234 = arith.constant 0 : i32
    %688 = arith.cmpi ne, %687, %c0_i32_234 : i32
    scf.if %688 {
      %689 = vector.shape_cast %665 : vector<1x32xf32> to vector<1x1x32xf32>
      %c0_235 = arith.constant 0 : index
      %c0_236 = arith.constant 0 : index
      %c0_237 = arith.constant 0 : index
      %690 = vector.load %arg18[%c0_235, %c0_236, %c0_237] : memref<1x1x32xf32, #tpu.memory_space<vmem>>, vector<1x1x32xf32>
      tpu.vector_store %arg18[%c0_235, %c0_236, %c0_237], %689 {strides = array<i32>} : memref<1x1x32xf32, #tpu.memory_space<vmem>>, vector<1x1x32xf32>,
    } else {
    }
    return
  }
  func.func @transform_0(%arg0: i32, %arg1: i32) -> (i32, i32, i32) {
    %c0_i32 = arith.constant 0 : i32
    %c0_i32_0 = arith.constant 0 : i32
    return %arg0, %arg1, %c0_i32 : i32, i32, i32
  }
  func.func @transform_1(%arg0: i32, %arg1: i32) -> (i32, i32, i32) {
    %c0_i32 = arith.constant 0 : i32
    %c0_i32_0 = arith.constant 0 : i32
    return %arg0, %arg1, %c0_i32 : i32, i32, i32
  }
  func.func @transform_2(%arg0: i32, %arg1: i32) -> (i32, i32, i32) {
    %c0_i32 = arith.constant 0 : i32
    %c0_i32_0 = arith.constant 0 : i32
    return %arg0, %arg1, %c0_i32 : i32, i32, i32
  }
  func.func @transform_3(%arg0: i32, %arg1: i32) -> (i32, i32, i32) {
    %c0_i32 = arith.constant 0 : i32
    %c0_i32_0 = arith.constant 0 : i32
    return %arg0, %arg1, %c0_i32 : i32, i32, i32
  }
  func.func @transform_4(%arg0: i32, %arg1: i32) -> (i32, i32, i32) {
    %c0_i32 = arith.constant 0 : i32
    %c0_i32_0 = arith.constant 0 : i32
    return %arg0, %arg1, %c0_i32 : i32, i32, i32
  }
  func.func @transform_5(%arg0: i32, %arg1: i32) -> (i32, i32) {
    %c0_i32 = arith.constant 0 : i32
    %c0_i32_0 = arith.constant 0 : i32
    %c0_i32_1 = arith.constant 0 : i32
    return %c0_i32, %c0_i32_0 : i32, i32
  }
  func.func @transform_6(%arg0: i32, %arg1: i32) -> (i32, i32) {
    %c0_i32 = arith.constant 0 : i32
    %c0_i32_0 = arith.constant 0 : i32
    %c0_i32_1 = arith.constant 0 : i32
    return %c0_i32, %c0_i32_0 : i32, i32
  }
  func.func @transform_7(%arg0: i32, %arg1: i32) -> (i32, i32) {
    %c0_i32 = arith.constant 0 : i32
    %c0_i32_0 = arith.constant 0 : i32
    %c0_i32_1 = arith.constant 0 : i32
    return %c0_i32, %c0_i32_0 : i32, i32
  }
  func.func @transform_8(%arg0: i32, %arg1: i32) -> (i32, i32) {
    %c0_i32 = arith.constant 0 : i32
    %c0_i32_0 = arith.constant 0 : i32
    %c0_i32_1 = arith.constant 0 : i32
    return %c0_i32, %c0_i32_0 : i32, i32
  }
  func.func @transform_9(%arg0: i32, %arg1: i32) -> (i32, i32) {
    %c0_i32 = arith.constant 0 : i32
    %c0_i32_0 = arith.constant 0 : i32
    %c0_i32_1 = arith.constant 0 : i32
    return %c0_i32, %c0_i32_0 : i32, i32
  }
  func.func @transform_10(%arg0: i32, %arg1: i32) -> (i32, i32) {
    %c0_i32 = arith.constant 0 : i32
    %c0_i32_0 = arith.constant 0 : i32
    %c0_i32_1 = arith.constant 0 : i32
    return %c0_i32, %c0_i32_0 : i32, i32
  }
  func.func @transform_11(%arg0: i32, %arg1: i32) -> i32 {
    %c0_i32 = arith.constant 0 : i32
    %c0_i32_0 = arith.constant 0 : i32
    return %c0_i32 : i32
  }
  func.func @transform_12(%arg0: i32, %arg1: i32) -> (i32, i32, i32) {
    %c0_i32 = arith.constant 0 : i32
    %c0_i32_0 = arith.constant 0 : i32
    return %arg0, %arg1, %c0_i32 : i32, i32, i32
  }
  func.func @transform_13(%arg0: i32, %arg1: i32) -> (i32, i32, i32) {
    %c0_i32 = arith.constant 0 : i32
    %c0_i32_0 = arith.constant 0 : i32
    return %arg0, %arg1, %c0_i32 : i32, i32, i32
  }
  func.func @transform_14(%arg0: i32, %arg1: i32) -> (i32, i32, i32) {
    %c0_i32 = arith.constant 0 : i32
    %c0_i32_0 = arith.constant 0 : i32
    return %arg0, %arg1, %c0_i32 : i32, i32, i32
  }
  func.func @transform_15(%arg0: i32, %arg1: i32) -> (i32, i32, i32) {
    %c0_i32 = arith.constant 0 : i32
    %c0_i32_0 = arith.constant 0 : i32
    return %arg0, %arg1, %c0_i32 : i32, i32, i32
  }
  func.func @transform_16(%arg0: i32, %arg1: i32) -> (i32, i32, i32) {
    %c0_i32 = arith.constant 0 : i32
    %c0_i32_0 = arith.constant 0 : i32
    %c0_i32_1 = arith.constant 0 : i32
    return %arg0, %c0_i32, %c0_i32_0 : i32, i32, i32
  }
}

</mosaic_0001>

<llo_original>
// kernel: rin_forward.2
$region0: #{rin_forward.2}
  #allocation0 [shape = 'u32[]', space=smem, size = 0x4, offset = 0x4, fixed_abs, tag = 'smem constant byte address 0x4 - core index']
  #allocation1 [shape = 'u32[144,128]{1,0:T(1,128)}', space=vmem, size = 0x12000, scoped, tag = 'internal scratch']
  %s0 = inlined_call_operand.vmem [shape: f32[16,4], index: 0, kind: input, shape index: {}]
  %s1 = inlined_call_operand.vmem [shape: f32[16,4], index: 1, kind: input, shape index: {}]
  %s2 = inlined_call_operand.vmem [shape: f32[16,4], index: 2, kind: input, shape index: {}]
  %s3 = inlined_call_operand.vmem [shape: f32[16,4], index: 3, kind: input, shape index: {}]
  %s4 = inlined_call_operand.vmem [shape: f32[4,32], index: 4, kind: input, shape index: {}]
  %s5 = inlined_call_operand.vmem [shape: f32[1,32], index: 5, kind: input, shape index: {}]
  %s6 = inlined_call_operand.vmem [shape: f32[4,4], index: 6, kind: input, shape index: {}]
  %s7 = inlined_call_operand.vmem [shape: f32[1,4], index: 7, kind: input, shape index: {}]
  %s8 = inlined_call_operand.vmem [shape: f32[4,96], index: 8, kind: input, shape index: {}]
  %s9 = inlined_call_operand.vmem [shape: f32[1,96], index: 9, kind: input, shape index: {}]
  %s10 = inlined_call_operand.vmem [shape: f32[16,4], index: 10, kind: output, shape index: {0}]
  %s11 = inlined_call_operand.vmem [shape: f32[16,32], index: 11, kind: output, shape index: {1}]
  %s12 = inlined_call_operand.vmem [shape: f32[16,96], index: 12, kind: output, shape index: {2}]
  %13 = xla_tuple %s10, %s11, %s12
  %s14 = sld [smem:[#allocation0]]
  $region89: #{rin_forward.2} parent=0
    _
  %s16 = ssub.s32 1, %s14
  %s17 = scalar_select 0, %s16, %s14
  loop: start=0, step=1, limit=4
  $region2: #{rin_forward.2} parent=0 // loop_pre_header
    _
  $region3: #{rin_forward.2} parent=0 // loop_header
    %s19 = sphi 0, %s23
    %p20 = scmp.ge.s32.totalorder %s19, 4
    %s29 = sphi 0, %s31
    %s32 = sphi 0, %s29
    %s33 = sphi 0, %s32
    %s49 = sphi 0, %s33
    %s55 = sphi 0, %s57
    %s58 = sphi 0, %s55
    %s59 = sphi 0, %s58
    %s75 = sphi 0, %s59
    %s81 = sphi 0, %s83
    %s84 = sphi 0, %s81
    %s85 = sphi 0, %s84
    %s101 = sphi 0, %s85
    %s107 = sphi 0, %s109
    %s110 = sphi 0, %s107
    %s111 = sphi 0, %s110
    %s127 = sphi 0, %s111
    %s131 = sphi 0, %s131
    %s133 = sphi 0, %s131
    %s134 = sphi 0, %s133
    %s148 = sphi 0, %s134
    %s152 = sphi 0, %s152
    %s154 = sphi 0, %s152
    %s155 = sphi 0, %s154
    %s169 = sphi 0, %s155
    %s173 = sphi 0, %s173
    %s175 = sphi 0, %s173
    %s176 = sphi 0, %s175
    %s190 = sphi 0, %s176
    %s194 = sphi 0, %s194
    %s196 = sphi 0, %s194
    %s197 = sphi 0, %s196
    %s211 = sphi 0, %s197
    %s215 = sphi 0, %s215
    %s217 = sphi 0, %s215
    %s218 = sphi 0, %s217
    %s232 = sphi 0, %s218
    %s236 = sphi 0, %s236
    %s238 = sphi 0, %s236
    %s239 = sphi 0, %s238
    %s253 = sphi 0, %s239
    %s259 = sphi 0, %s261
    %s262 = sphi 0, %s259
    %s263 = sphi 0, %s262
    %s279 = sphi 0, %s263
    %s285 = sphi 0, %s287
    %s288 = sphi 0, %s285
    %s289 = sphi 0, %s288
    %s305 = sphi 0, %s289
    %s311 = sphi 0, %s313
    %s314 = sphi 0, %s311
    %s315 = sphi 0, %s314
    %s331 = sphi 0, %s315
  $region4: #{rin_forward.2} parent=0 // loop_header_branch
    %22 = sbr.rel (%p20) target = $region8
  $region5: #{rin_forward.2} parent=0 // loop_body
    %s24 = ssub.s32 %s19, 1
    %s25 = ssub.s32 %s19, 2
    %s26 = sadd.s32 %s19, 1
    %s27 = ssub.s32 %s19, %s26
    %p28 = scmp.eq.s32.totalorder %s27, 0
    %s30 = sadd.s32 %s29, 1
    %s31 = scalar_select %p28, %s29, %s30
    %p34 = pneg %p28
    %p35 = scmp.eq.s32.totalorder %s19, 1
    %p36 = por %p34, %p35
    %p37 = scmp.ne.s32.totalorder %s29, %s32
    %p38 = scmp.eq.s32.totalorder %s19, 0
    %p39 = por %p37, %p38
    %p40 = scmp.ne.s32.totalorder %s29, %s32
    %p41 = scmp.eq.s32.totalorder %s24, 1
    %p42 = por %p40, %p41
    %p43 = scmp.ne.s32.totalorder %s32, %s33
    %p44 = scmp.eq.s32.totalorder %s24, 0
    %p45 = por %p43, %p44
    %p46 = scmp.ne.s32.totalorder %s32, %s33
    %p47 = scmp.eq.s32.totalorder %s25, 1
    %p48 = por %p46, %p47
    %p50 = scmp.ne.s32.totalorder %s33, %s49
    %p51 = scmp.eq.s32.totalorder %s25, 0
    %p52 = por %p50, %p51
    %s53 = ssub.s32 %s19, %s26
    %p54 = scmp.eq.s32.totalorder %s53, 0
    %s56 = sadd.s32 %s55, 1
    %s57 = scalar_select %p54, %s55, %s56
    %p60 = pneg %p54
    %p61 = scmp.eq.s32.totalorder %s19, 1
    %p62 = por %p60, %p61
    %p63 = scmp.ne.s32.totalorder %s55, %s58
    %p64 = scmp.eq.s32.totalorder %s19, 0
    %p65 = por %p63, %p64
    %p66 = scmp.ne.s32.totalorder %s55, %s58
    %p67 = scmp.eq.s32.totalorder %s24, 1
    %p68 = por %p66, %p67
    %p69 = scmp.ne.s32.totalorder %s58, %s59
    %p70 = scmp.eq.s32.totalorder %s24, 0
    %p71 = por %p69, %p70
    %p72 = scmp.ne.s32.totalorder %s58, %s59
    %p73 = scmp.eq.s32.totalorder %s25, 1
    %p74 = por %p72, %p73
    %p76 = scmp.ne.s32.totalorder %s59, %s75
    %p77 = scmp.eq.s32.totalorder %s25, 0
    %p78 = por %p76, %p77
    %s79 = ssub.s32 %s19, %s26
    %p80 = scmp.eq.s32.totalorder %s79, 0
    %s82 = sadd.s32 %s81, 1
    %s83 = scalar_select %p80, %s81, %s82
    %p86 = pneg %p80
    %p87 = scmp.eq.s32.totalorder %s19, 1
    %p88 = por %p86, %p87
    %p89 = scmp.ne.s32.totalorder %s81, %s84
    %p90 = scmp.eq.s32.totalorder %s19, 0
    %p91 = por %p89, %p90
    %p92 = scmp.ne.s32.totalorder %s81, %s84
    %p93 = scmp.eq.s32.totalorder %s24, 1
    %p94 = por %p92, %p93
    %p95 = scmp.ne.s32.totalorder %s84, %s85
    %p96 = scmp.eq.s32.totalorder %s24, 0
    %p97 = por %p95, %p96
    %p98 = scmp.ne.s32.totalorder %s84, %s85
    %p99 = scmp.eq.s32.totalorder %s25, 1
    %p100 = por %p98, %p99
    %p102 = scmp.ne.s32.totalorder %s85, %s101
    %p103 = scmp.eq.s32.totalorder %s25, 0
    %p104 = por %p102, %p103
    %s105 = ssub.s32 %s19, %s26
    %p106 = scmp.eq.s32.totalorder %s105, 0
    %s108 = sadd.s32 %s107, 1
    %s109 = scalar_select %p106, %s107, %s108
    %p112 = pneg %p106
    %p113 = scmp.eq.s32.totalorder %s19, 1
    %p114 = por %p112, %p113
    %p115 = scmp.ne.s32.totalorder %s107, %s110
    %p116 = scmp.eq.s32.totalorder %s19, 0
    %p117 = por %p115, %p116
    %p118 = scmp.ne.s32.totalorder %s107, %s110
    %p119 = scmp.eq.s32.totalorder %s24, 1
    %p120 = por %p118, %p119
    %p121 = scmp.ne.s32.totalorder %s110, %s111
    %p122 = scmp.eq.s32.totalorder %s24, 0
    %p123 = por %p121, %p122
    %p124 = scmp.ne.s32.totalorder %s110, %s111
    %p125 = scmp.eq.s32.totalorder %s25, 1
    %p126 = por %p124, %p125
    %p128 = scmp.ne.s32.totalorder %s111, %s127
    %p129 = scmp.eq.s32.totalorder %s25, 0
    %p130 = por %p128, %p129
    %s132 = sadd.s32 %s131, 1
    %p135 = scmp.eq.s32.totalorder %s19, 1
    %p136 = scmp.ne.s32.totalorder %s131, %s133
    %p137 = scmp.eq.s32.totalorder %s19, 0
    %p138 = por %p136, %p137
    %p139 = scmp.ne.s32.totalorder %s131, %s133
    %p140 = scmp.eq.s32.totalorder %s24, 1
    %p141 = por %p139, %p140
    %p142 = scmp.ne.s32.totalorder %s133, %s134
    %p143 = scmp.eq.s32.totalorder %s24, 0
    %p144 = por %p142, %p143
    %p145 = scmp.ne.s32.totalorder %s133, %s134
    %p146 = scmp.eq.s32.totalorder %s25, 1
    %p147 = por %p145, %p146
    %p149 = scmp.ne.s32.totalorder %s134, %s148
    %p150 = scmp.eq.s32.totalorder %s25, 0
    %p151 = por %p149, %p150
    %s153 = sadd.s32 %s152, 1
    %p156 = scmp.eq.s32.totalorder %s19, 1
    %p157 = scmp.ne.s32.totalorder %s152, %s154
    %p158 = scmp.eq.s32.totalorder %s19, 0
    %p159 = por %p157, %p158
    %p160 = scmp.ne.s32.totalorder %s152, %s154
    %p161 = scmp.eq.s32.totalorder %s24, 1
    %p162 = por %p160, %p161
    %p163 = scmp.ne.s32.totalorder %s154, %s155
    %p164 = scmp.eq.s32.totalorder %s24, 0
    %p165 = por %p163, %p164
    %p166 = scmp.ne.s32.totalorder %s154, %s155
    %p167 = scmp.eq.s32.totalorder %s25, 1
    %p168 = por %p166, %p167
    %p170 = scmp.ne.s32.totalorder %s155, %s169
    %p171 = scmp.eq.s32.totalorder %s25, 0
    %p172 = por %p170, %p171
    %s174 = sadd.s32 %s173, 1
    %p177 = scmp.eq.s32.totalorder %s19, 1
    %p178 = scmp.ne.s32.totalorder %s173, %s175
    %p179 = scmp.eq.s32.totalorder %s19, 0
    %p180 = por %p178, %p179
    %p181 = scmp.ne.s32.totalorder %s173, %s175
    %p182 = scmp.eq.s32.totalorder %s24, 1
    %p183 = por %p181, %p182
    %p184 = scmp.ne.s32.totalorder %s175, %s176
    %p185 = scmp.eq.s32.totalorder %s24, 0
    %p186 = por %p184, %p185
    %p187 = scmp.ne.s32.totalorder %s175, %s176
    %p188 = scmp.eq.s32.totalorder %s25, 1
    %p189 = por %p187, %p188
    %p191 = scmp.ne.s32.totalorder %s176, %s190
    %p192 = scmp.eq.s32.totalorder %s25, 0
    %p193 = por %p191, %p192
    %s195 = sadd.s32 %s194, 1
    %p198 = scmp.eq.s32.totalorder %s19, 1
    %p199 = scmp.ne.s32.totalorder %s194, %s196
    %p200 = scmp.eq.s32.totalorder %s19, 0
    %p201 = por %p199, %p200
    %p202 = scmp.ne.s32.totalorder %s194, %s196
    %p203 = scmp.eq.s32.totalorder %s24, 1
    %p204 = por %p202, %p203
    %p205 = scmp.ne.s32.totalorder %s196, %s197
    %p206 = scmp.eq.s32.totalorder %s24, 0
    %p207 = por %p205, %p206
    %p208 = scmp.ne.s32.totalorder %s196, %s197
    %p209 = scmp.eq.s32.totalorder %s25, 1
    %p210 = por %p208, %p209
    %p212 = scmp.ne.s32.totalorder %s197, %s211
    %p213 = scmp.eq.s32.totalorder %s25, 0
    %p214 = por %p212, %p213
    %s216 = sadd.s32 %s215, 1
    %p219 = scmp.eq.s32.totalorder %s19, 1
    %p220 = scmp.ne.s32.totalorder %s215, %s217
    %p221 = scmp.eq.s32.totalorder %s19, 0
    %p222 = por %p220, %p221
    %p223 = scmp.ne.s32.totalorder %s215, %s217
    %p224 = scmp.eq.s32.totalorder %s24, 1
    %p225 = por %p223, %p224
    %p226 = scmp.ne.s32.totalorder %s217, %s218
    %p227 = scmp.eq.s32.totalorder %s24, 0
    %p228 = por %p226, %p227
    %p229 = scmp.ne.s32.totalorder %s217, %s218
    %p230 = scmp.eq.s32.totalorder %s25, 1
    %p231 = por %p229, %p230
    %p233 = scmp.ne.s32.totalorder %s218, %s232
    %p234 = scmp.eq.s32.totalorder %s25, 0
    %p235 = por %p233, %p234
    %s237 = sadd.s32 %s236, 1
    %p240 = scmp.eq.s32.totalorder %s19, 1
    %p241 = scmp.ne.s32.totalorder %s236, %s238
    %p242 = scmp.eq.s32.totalorder %s19, 0
    %p243 = por %p241, %p242
    %p244 = scmp.ne.s32.totalorder %s236, %s238
    %p245 = scmp.eq.s32.totalorder %s24, 1
    %p246 = por %p244, %p245
    %p247 = scmp.ne.s32.totalorder %s238, %s239
    %p248 = scmp.eq.s32.totalorder %s24, 0
    %p249 = por %p247, %p248
    %p250 = scmp.ne.s32.totalorder %s238, %s239
    %p251 = scmp.eq.s32.totalorder %s25, 1
    %p252 = por %p250, %p251
    %p254 = scmp.ne.s32.totalorder %s239, %s253
    %p255 = scmp.eq.s32.totalorder %s25, 0
    %p256 = por %p254, %p255
    %s257 = ssub.s32 %s19, %s26
    %p258 = scmp.eq.s32.totalorder %s257, 0
    %s260 = sadd.s32 %s259, 1
    %s261 = scalar_select %p258, %s259, %s260
    %p264 = pneg %p258
    %p265 = scmp.eq.s32.totalorder %s19, 1
    %p266 = por %p264, %p265
    %p267 = scmp.ne.s32.totalorder %s259, %s262
    %p268 = scmp.eq.s32.totalorder %s19, 0
    %p269 = por %p267, %p268
    %p270 = scmp.ne.s32.totalorder %s259, %s262
    %p271 = scmp.eq.s32.totalorder %s24, 1
    %p272 = por %p270, %p271
    %p273 = scmp.ne.s32.totalorder %s262, %s263
    %p274 = scmp.eq.s32.totalorder %s24, 0
    %p275 = por %p273, %p274
    %p276 = scmp.ne.s32.totalorder %s262, %s263
    %p277 = scmp.eq.s32.totalorder %s25, 1
    %p278 = por %p276, %p277
    %p280 = scmp.ne.s32.totalorder %s263, %s279
    %p281 = scmp.eq.s32.totalorder %s25, 0
    %p282 = por %p280, %p281
    %s283 = ssub.s32 %s19, %s26
    %p284 = scmp.eq.s32.totalorder %s283, 0
    %s286 = sadd.s32 %s285, 1
    %s287 = scalar_select %p284, %s285, %s286
    %p290 = pneg %p284
    %p291 = scmp.eq.s32.totalorder %s19, 1
    %p292 = por %p290, %p291
    %p293 = scmp.ne.s32.totalorder %s285, %s288
    %p294 = scmp.eq.s32.totalorder %s19, 0
    %p295 = por %p293, %p294
    %p296 = scmp.ne.s32.totalorder %s285, %s288
    %p297 = scmp.eq.s32.totalorder %s24, 1
    %p298 = por %p296, %p297
    %p299 = scmp.ne.s32.totalorder %s288, %s289
    %p300 = scmp.eq.s32.totalorder %s24, 0
    %p301 = por %p299, %p300
    %p302 = scmp.ne.s32.totalorder %s288, %s289
    %p303 = scmp.eq.s32.totalorder %s25, 1
    %p304 = por %p302, %p303
    %p306 = scmp.ne.s32.totalorder %s289, %s305
    %p307 = scmp.eq.s32.totalorder %s25, 0
    %p308 = por %p306, %p307
    %s309 = ssub.s32 %s19, %s26
    %p310 = scmp.eq.s32.totalorder %s309, 0
    %s312 = sadd.s32 %s311, 1
    %s313 = scalar_select %p310, %s311, %s312
    %p316 = pneg %p310
    %p317 = scmp.eq.s32.totalorder %s19, 1
    %p318 = por %p316, %p317
    %p319 = scmp.ne.s32.totalorder %s311, %s314
    %p320 = scmp.eq.s32.totalorder %s19, 0
    %p321 = por %p319, %p320
    %p322 = scmp.ne.s32.totalorder %s311, %s314
    %p323 = scmp.eq.s32.totalorder %s24, 1
    %p324 = por %p322, %p323
    %p325 = scmp.ne.s32.totalorder %s314, %s315
    %p326 = scmp.eq.s32.totalorder %s24, 0
    %p327 = por %p325, %p326
    %p328 = scmp.ne.s32.totalorder %s314, %s315
    %p329 = scmp.eq.s32.totalorder %s25, 1
    %p330 = por %p328, %p329
    %p332 = scmp.ne.s32.totalorder %s315, %s331
    %p333 = scmp.eq.s32.totalorder %s25, 0
    %p334 = por %p332, %p333
    %p335 = scmp.le.s32.totalorder 1, %s19
    %p336 = scmp.lt.s32.totalorder %s19, 3
    %p337 = pnand %p335, %p336
    %p338 = pneg %p337
    // Predicated region
    $region9: #{rin_forward.2} parent=5 // pred_check
      _
    $region10: #{rin_forward.2} parent=5 // pred_check_branch
      %340 = sbr.rel (%p337) target = $region12
    $region11: #{rin_forward.2} parent=5 // pred_region
      %s341 = ssub.s32 %s19, 1
      // Predicated region
      $region13: #{rin_forward.2} parent=11 // pred_check
        %p342 = pneg %p144
      $region14: #{rin_forward.2} parent=11 // pred_check_branch
        %344 = sbr.rel (%p342) target = $region16
      $region15: #{rin_forward.2} parent=11 // pred_region
        _
      $region16: #{rin_forward.2} parent=11 // pred_fallthru
        _
      // Predicated region
      $region17: #{rin_forward.2} parent=11 // pred_check
        %p345 = pneg %p165
      $region18: #{rin_forward.2} parent=11 // pred_check_branch
        %347 = sbr.rel (%p345) target = $region20
      $region19: #{rin_forward.2} parent=11 // pred_region
        _
      $region20: #{rin_forward.2} parent=11 // pred_fallthru
        _
      // Predicated region
      $region21: #{rin_forward.2} parent=11 // pred_check
        %p348 = pneg %p186
      $region22: #{rin_forward.2} parent=11 // pred_check_branch
        %350 = sbr.rel (%p348) target = $region24
      $region23: #{rin_forward.2} parent=11 // pred_region
        _
      $region24: #{rin_forward.2} parent=11 // pred_fallthru
        _
      // Predicated region
      $region25: #{rin_forward.2} parent=11 // pred_check
        %p351 = pneg %p207
      $region26: #{rin_forward.2} parent=11 // pred_check_branch
        %353 = sbr.rel (%p351) target = $region28
      $region27: #{rin_forward.2} parent=11 // pred_region
        _
      $region28: #{rin_forward.2} parent=11 // pred_fallthru
        _
      // Predicated region
      $region29: #{rin_forward.2} parent=11 // pred_check
        %p354 = pneg %p228
      $region30: #{rin_forward.2} parent=11 // pred_check_branch
        %356 = sbr.rel (%p354) target = $region32
      $region31: #{rin_forward.2} parent=11 // pred_region
        _
      $region32: #{rin_forward.2} parent=11 // pred_fallthru
        _
      // Predicated region
      $region33: #{rin_forward.2} parent=11 // pred_check
        %p357 = pneg %p249
      $region34: #{rin_forward.2} parent=11 // pred_check_branch
        %359 = sbr.rel (%p357) target = $region36
      $region35: #{rin_forward.2} parent=11 // pred_region
        _
      $region36: #{rin_forward.2} parent=11 // pred_fallthru
        _
    $region12: #{rin_forward.2} parent=5 // pred_fallthru
      _
    %p360 = scmp.lt.s32.totalorder %s19, 2
    // Predicated region
    $region37: #{rin_forward.2} parent=5 // pred_check
      %p361 = pneg %p360
    $region38: #{rin_forward.2} parent=5 // pred_check_branch
      %363 = sbr.rel (%p361) target = $region40
    $region39: #{rin_forward.2} parent=5 // pred_region
      // Predicated region
      $region41: #{rin_forward.2} parent=39 // pred_check
        %p364 = pneg %p39
      $region42: #{rin_forward.2} parent=39 // pred_check_branch
        %366 = sbr.rel (%p364) target = $region44
      $region43: #{rin_forward.2} parent=39 // pred_region
        %p367 = scmp.lt.s32.totalorder %s19, 1
        %s368 = scalar_select %p367, %s19, 1
        %s369 = smul.addr %s368, 8
        %s370 = scalar_lea.vmem %s0, %s369
      $region44: #{rin_forward.2} parent=39 // pred_fallthru
        _
      // Predicated region
      $region45: #{rin_forward.2} parent=39 // pred_check
        %p371 = pneg %p65
      $region46: #{rin_forward.2} parent=39 // pred_check_branch
        %373 = sbr.rel (%p371) target = $region48
      $region47: #{rin_forward.2} parent=39 // pred_region
        %p374 = scmp.lt.s32.totalorder %s19, 1
        %s375 = scalar_select %p374, %s19, 1
        %s376 = smul.addr %s375, 8
        %s377 = scalar_lea.vmem %s1, %s376
      $region48: #{rin_forward.2} parent=39 // pred_fallthru
        _
      // Predicated region
      $region49: #{rin_forward.2} parent=39 // pred_check
        %p378 = pneg %p91
      $region50: #{rin_forward.2} parent=39 // pred_check_branch
        %380 = sbr.rel (%p378) target = $region52
      $region51: #{rin_forward.2} parent=39 // pred_region
        %p381 = scmp.lt.s32.totalorder %s19, 1
        %s382 = scalar_select %p381, %s19, 1
        %s383 = smul.addr %s382, 8
        %s384 = scalar_lea.vmem %s2, %s383
      $region52: #{rin_forward.2} parent=39 // pred_fallthru
        _
      // Predicated region
      $region53: #{rin_forward.2} parent=39 // pred_check
        %p385 = pneg %p117
      $region54: #{rin_forward.2} parent=39 // pred_check_branch
        %387 = sbr.rel (%p385) target = $region56
      $region55: #{rin_forward.2} parent=39 // pred_region
        %p388 = scmp.lt.s32.totalorder %s19, 1
        %s389 = scalar_select %p388, %s19, 1
        %s390 = smul.addr %s389, 8
        %s391 = scalar_lea.vmem %s3, %s390
      $region56: #{rin_forward.2} parent=39 // pred_fallthru
        _
    $region40: #{rin_forward.2} parent=5 // pred_fallthru
      _
    %p392 = scmp.le.s32.totalorder 1, %s19
    %p393 = scmp.lt.s32.totalorder %s19, 3
    %p394 = pnand %p392, %p393
    %p395 = pneg %p394
    // Predicated region
    $region57: #{rin_forward.2} parent=5 // pred_check
      _
    $region58: #{rin_forward.2} parent=5 // pred_check_branch
      %397 = sbr.rel (%p394) target = $region60
    $region59: #{rin_forward.2} parent=5 // pred_region
      %s398 = ssub.s32 %s19, 1
      %p399 = scmp.lt.s32.totalorder %s24, 1
      %s400 = scalar_select %p399, %s24, 1
      %s401 = smul.addr %s400, 8
      %s402 = scalar_lea.vmem %s0, %s401
      %p403 = pneg %p45
      %p404 = pneg %p42
      %p405 = scmp.lt.s32.totalorder %s24, 1
      %s406 = scalar_select %p405, %s24, 1
      %s407 = smul.addr %s406, 8
      %s408 = scalar_lea.vmem %s1, %s407
      %p409 = pneg %p71
      %p410 = pneg %p68
      %p411 = scmp.lt.s32.totalorder %s24, 1
      %s412 = scalar_select %p411, %s24, 1
      %s413 = smul.addr %s412, 8
      %s414 = scalar_lea.vmem %s2, %s413
      %p415 = pneg %p97
      %p416 = pneg %p94
      %p417 = scmp.lt.s32.totalorder %s24, 1
      %s418 = scalar_select %p417, %s24, 1
      %s419 = smul.addr %s418, 8
      %s420 = scalar_lea.vmem %s3, %s419
      %p421 = pneg %p123
      %p422 = pneg %p120
      %p423 = pneg %p144
      %p424 = pneg %p141
      %p425 = pneg %p165
      %p426 = pneg %p162
      %p427 = pneg %p186
      %p428 = pneg %p183
      %p429 = pneg %p207
      %p430 = pneg %p204
      %p431 = pneg %p228
      %p432 = pneg %p225
      %p433 = pneg %p249
      %p434 = pneg %p246
      %p435 = pneg %p275
      %p436 = pneg %p272
      %p437 = scmp.lt.s32.totalorder %s24, 1
      %s438 = scalar_select %p437, %s24, 1
      %s439 = smul.addr %s438, 8
      %s440 = scalar_lea.vmem %s10, %s439
      %p441 = pneg %p301
      %p442 = pneg %p298
      %p443 = scmp.lt.s32.totalorder %s24, 1
      %s444 = scalar_select %p443, %s24, 1
      %s445 = smul.addr %s444, 8
      %s446 = scalar_lea.vmem %s11, %s445
      %p447 = pneg %p327
      %p448 = pneg %p324
      %p449 = scmp.lt.s32.totalorder %s24, 1
      %s450 = scalar_select %p449, %s24, 1
      %s451 = smul.addr %s450, 8
      %s452 = scalar_lea.vmem %s12, %s451
      %p453 = scmp.lt.s32.totalorder %s24, 1
      %s454 = scalar_select %p453, %s24, 1
      %s455 = smul.addr %s454, 8
      %s456 = scalar_lea.vmem %s0, %s455
      %p457 = scmp.lt.s32.totalorder %s24, 1
      %s458 = scalar_select %p457, %s24, 1
      %s459 = smul.addr %s458, 8
      %s460 = scalar_lea.vmem %s1, %s459
      %p461 = scmp.lt.s32.totalorder %s24, 1
      %s462 = scalar_select %p461, %s24, 1
      %s463 = smul.addr %s462, 8
      %s464 = scalar_lea.vmem %s2, %s463
      %p465 = scmp.lt.s32.totalorder %s24, 1
      %s466 = scalar_select %p465, %s24, 1
      %s467 = smul.addr %s466, 8
      %s468 = scalar_lea.vmem %s3, %s467
      %p469 = scmp.lt.s32.totalorder %s24, 1
      %s470 = scalar_select %p469, %s24, 1
      %s471 = smul.addr %s470, 8
      %s472 = scalar_lea.vmem %s10, %s471
      %p473 = scmp.lt.s32.totalorder %s24, 1
      %s474 = scalar_select %p473, %s24, 1
      %s475 = smul.addr %s474, 8
      %s476 = scalar_lea.vmem %s11, %s475
      %p477 = scmp.lt.s32.totalorder %s24, 1
      %s478 = scalar_select %p477, %s24, 1
      %s479 = smul.addr %s478, 8
      %s480 = scalar_lea.vmem %s12, %s479
      %v481 = vld [vmem:[%s456] sm:$0xff]
      %v482 = vld [vmem:[%s460] sm:$0xff]
      %v483 = vld [vmem:[%s464] sm:$0xff]
      %v484 = vld [vmem:[%s468] sm:$0xff]
      %v485 = vld [vmem:[%s4] sm:$0xf]
      %v486 = vld [vmem:[%s5] sm:$0x1]
      %v488 = vlaneseq
      %v489 = vshrl.u32 %v488, 7
      %v490 = vsub.s32 0, %v489
      %v491 = vrot.slane %v486, %v490
      %vm493 = vcmask 31744
      %v495 = vsel %vm493, %v484, 0
      %vm497 = vcmask 1043456
      %v499 = vsel %vm497, %v485, 0
      %501 = vmatprep.subr.mxu0 0.0
      %502 = vmatpush1.msra.mxu0 0.0
      %503 = vmatprep.subr.mxu0 0.0
      %504 = vmatpush1.msra.mxu0 0.0
      %505 = vmatprep.subr.mxu0 0.0
      %506 = vmatpush1.msra.mxu0 0.0
      %507 = vmatprep.subr.mxu0 0.0
      %508 = vmatpush1.msra.mxu0 0.0
      %509 = vmatprep.subr.mxu0 0.0
      %510 = vmatpush1.msra.mxu0 0.0
      %511 = vmatprep.subr.mxu0 0.0
      %512 = vmatpush1.msra.mxu0 0.0
      %513 = vmatprep.subr.mxu0 0.0
      %514 = vmatpush1.msra.mxu0 0.0
      %515 = vmatprep.subr.mxu0 0.0
      %516 = vmatpush1.msra.mxu0 0.0
      %517 = vmatprep.subr.mxu0 0.0
      %518 = vmatpush1.msra.mxu0 0.0
      %519 = vmatprep.subr.mxu0 0.0
      %520 = vmatpush1.msra.mxu0 0.0
      %521 = vmatprep.subr.mxu0 0.0
      %522 = vmatpush1.msra.mxu0 0.0
      %523 = vmatprep.subr.mxu0 0.0
      %524 = vmatpush1.msra.mxu0 0.0
      %525 = vmatprep.subr.mxu0 0.0
      %526 = vmatpush1.msra.mxu0 0.0
      %527 = vmatprep.subr.mxu0 0.0
      %528 = vmatpush1.msra.mxu0 0.0
      %529 = vmatprep.subr.mxu0 0.0
      %530 = vmatpush1.msra.mxu0 0.0
      %531 = vmatprep.subr.mxu0 0.0
      %532 = vmatpush1.msra.mxu0 %v499
      %533 = vmatprep.subr.mxu0 0.0
      %534 = vmatpush2.msra.mxu0 0.0
      %535 = vmatprep.subr.mxu0 0.0
      %536 = vmatpush2.msra.mxu0 0.0
      %537 = vmatprep.subr.mxu0 0.0
      %538 = vmatpush2.msra.mxu0 0.0
      %539 = vmatprep.subr.mxu0 0.0
      %540 = vmatpush2.msra.mxu0 0.0
      %541 = vmatprep.subr.mxu0 0.0
      %542 = vmatpush2.msra.mxu0 0.0
      %543 = vmatprep.subr.mxu0 0.0
      %544 = vmatpush2.msra.mxu0 0.0
      %545 = vmatprep.subr.mxu0 0.0
      %546 = vmatpush2.msra.mxu0 0.0
      %547 = vmatprep.subr.mxu0 0.0
      %548 = vmatpush2.msra.mxu0 0.0
      %549 = vmatprep.subr.mxu0 0.0
      %550 = vmatpush2.msra.mxu0 0.0
      %551 = vmatprep.subr.mxu0 0.0
      %552 = vmatpush2.msra.mxu0 0.0
      %553 = vmatprep.subr.mxu0 0.0
      %554 = vmatpush2.msra.mxu0 0.0
      %555 = vmatprep.subr.mxu0 0.0
      %556 = vmatpush2.msra.mxu0 0.0
      %557 = vmatprep.subr.mxu0 0.0
      %558 = vmatpush2.msra.mxu0 0.0
      %559 = vmatprep.subr.mxu0 0.0
      %560 = vmatpush2.msra.mxu0 0.0
      %561 = vmatprep.subr.mxu0 0.0
      %562 = vmatpush2.msra.mxu0 0.0
      %563 = vmatprep.subr.mxu0 0.0
      %564 = vmatpush2.msra.mxu0 0.0
      %565 = vmatprep.mubr.f32.mxu0 0.0
      %566 = vmatmul.mubr.f32.gmra.mxu0 %v495
      %v567 = vpop.f32.mrf.mxu0
      %v568 = vadd.f32 %v491, %v567
      %v569 = vpop.f32.mrf.mxu0
      %570 = vdwg.mxu0
      %v571 = vmax.f32 %v568, 0.0
      %v572 = vsub.f32 0.0, %v571
      %v573 = vmul.f32 %v572, 1.442695
      %v574 = vpow.pop %v573
      %vm575 = vcmask 261120
      %576 = vst.msk [vmem:[%s476] sm:$0xff] %vm575, %v574
      %v577 = vmul.f32 %v483, %v481
      %v578 = vsub.f32 1.0, %v483
      %v579 = vmul.f32 %v578, %v482
      %v580 = vadd.f32 %v577, %v579
      %v581 = vld [vmem:[%s6] sm:$0xf]
      %v582 = vld [vmem:[%s7] sm:$0x1]
      %v584 = vlaneseq
      %v585 = vshrl.u32 %v584, 7
      %v586 = vsub.s32 0, %v585
      %v587 = vrot.slane %v582, %v586
      %v590 = vsel %vm493, %v580, 0
      %v593 = vsel %vm497, %v581, 0
      %595 = vmatprep.subr.mxu0 0.0
      %596 = vmatpush1.msra.mxu0 0.0
      %597 = vmatprep.subr.mxu0 0.0
      %598 = vmatpush1.msra.mxu0 0.0
      %599 = vmatprep.subr.mxu0 0.0
      %600 = vmatpush1.msra.mxu0 0.0
      %601 = vmatprep.subr.mxu0 0.0
      %602 = vmatpush1.msra.mxu0 0.0
      %603 = vmatprep.subr.mxu0 0.0
      %604 = vmatpush1.msra.mxu0 0.0
      %605 = vmatprep.subr.mxu0 0.0
      %606 = vmatpush1.msra.mxu0 0.0
      %607 = vmatprep.subr.mxu0 0.0
      %608 = vmatpush1.msra.mxu0 0.0
      %609 = vmatprep.subr.mxu0 0.0
      %610 = vmatpush1.msra.mxu0 0.0
      %611 = vmatprep.subr.mxu0 0.0
      %612 = vmatpush1.msra.mxu0 0.0
      %613 = vmatprep.subr.mxu0 0.0
      %614 = vmatpush1.msra.mxu0 0.0
      %615 = vmatprep.subr.mxu0 0.0
      %616 = vmatpush1.msra.mxu0 0.0
      %617 = vmatprep.subr.mxu0 0.0
      %618 = vmatpush1.msra.mxu0 0.0
      %619 = vmatprep.subr.mxu0 0.0
      %620 = vmatpush1.msra.mxu0 0.0
      %621 = vmatprep.subr.mxu0 0.0
      %622 = vmatpush1.msra.mxu0 0.0
      %623 = vmatprep.subr.mxu0 0.0
      %624 = vmatpush1.msra.mxu0 0.0
      %625 = vmatprep.subr.mxu0 0.0
      %626 = vmatpush1.msra.mxu0 %v593
      %627 = vmatprep.subr.mxu0 0.0
      %628 = vmatpush2.msra.mxu0 0.0
      %629 = vmatprep.subr.mxu0 0.0
      %630 = vmatpush2.msra.mxu0 0.0
      %631 = vmatprep.subr.mxu0 0.0
      %632 = vmatpush2.msra.mxu0 0.0
      %633 = vmatprep.subr.mxu0 0.0
      %634 = vmatpush2.msra.mxu0 0.0
      %635 = vmatprep.subr.mxu0 0.0
      %636 = vmatpush2.msra.mxu0 0.0
      %637 = vmatprep.subr.mxu0 0.0
      %638 = vmatpush2.msra.mxu0 0.0
      %639 = vmatprep.subr.mxu0 0.0
      %640 = vmatpush2.msra.mxu0 0.0
      %641 = vmatprep.subr.mxu0 0.0
      %642 = vmatpush2.msra.mxu0 0.0
      %643 = vmatprep.subr.mxu0 0.0
      %644 = vmatpush2.msra.mxu0 0.0
      %645 = vmatprep.subr.mxu0 0.0
      %646 = vmatpush2.msra.mxu0 0.0
      %647 = vmatprep.subr.mxu0 0.0
      %648 = vmatpush2.msra.mxu0 0.0
      %649 = vmatprep.subr.mxu0 0.0
      %650 = vmatpush2.msra.mxu0 0.0
      %651 = vmatprep.subr.mxu0 0.0
      %652 = vmatpush2.msra.mxu0 0.0
      %653 = vmatprep.subr.mxu0 0.0
      %654 = vmatpush2.msra.mxu0 0.0
      %655 = vmatprep.subr.mxu0 0.0
      %656 = vmatpush2.msra.mxu0 0.0
      %657 = vmatprep.subr.mxu0 0.0
      %658 = vmatpush2.msra.mxu0 0.0
      %659 = vmatprep.mubr.f32.mxu0 0.0
      %660 = vmatmul.mubr.f32.gmra.mxu0 %v590
      %v661 = vpop.f32.mrf.mxu0
      %v662 = vadd.f32 %v587, %v661
      %v663 = vpop.f32.mrf.mxu0
      %664 = vdwg.mxu0
      %665 = vst.msk [vmem:[%s472] sm:$0xff] %vm493, %v662
      %v666 = vld [vmem:[%s8] sm:$0xf]
      %v667 = vld [vmem:[%s9] sm:$0x1]
      %v669 = vlaneseq
      %v670 = vshrl.u32 %v669, 7
      %v671 = vsub.s32 0, %v670
      %v672 = vrot.slane %v667, %v671
      %v675 = vsel %vm493, %v483, 0
      %v678 = vsel %vm497, %v666, 0
      %680 = vmatprep.subr.mxu0 0.0
      %681 = vmatpush1.msra.mxu0 0.0
      %682 = vmatprep.subr.mxu0 0.0
      %683 = vmatpush1.msra.mxu0 0.0
      %684 = vmatprep.subr.mxu0 0.0
      %685 = vmatpush1.msra.mxu0 0.0
      %686 = vmatprep.subr.mxu0 0.0
      %687 = vmatpush1.msra.mxu0 0.0
      %688 = vmatprep.subr.mxu0 0.0
      %689 = vmatpush1.msra.mxu0 0.0
      %690 = vmatprep.subr.mxu0 0.0
      %691 = vmatpush1.msra.mxu0 0.0
      %692 = vmatprep.subr.mxu0 0.0
      %693 = vmatpush1.msra.mxu0 0.0
      %694 = vmatprep.subr.mxu0 0.0
      %695 = vmatpush1.msra.mxu0 0.0
      %696 = vmatprep.subr.mxu0 0.0
      %697 = vmatpush1.msra.mxu0 0.0
      %698 = vmatprep.subr.mxu0 0.0
      %699 = vmatpush1.msra.mxu0 0.0
      %700 = vmatprep.subr.mxu0 0.0
      %701 = vmatpush1.msra.mxu0 0.0
      %702 = vmatprep.subr.mxu0 0.0
      %703 = vmatpush1.msra.mxu0 0.0
      %704 = vmatprep.subr.mxu0 0.0
      %705 = vmatpush1.msra.mxu0 0.0
      %706 = vmatprep.subr.mxu0 0.0
      %707 = vmatpush1.msra.mxu0 0.0
      %708 = vmatprep.subr.mxu0 0.0
      %709 = vmatpush1.msra.mxu0 0.0
      %710 = vmatprep.subr.mxu0 0.0
      %711 = vmatpush1.msra.mxu0 %v678
      %712 = vmatprep.subr.mxu0 0.0
      %713 = vmatpush2.msra.mxu0 0.0
      %714 = vmatprep.subr.mxu0 0.0
      %715 = vmatpush2.msra.mxu0 0.0
      %716 = vmatprep.subr.mxu0 0.0
      %717 = vmatpush2.msra.mxu0 0.0
      %718 = vmatprep.subr.mxu0 0.0
      %719 = vmatpush2.msra.mxu0 0.0
      %720 = vmatprep.subr.mxu0 0.0
      %721 = vmatpush2.msra.mxu0 0.0
      %722 = vmatprep.subr.mxu0 0.0
      %723 = vmatpush2.msra.mxu0 0.0
      %724 = vmatprep.subr.mxu0 0.0
      %725 = vmatpush2.msra.mxu0 0.0
      %726 = vmatprep.subr.mxu0 0.0
      %727 = vmatpush2.msra.mxu0 0.0
      %728 = vmatprep.subr.mxu0 0.0
      %729 = vmatpush2.msra.mxu0 0.0
      %730 = vmatprep.subr.mxu0 0.0
      %731 = vmatpush2.msra.mxu0 0.0
      %732 = vmatprep.subr.mxu0 0.0
      %733 = vmatpush2.msra.mxu0 0.0
      %734 = vmatprep.subr.mxu0 0.0
      %735 = vmatpush2.msra.mxu0 0.0
      %736 = vmatprep.subr.mxu0 0.0
      %737 = vmatpush2.msra.mxu0 0.0
      %738 = vmatprep.subr.mxu0 0.0
      %739 = vmatpush2.msra.mxu0 0.0
      %740 = vmatprep.subr.mxu0 0.0
      %741 = vmatpush2.msra.mxu0 0.0
      %742 = vmatprep.subr.mxu0 0.0
      %743 = vmatpush2.msra.mxu0 0.0
      %744 = vmatprep.mubr.f32.mxu0 0.0
      %745 = vmatmul.mubr.f32.gmra.mxu0 %v675
      %v746 = vpop.f32.mrf.mxu0
      %v747 = vadd.f32 %v672, %v746
      %v748 = vpop.f32.mrf.mxu0
      %749 = vdwg.mxu0
      %vm750 = vcmask 785408
      %751 = vst.msk [vmem:[%s480] sm:$0xff] %vm750, %v747
      %p752 = scmp.lt.s32.totalorder %s24, 1
      %s753 = scalar_select %p752, %s24, 1
      %s754 = smul.addr %s753, 8
      %s755 = scalar_lea.vmem %s10, %s754
      %p756 = scmp.lt.s32.totalorder %s24, 1
      %s757 = scalar_select %p756, %s24, 1
      %s758 = smul.addr %s757, 8
      %s759 = scalar_lea.vmem %s11, %s758
      %p760 = scmp.lt.s32.totalorder %s24, 1
      %s761 = scalar_select %p760, %s24, 1
      %s762 = smul.addr %s761, 8
      %s763 = scalar_lea.vmem %s12, %s762
      // Predicated region
      $region61: #{rin_forward.2} parent=59 // pred_check
        %p764 = pneg %p272
      $region62: #{rin_forward.2} parent=59 // pred_check_branch
        %766 = sbr.rel (%p764) target = $region64
      $region63: #{rin_forward.2} parent=59 // pred_region
        _
      $region64: #{rin_forward.2} parent=59 // pred_fallthru
        _
      // Predicated region
      $region65: #{rin_forward.2} parent=59 // pred_check
        %p767 = pneg %p298
      $region66: #{rin_forward.2} parent=59 // pred_check_branch
        %769 = sbr.rel (%p767) target = $region68
      $region67: #{rin_forward.2} parent=59 // pred_region
        _
      $region68: #{rin_forward.2} parent=59 // pred_fallthru
        _
      // Predicated region
      $region69: #{rin_forward.2} parent=59 // pred_check
        %p770 = pneg %p324
      $region70: #{rin_forward.2} parent=59 // pred_check_branch
        %772 = sbr.rel (%p770) target = $region72
      $region71: #{rin_forward.2} parent=59 // pred_region
        _
      $region72: #{rin_forward.2} parent=59 // pred_fallthru
        _
    $region60: #{rin_forward.2} parent=5 // pred_fallthru
      _
    %p773 = scmp.le.s32.totalorder 2, %s19
    // Predicated region
    $region73: #{rin_forward.2} parent=5 // pred_check
      %p774 = pneg %p773
    $region74: #{rin_forward.2} parent=5 // pred_check_branch
      %776 = sbr.rel (%p774) target = $region76
    $region75: #{rin_forward.2} parent=5 // pred_region
      %s777 = ssub.s32 %s19, 2
      // Predicated region
      $region77: #{rin_forward.2} parent=75 // pred_check
        %p778 = pneg %p278
      $region78: #{rin_forward.2} parent=75 // pred_check_branch
        %780 = sbr.rel (%p778) target = $region80
      $region79: #{rin_forward.2} parent=75 // pred_region
        %p781 = scmp.lt.s32.totalorder %s25, 1
        %s782 = scalar_select %p781, %s25, 1
        %s783 = smul.addr %s782, 8
        %s784 = scalar_lea.vmem %s10, %s783
      $region80: #{rin_forward.2} parent=75 // pred_fallthru
        _
      // Predicated region
      $region81: #{rin_forward.2} parent=75 // pred_check
        %p785 = pneg %p304
      $region82: #{rin_forward.2} parent=75 // pred_check_branch
        %787 = sbr.rel (%p785) target = $region84
      $region83: #{rin_forward.2} parent=75 // pred_region
        %p788 = scmp.lt.s32.totalorder %s25, 1
        %s789 = scalar_select %p788, %s25, 1
        %s790 = smul.addr %s789, 8
        %s791 = scalar_lea.vmem %s11, %s790
      $region84: #{rin_forward.2} parent=75 // pred_fallthru
        _
      // Predicated region
      $region85: #{rin_forward.2} parent=75 // pred_check
        %p792 = pneg %p330
      $region86: #{rin_forward.2} parent=75 // pred_check_branch
        %794 = sbr.rel (%p792) target = $region88
      $region87: #{rin_forward.2} parent=75 // pred_region
        %p795 = scmp.lt.s32.totalorder %s25, 1
        %s796 = scalar_select %p795, %s25, 1
        %s797 = smul.addr %s796, 8
        %s798 = scalar_lea.vmem %s12, %s797
      $region88: #{rin_forward.2} parent=75 // pred_fallthru
        _
    $region76: #{rin_forward.2} parent=5 // pred_fallthru
      _
  $region6: #{rin_forward.2} parent=0 // loop_footer
    %s23 = sadd.s32 1, %s19
  $region7: #{rin_forward.2} parent=0 // loop_footer_branch
    %18 = sbr.rel target = $region3
  $region8: #{rin_forward.2} parent=0 // loop_exit
    _

// kernel: rin_forward.3
$region0: #{rin_forward.3}
  #allocation0 [shape = 'u32[]', space=smem, size = 0x4, offset = 0x4, fixed_abs, tag = 'smem constant byte address 0x4 - core index']
  #allocation1 [shape = 'u32[144,128]{1,0:T(1,128)}', space=vmem, size = 0x12000, scoped, tag = 'internal scratch']
  #allocation2 [shape = 'f32[1,32]{1,0:T(1,128)}', space=vmem, size = 0x200, scoped, tag = 'scratch operand']
  %s0 = inlined_call_operand.vmem [shape: f32[2,8,4], index: 0, kind: input, shape index: {}]
  %s1 = inlined_call_operand.vmem [shape: f32[2,8,4], index: 1, kind: input, shape index: {}]
  %s2 = inlined_call_operand.vmem [shape: f32[2,8,4], index: 2, kind: input, shape index: {}]
  %s3 = inlined_call_operand.vmem [shape: f32[2,8,32], index: 3, kind: input, shape index: {}]
  %s4 = inlined_call_operand.vmem [shape: f32[2,8,96], index: 4, kind: input, shape index: {}]
  %s5 = inlined_call_operand.vmem [shape: f32[32,100], index: 5, kind: input, shape index: {}]
  %s6 = inlined_call_operand.vmem [shape: f32[1,4], index: 6, kind: input, shape index: {}]
  %s7 = inlined_call_operand.vmem [shape: f32[4,4], index: 7, kind: input, shape index: {}]
  %s8 = inlined_call_operand.vmem [shape: f32[1,4], index: 8, kind: input, shape index: {}]
  %s9 = inlined_call_operand.vmem [shape: f32[4,96], index: 9, kind: input, shape index: {}]
  %s10 = inlined_call_operand.vmem [shape: f32[1,32], index: 10, kind: input, shape index: {}]
  %s11 = inlined_call_operand.vmem [shape: f32[3], index: 11, kind: input, shape index: {}]
  %s12 = inlined_call_operand.vmem [shape: f32[2,8,4], index: 12, kind: output, shape index: {0}]
  %s13 = inlined_call_operand.vmem [shape: f32[2,8,4], index: 13, kind: output, shape index: {1}]
  %s14 = inlined_call_operand.vmem [shape: f32[2,8,1], index: 14, kind: output, shape index: {2}]
  %s15 = inlined_call_operand.vmem [shape: f32[2,8,1], index: 15, kind: output, shape index: {3}]
  %s16 = inlined_call_operand.hbm [shape: f32[2,1,32], index: 16, kind: output, shape index: {4}]
  %17 = xla_tuple %s12, %s13, %s14, %s15, %s16
  %s18 = sld [smem:[#allocation0]]
  $region125: #{rin_forward.3} parent=0
    _
  %s20 = ssub.s32 1, %s18
  %s21 = scalar_select 0, %s20, %s18
  $region1: #{rin_forward.3} parent=0
    #allocation3 [shape = 'u8[512]{0}', space=smem, size = 0x200, scoped, tag = 'input window, operand 11, single buffered']
    #allocation4 [shape = 's32[2]{0}', space=sflag, size = 0x8, scoped, tag = 'scoped memory for rin_forward.3']
    #allocation5 [shape = 's32[2]{0}', space=sflag, size = 0x8, scoped, tag = 'scoped memory for rin_forward.3']
    #allocation6 [shape = 'u8[1024]{0}', space=vmem, size = 0x400, scoped, tag = 'output window, operand 4']
    %22 = vsyncpa [#allocation5], 0
    %23 = vsyncpa [#allocation4], 0
    %s24 = scalar_lea.sflag [#allocation4], 1
    %25 = vsyncpa %s24, 0
    loop: start=0, step=1, limit=4
    $region2: #{rin_forward.3} parent=1 // loop_pre_header
      _
    $region3: #{rin_forward.3} parent=1 // loop_header
      %s27 = sphi 0, %s31
      %p28 = scmp.ge.s32.totalorder %s27, 4
      %s34 = sphi 0, %s46
      %s35 = sphi 0, %s42
      %s36 = sphi 0, %s34
      %s37 = sphi 0, %s35
      %s38 = sphi 0, %s36
      %s39 = sphi 0, %s37
      %s51 = sphi 0, %s53
      %s54 = sphi 0, %s51
      %s55 = sphi 0, %s54
      %s71 = sphi 0, %s55
      %s79 = sphi 0, %s81
      %s82 = sphi 0, %s79
      %s83 = sphi 0, %s82
      %s99 = sphi 0, %s83
      %s107 = sphi 0, %s109
      %s110 = sphi 0, %s107
      %s111 = sphi 0, %s110
      %s127 = sphi 0, %s111
      %s135 = sphi 0, %s137
      %s138 = sphi 0, %s135
      %s139 = sphi 0, %s138
      %s155 = sphi 0, %s139
      %s163 = sphi 0, %s165
      %s166 = sphi 0, %s163
      %s167 = sphi 0, %s166
      %s183 = sphi 0, %s167
      %s187 = sphi 0, %s187
      %s189 = sphi 0, %s187
      %s190 = sphi 0, %s189
      %s204 = sphi 0, %s190
      %s208 = sphi 0, %s208
      %s210 = sphi 0, %s208
      %s211 = sphi 0, %s210
      %s225 = sphi 0, %s211
      %s229 = sphi 0, %s229
      %s231 = sphi 0, %s229
      %s232 = sphi 0, %s231
      %s246 = sphi 0, %s232
      %s250 = sphi 0, %s250
      %s252 = sphi 0, %s250
      %s253 = sphi 0, %s252
      %s267 = sphi 0, %s253
      %s271 = sphi 0, %s271
      %s273 = sphi 0, %s271
      %s274 = sphi 0, %s273
      %s288 = sphi 0, %s274
      %s292 = sphi 0, %s292
      %s294 = sphi 0, %s292
      %s295 = sphi 0, %s294
      %s309 = sphi 0, %s295
      %s313 = sphi 0, %s313
      %s315 = sphi 0, %s313
      %s316 = sphi 0, %s315
      %s330 = sphi 0, %s316
      %s338 = sphi 0, %s340
      %s341 = sphi 0, %s338
      %s342 = sphi 0, %s341
      %s358 = sphi 0, %s342
      %s366 = sphi 0, %s368
      %s369 = sphi 0, %s366
      %s370 = sphi 0, %s369
      %s386 = sphi 0, %s370
      %s394 = sphi 0, %s396
      %s397 = sphi 0, %s394
      %s398 = sphi 0, %s397
      %s414 = sphi 0, %s398
      %s422 = sphi 0, %s424
      %s425 = sphi 0, %s422
      %s426 = sphi 0, %s425
      %s442 = sphi 0, %s426
      %s448 = sphi 0, %s450
      %s451 = sphi 0, %s448
      %s452 = sphi 0, %s451
      %s468 = sphi 0, %s452
    $region4: #{rin_forward.3} parent=1 // loop_header_branch
      %30 = sbr.rel (%p28) target = $region8
    $region5: #{rin_forward.3} parent=1 // loop_body
      %s32 = ssub.s32 %s27, 1
      %s33 = ssub.s32 %s27, 2
      %s40 = sadd.s32 1, %s35
      %p41 = scmp.ge.s32.totalorder %s40, 1
      %s42 = scalar_select %p41, 0, %s40
      %s43 = sadd.s32 1, %s34
      %s44 = scalar_select %p41, %s43, %s34
      %p45 = scmp.ge.s32.totalorder %s44, 2
      %s46 = scalar_select %p45, 0, %s44
      %s47 = ssub.s32 %s34, %s46
      %s48 = ssub.s32 %s35, %s42
      %s49 = sor.u32 %s47, %s48
      %p50 = scmp.eq.s32.totalorder %s49, 0
      %s52 = sadd.s32 %s51, 1
      %s53 = scalar_select %p50, %s51, %s52
      %p56 = pneg %p50
      %p57 = scmp.eq.s32.totalorder %s27, 1
      %p58 = por %p56, %p57
      %p59 = scmp.ne.s32.totalorder %s51, %s54
      %p60 = scmp.eq.s32.totalorder %s27, 0
      %p61 = por %p59, %p60
      %p62 = scmp.ne.s32.totalorder %s51, %s54
      %p63 = scmp.eq.s32.totalorder %s32, 1
      %p64 = por %p62, %p63
      %p65 = scmp.ne.s32.totalorder %s54, %s55
      %p66 = scmp.eq.s32.totalorder %s32, 0
      %p67 = por %p65, %p66
      %p68 = scmp.ne.s32.totalorder %s54, %s55
      %p69 = scmp.eq.s32.totalorder %s33, 1
      %p70 = por %p68, %p69
      %p72 = scmp.ne.s32.totalorder %s55, %s71
      %p73 = scmp.eq.s32.totalorder %s33, 0
      %p74 = por %p72, %p73
      %s75 = ssub.s32 %s34, %s46
      %s76 = ssub.s32 %s35, %s42
      %s77 = sor.u32 %s75, %s76
      %p78 = scmp.eq.s32.totalorder %s77, 0
      %s80 = sadd.s32 %s79, 1
      %s81 = scalar_select %p78, %s79, %s80
      %p84 = pneg %p78
      %p85 = scmp.eq.s32.totalorder %s27, 1
      %p86 = por %p84, %p85
      %p87 = scmp.ne.s32.totalorder %s79, %s82
      %p88 = scmp.eq.s32.totalorder %s27, 0
      %p89 = por %p87, %p88
      %p90 = scmp.ne.s32.totalorder %s79, %s82
      %p91 = scmp.eq.s32.totalorder %s32, 1
      %p92 = por %p90, %p91
      %p93 = scmp.ne.s32.totalorder %s82, %s83
      %p94 = scmp.eq.s32.totalorder %s32, 0
      %p95 = por %p93, %p94
      %p96 = scmp.ne.s32.totalorder %s82, %s83
      %p97 = scmp.eq.s32.totalorder %s33, 1
      %p98 = por %p96, %p97
      %p100 = scmp.ne.s32.totalorder %s83, %s99
      %p101 = scmp.eq.s32.totalorder %s33, 0
      %p102 = por %p100, %p101
      %s103 = ssub.s32 %s34, %s46
      %s104 = ssub.s32 %s35, %s42
      %s105 = sor.u32 %s103, %s104
      %p106 = scmp.eq.s32.totalorder %s105, 0
      %s108 = sadd.s32 %s107, 1
      %s109 = scalar_select %p106, %s107, %s108
      %p112 = pneg %p106
      %p113 = scmp.eq.s32.totalorder %s27, 1
      %p114 = por %p112, %p113
      %p115 = scmp.ne.s32.totalorder %s107, %s110
      %p116 = scmp.eq.s32.totalorder %s27, 0
      %p117 = por %p115, %p116
      %p118 = scmp.ne.s32.totalorder %s107, %s110
      %p119 = scmp.eq.s32.totalorder %s32, 1
      %p120 = por %p118, %p119
      %p121 = scmp.ne.s32.totalorder %s110, %s111
      %p122 = scmp.eq.s32.totalorder %s32, 0
      %p123 = por %p121, %p122
      %p124 = scmp.ne.s32.totalorder %s110, %s111
      %p125 = scmp.eq.s32.totalorder %s33, 1
      %p126 = por %p124, %p125
      %p128 = scmp.ne.s32.totalorder %s111, %s127
      %p129 = scmp.eq.s32.totalorder %s33, 0
      %p130 = por %p128, %p129
      %s131 = ssub.s32 %s34, %s46
      %s132 = ssub.s32 %s35, %s42
      %s133 = sor.u32 %s131, %s132
      %p134 = scmp.eq.s32.totalorder %s133, 0
      %s136 = sadd.s32 %s135, 1
      %s137 = scalar_select %p134, %s135, %s136
      %p140 = pneg %p134
      %p141 = scmp.eq.s32.totalorder %s27, 1
      %p142 = por %p140, %p141
      %p143 = scmp.ne.s32.totalorder %s135, %s138
      %p144 = scmp.eq.s32.totalorder %s27, 0
      %p145 = por %p143, %p144
      %p146 = scmp.ne.s32.totalorder %s135, %s138
      %p147 = scmp.eq.s32.totalorder %s32, 1
      %p148 = por %p146, %p147
      %p149 = scmp.ne.s32.totalorder %s138, %s139
      %p150 = scmp.eq.s32.totalorder %s32, 0
      %p151 = por %p149, %p150
      %p152 = scmp.ne.s32.totalorder %s138, %s139
      %p153 = scmp.eq.s32.totalorder %s33, 1
      %p154 = por %p152, %p153
      %p156 = scmp.ne.s32.totalorder %s139, %s155
      %p157 = scmp.eq.s32.totalorder %s33, 0
      %p158 = por %p156, %p157
      %s159 = ssub.s32 %s34, %s46
      %s160 = ssub.s32 %s35, %s42
      %s161 = sor.u32 %s159, %s160
      %p162 = scmp.eq.s32.totalorder %s161, 0
      %s164 = sadd.s32 %s163, 1
      %s165 = scalar_select %p162, %s163, %s164
      %p168 = pneg %p162
      %p169 = scmp.eq.s32.totalorder %s27, 1
      %p170 = por %p168, %p169
      %p171 = scmp.ne.s32.totalorder %s163, %s166
      %p172 = scmp.eq.s32.totalorder %s27, 0
      %p173 = por %p171, %p172
      %p174 = scmp.ne.s32.totalorder %s163, %s166
      %p175 = scmp.eq.s32.totalorder %s32, 1
      %p176 = por %p174, %p175
      %p177 = scmp.ne.s32.totalorder %s166, %s167
      %p178 = scmp.eq.s32.totalorder %s32, 0
      %p179 = por %p177, %p178
      %p180 = scmp.ne.s32.totalorder %s166, %s167
      %p181 = scmp.eq.s32.totalorder %s33, 1
      %p182 = por %p180, %p181
      %p184 = scmp.ne.s32.totalorder %s167, %s183
      %p185 = scmp.eq.s32.totalorder %s33, 0
      %p186 = por %p184, %p185
      %s188 = sadd.s32 %s187, 1
      %p191 = scmp.eq.s32.totalorder %s27, 1
      %p192 = scmp.ne.s32.totalorder %s187, %s189
      %p193 = scmp.eq.s32.totalorder %s27, 0
      %p194 = por %p192, %p193
      %p195 = scmp.ne.s32.totalorder %s187, %s189
      %p196 = scmp.eq.s32.totalorder %s32, 1
      %p197 = por %p195, %p196
      %p198 = scmp.ne.s32.totalorder %s189, %s190
      %p199 = scmp.eq.s32.totalorder %s32, 0
      %p200 = por %p198, %p199
      %p201 = scmp.ne.s32.totalorder %s189, %s190
      %p202 = scmp.eq.s32.totalorder %s33, 1
      %p203 = por %p201, %p202
      %p205 = scmp.ne.s32.totalorder %s190, %s204
      %p206 = scmp.eq.s32.totalorder %s33, 0
      %p207 = por %p205, %p206
      %s209 = sadd.s32 %s208, 1
      %p212 = scmp.eq.s32.totalorder %s27, 1
      %p213 = scmp.ne.s32.totalorder %s208, %s210
      %p214 = scmp.eq.s32.totalorder %s27, 0
      %p215 = por %p213, %p214
      %p216 = scmp.ne.s32.totalorder %s208, %s210
      %p217 = scmp.eq.s32.totalorder %s32, 1
      %p218 = por %p216, %p217
      %p219 = scmp.ne.s32.totalorder %s210, %s211
      %p220 = scmp.eq.s32.totalorder %s32, 0
      %p221 = por %p219, %p220
      %p222 = scmp.ne.s32.totalorder %s210, %s211
      %p223 = scmp.eq.s32.totalorder %s33, 1
      %p224 = por %p222, %p223
      %p226 = scmp.ne.s32.totalorder %s211, %s225
      %p227 = scmp.eq.s32.totalorder %s33, 0
      %p228 = por %p226, %p227
      %s230 = sadd.s32 %s229, 1
      %p233 = scmp.eq.s32.totalorder %s27, 1
      %p234 = scmp.ne.s32.totalorder %s229, %s231
      %p235 = scmp.eq.s32.totalorder %s27, 0
      %p236 = por %p234, %p235
      %p237 = scmp.ne.s32.totalorder %s229, %s231
      %p238 = scmp.eq.s32.totalorder %s32, 1
      %p239 = por %p237, %p238
      %p240 = scmp.ne.s32.totalorder %s231, %s232
      %p241 = scmp.eq.s32.totalorder %s32, 0
      %p242 = por %p240, %p241
      %p243 = scmp.ne.s32.totalorder %s231, %s232
      %p244 = scmp.eq.s32.totalorder %s33, 1
      %p245 = por %p243, %p244
      %p247 = scmp.ne.s32.totalorder %s232, %s246
      %p248 = scmp.eq.s32.totalorder %s33, 0
      %p249 = por %p247, %p248
      %s251 = sadd.s32 %s250, 1
      %p254 = scmp.eq.s32.totalorder %s27, 1
      %p255 = scmp.ne.s32.totalorder %s250, %s252
      %p256 = scmp.eq.s32.totalorder %s27, 0
      %p257 = por %p255, %p256
      %p258 = scmp.ne.s32.totalorder %s250, %s252
      %p259 = scmp.eq.s32.totalorder %s32, 1
      %p260 = por %p258, %p259
      %p261 = scmp.ne.s32.totalorder %s252, %s253
      %p262 = scmp.eq.s32.totalorder %s32, 0
      %p263 = por %p261, %p262
      %p264 = scmp.ne.s32.totalorder %s252, %s253
      %p265 = scmp.eq.s32.totalorder %s33, 1
      %p266 = por %p264, %p265
      %p268 = scmp.ne.s32.totalorder %s253, %s267
      %p269 = scmp.eq.s32.totalorder %s33, 0
      %p270 = por %p268, %p269
      %s272 = sadd.s32 %s271, 1
      %p275 = scmp.eq.s32.totalorder %s27, 1
      %p276 = scmp.ne.s32.totalorder %s271, %s273
      %p277 = scmp.eq.s32.totalorder %s27, 0
      %p278 = por %p276, %p277
      %p279 = scmp.ne.s32.totalorder %s271, %s273
      %p280 = scmp.eq.s32.totalorder %s32, 1
      %p281 = por %p279, %p280
      %p282 = scmp.ne.s32.totalorder %s273, %s274
      %p283 = scmp.eq.s32.totalorder %s32, 0
      %p284 = por %p282, %p283
      %p285 = scmp.ne.s32.totalorder %s273, %s274
      %p286 = scmp.eq.s32.totalorder %s33, 1
      %p287 = por %p285, %p286
      %p289 = scmp.ne.s32.totalorder %s274, %s288
      %p290 = scmp.eq.s32.totalorder %s33, 0
      %p291 = por %p289, %p290
      %s293 = sadd.s32 %s292, 1
      %p296 = scmp.eq.s32.totalorder %s27, 1
      %p297 = scmp.ne.s32.totalorder %s292, %s294
      %p298 = scmp.eq.s32.totalorder %s27, 0
      %p299 = por %p297, %p298
      %p300 = scmp.ne.s32.totalorder %s292, %s294
      %p301 = scmp.eq.s32.totalorder %s32, 1
      %p302 = por %p300, %p301
      %p303 = scmp.ne.s32.totalorder %s294, %s295
      %p304 = scmp.eq.s32.totalorder %s32, 0
      %p305 = por %p303, %p304
      %p306 = scmp.ne.s32.totalorder %s294, %s295
      %p307 = scmp.eq.s32.totalorder %s33, 1
      %p308 = por %p306, %p307
      %p310 = scmp.ne.s32.totalorder %s295, %s309
      %p311 = scmp.eq.s32.totalorder %s33, 0
      %p312 = por %p310, %p311
      %s314 = sadd.s32 %s313, 1
      %p317 = scmp.eq.s32.totalorder %s27, 1
      %p318 = scmp.ne.s32.totalorder %s313, %s315
      %p319 = scmp.eq.s32.totalorder %s27, 0
      %p320 = por %p318, %p319
      %p321 = scmp.ne.s32.totalorder %s313, %s315
      %p322 = scmp.eq.s32.totalorder %s32, 1
      %p323 = por %p321, %p322
      %p324 = scmp.ne.s32.totalorder %s315, %s316
      %p325 = scmp.eq.s32.totalorder %s32, 0
      %p326 = por %p324, %p325
      %p327 = scmp.ne.s32.totalorder %s315, %s316
      %p328 = scmp.eq.s32.totalorder %s33, 1
      %p329 = por %p327, %p328
      %p331 = scmp.ne.s32.totalorder %s316, %s330
      %p332 = scmp.eq.s32.totalorder %s33, 0
      %p333 = por %p331, %p332
      %s334 = ssub.s32 %s34, %s46
      %s335 = ssub.s32 %s35, %s42
      %s336 = sor.u32 %s334, %s335
      %p337 = scmp.eq.s32.totalorder %s336, 0
      %s339 = sadd.s32 %s338, 1
      %s340 = scalar_select %p337, %s338, %s339
      %p343 = pneg %p337
      %p344 = scmp.eq.s32.totalorder %s27, 1
      %p345 = por %p343, %p344
      %p346 = scmp.ne.s32.totalorder %s338, %s341
      %p347 = scmp.eq.s32.totalorder %s27, 0
      %p348 = por %p346, %p347
      %p349 = scmp.ne.s32.totalorder %s338, %s341
      %p350 = scmp.eq.s32.totalorder %s32, 1
      %p351 = por %p349, %p350
      %p352 = scmp.ne.s32.totalorder %s341, %s342
      %p353 = scmp.eq.s32.totalorder %s32, 0
      %p354 = por %p352, %p353
      %p355 = scmp.ne.s32.totalorder %s341, %s342
      %p356 = scmp.eq.s32.totalorder %s33, 1
      %p357 = por %p355, %p356
      %p359 = scmp.ne.s32.totalorder %s342, %s358
      %p360 = scmp.eq.s32.totalorder %s33, 0
      %p361 = por %p359, %p360
      %s362 = ssub.s32 %s34, %s46
      %s363 = ssub.s32 %s35, %s42
      %s364 = sor.u32 %s362, %s363
      %p365 = scmp.eq.s32.totalorder %s364, 0
      %s367 = sadd.s32 %s366, 1
      %s368 = scalar_select %p365, %s366, %s367
      %p371 = pneg %p365
      %p372 = scmp.eq.s32.totalorder %s27, 1
      %p373 = por %p371, %p372
      %p374 = scmp.ne.s32.totalorder %s366, %s369
      %p375 = scmp.eq.s32.totalorder %s27, 0
      %p376 = por %p374, %p375
      %p377 = scmp.ne.s32.totalorder %s366, %s369
      %p378 = scmp.eq.s32.totalorder %s32, 1
      %p379 = por %p377, %p378
      %p380 = scmp.ne.s32.totalorder %s369, %s370
      %p381 = scmp.eq.s32.totalorder %s32, 0
      %p382 = por %p380, %p381
      %p383 = scmp.ne.s32.totalorder %s369, %s370
      %p384 = scmp.eq.s32.totalorder %s33, 1
      %p385 = por %p383, %p384
      %p387 = scmp.ne.s32.totalorder %s370, %s386
      %p388 = scmp.eq.s32.totalorder %s33, 0
      %p389 = por %p387, %p388
      %s390 = ssub.s32 %s34, %s46
      %s391 = ssub.s32 %s35, %s42
      %s392 = sor.u32 %s390, %s391
      %p393 = scmp.eq.s32.totalorder %s392, 0
      %s395 = sadd.s32 %s394, 1
      %s396 = scalar_select %p393, %s394, %s395
      %p399 = pneg %p393
      %p400 = scmp.eq.s32.totalorder %s27, 1
      %p401 = por %p399, %p400
      %p402 = scmp.ne.s32.totalorder %s394, %s397
      %p403 = scmp.eq.s32.totalorder %s27, 0
      %p404 = por %p402, %p403
      %p405 = scmp.ne.s32.totalorder %s394, %s397
      %p406 = scmp.eq.s32.totalorder %s32, 1
      %p407 = por %p405, %p406
      %p408 = scmp.ne.s32.totalorder %s397, %s398
      %p409 = scmp.eq.s32.totalorder %s32, 0
      %p410 = por %p408, %p409
      %p411 = scmp.ne.s32.totalorder %s397, %s398
      %p412 = scmp.eq.s32.totalorder %s33, 1
      %p413 = por %p411, %p412
      %p415 = scmp.ne.s32.totalorder %s398, %s414
      %p416 = scmp.eq.s32.totalorder %s33, 0
      %p417 = por %p415, %p416
      %s418 = ssub.s32 %s34, %s46
      %s419 = ssub.s32 %s35, %s42
      %s420 = sor.u32 %s418, %s419
      %p421 = scmp.eq.s32.totalorder %s420, 0
      %s423 = sadd.s32 %s422, 1
      %s424 = scalar_select %p421, %s422, %s423
      %p427 = pneg %p421
      %p428 = scmp.eq.s32.totalorder %s27, 1
      %p429 = por %p427, %p428
      %p430 = scmp.ne.s32.totalorder %s422, %s425
      %p431 = scmp.eq.s32.totalorder %s27, 0
      %p432 = por %p430, %p431
      %p433 = scmp.ne.s32.totalorder %s422, %s425
      %p434 = scmp.eq.s32.totalorder %s32, 1
      %p435 = por %p433, %p434
      %p436 = scmp.ne.s32.totalorder %s425, %s426
      %p437 = scmp.eq.s32.totalorder %s32, 0
      %p438 = por %p436, %p437
      %p439 = scmp.ne.s32.totalorder %s425, %s426
      %p440 = scmp.eq.s32.totalorder %s33, 1
      %p441 = por %p439, %p440
      %p443 = scmp.ne.s32.totalorder %s426, %s442
      %p444 = scmp.eq.s32.totalorder %s33, 0
      %p445 = por %p443, %p444
      %s446 = ssub.s32 %s34, %s46
      %p447 = scmp.eq.s32.totalorder %s446, 0
      %s449 = sadd.s32 %s448, 1
      %s450 = scalar_select %p447, %s448, %s449
      %p453 = pneg %p447
      %p454 = scmp.eq.s32.totalorder %s27, 1
      %p455 = por %p453, %p454
      %p456 = scmp.ne.s32.totalorder %s448, %s451
      %p457 = scmp.eq.s32.totalorder %s27, 0
      %p458 = por %p456, %p457
      %p459 = scmp.ne.s32.totalorder %s448, %s451
      %p460 = scmp.eq.s32.totalorder %s32, 1
      %p461 = por %p459, %p460
      %p462 = scmp.ne.s32.totalorder %s451, %s452
      %p463 = scmp.eq.s32.totalorder %s32, 0
      %p464 = por %p462, %p463
      %p465 = scmp.ne.s32.totalorder %s451, %s452
      %p466 = scmp.eq.s32.totalorder %s33, 1
      %p467 = por %p465, %p466
      %p469 = scmp.ne.s32.totalorder %s452, %s468
      %p470 = scmp.eq.s32.totalorder %s33, 0
      %p471 = por %p469, %p470
      %p472 = scmp.le.s32.totalorder 1, %s27
      %p473 = scmp.lt.s32.totalorder %s27, 3
      %p474 = pnand %p472, %p473
      %p475 = pneg %p474
      // Predicated region
      $region9: #{rin_forward.3} parent=5 // pred_check
        _
      $region10: #{rin_forward.3} parent=5 // pred_check_branch
        %477 = sbr.rel (%p474) target = $region12
      $region11: #{rin_forward.3} parent=5 // pred_region
        %s478 = ssub.s32 %s27, 1
        // Predicated region
        $region13: #{rin_forward.3} parent=11 // pred_check
          %p479 = pneg %p200
        $region14: #{rin_forward.3} parent=11 // pred_check_branch
          %481 = sbr.rel (%p479) target = $region16
        $region15: #{rin_forward.3} parent=11 // pred_region
          _
        $region16: #{rin_forward.3} parent=11 // pred_fallthru
          _
        // Predicated region
        $region17: #{rin_forward.3} parent=11 // pred_check
          %p482 = pneg %p221
        $region18: #{rin_forward.3} parent=11 // pred_check_branch
          %484 = sbr.rel (%p482) target = $region20
        $region19: #{rin_forward.3} parent=11 // pred_region
          _
        $region20: #{rin_forward.3} parent=11 // pred_fallthru
          _
        // Predicated region
        $region21: #{rin_forward.3} parent=11 // pred_check
          %p485 = pneg %p242
        $region22: #{rin_forward.3} parent=11 // pred_check_branch
          %487 = sbr.rel (%p485) target = $region24
        $region23: #{rin_forward.3} parent=11 // pred_region
          _
        $region24: #{rin_forward.3} parent=11 // pred_fallthru
          _
        // Predicated region
        $region25: #{rin_forward.3} parent=11 // pred_check
          %p488 = pneg %p263
        $region26: #{rin_forward.3} parent=11 // pred_check_branch
          %490 = sbr.rel (%p488) target = $region28
        $region27: #{rin_forward.3} parent=11 // pred_region
          _
        $region28: #{rin_forward.3} parent=11 // pred_fallthru
          _
        // Predicated region
        $region29: #{rin_forward.3} parent=11 // pred_check
          %p491 = pneg %p284
        $region30: #{rin_forward.3} parent=11 // pred_check_branch
          %493 = sbr.rel (%p491) target = $region32
        $region31: #{rin_forward.3} parent=11 // pred_region
          _
        $region32: #{rin_forward.3} parent=11 // pred_fallthru
          _
        // Predicated region
        $region33: #{rin_forward.3} parent=11 // pred_check
          %p494 = pneg %p305
        $region34: #{rin_forward.3} parent=11 // pred_check_branch
          %496 = sbr.rel (%p494) target = $region36
        $region35: #{rin_forward.3} parent=11 // pred_region
          _
        $region36: #{rin_forward.3} parent=11 // pred_fallthru
          _
        // Predicated region
        $region37: #{rin_forward.3} parent=11 // pred_check
          %p497 = pneg %p326
        $region38: #{rin_forward.3} parent=11 // pred_check_branch
          %499 = sbr.rel (%p497) target = $region40
        $region39: #{rin_forward.3} parent=11 // pred_region
          %s501 = ssub.s32 16, 16
          %502 = vsyncadd [#allocation5], %s501
          %s504 = sshll.u32 %s11, 4
          %s505 = int_to_ptr.vmem [resolvable:$true] %s504
          %507 = dma.vmem_to_smem %s505, 16, [#allocation3], [#allocation5]
        $region40: #{rin_forward.3} parent=11 // pred_fallthru
          _
      $region12: #{rin_forward.3} parent=5 // pred_fallthru
        _
      %p508 = scmp.lt.s32.totalorder %s27, 2
      // Predicated region
      $region41: #{rin_forward.3} parent=5 // pred_check
        %p509 = pneg %p508
      $region42: #{rin_forward.3} parent=5 // pred_check_branch
        %511 = sbr.rel (%p509) target = $region44
      $region43: #{rin_forward.3} parent=5 // pred_region
        // Predicated region
        $region45: #{rin_forward.3} parent=43 // pred_check
          %p512 = pneg %p61
        $region46: #{rin_forward.3} parent=43 // pred_check_branch
          %514 = sbr.rel (%p512) target = $region48
        $region47: #{rin_forward.3} parent=43 // pred_region
          %p515 = scmp.lt.s32.totalorder %s34, 1
          %s516 = scalar_select %p515, %s34, 1
          %p517 = scmp.lt.s32.totalorder %s35, 0
          %s518 = scalar_select %p517, %s35, 0
          %s519 = sadd.s32 %s518, %s516
          %s520 = smul.addr %s519, 8
          %s521 = scalar_lea.vmem %s0, %s520
        $region48: #{rin_forward.3} parent=43 // pred_fallthru
          _
        // Predicated region
        $region49: #{rin_forward.3} parent=43 // pred_check
          %p522 = pneg %p89
        $region50: #{rin_forward.3} parent=43 // pred_check_branch
          %524 = sbr.rel (%p522) target = $region52
        $region51: #{rin_forward.3} parent=43 // pred_region
          %p525 = scmp.lt.s32.totalorder %s34, 1
          %s526 = scalar_select %p525, %s34, 1
          %p527 = scmp.lt.s32.totalorder %s35, 0
          %s528 = scalar_select %p527, %s35, 0
          %s529 = sadd.s32 %s528, %s526
          %s530 = smul.addr %s529, 8
          %s531 = scalar_lea.vmem %s1, %s530
        $region52: #{rin_forward.3} parent=43 // pred_fallthru
          _
        // Predicated region
        $region53: #{rin_forward.3} parent=43 // pred_check
          %p532 = pneg %p117
        $region54: #{rin_forward.3} parent=43 // pred_check_branch
          %534 = sbr.rel (%p532) target = $region56
        $region55: #{rin_forward.3} parent=43 // pred_region
          %p535 = scmp.lt.s32.totalorder %s34, 1
          %s536 = scalar_select %p535, %s34, 1
          %p537 = scmp.lt.s32.totalorder %s35, 0
          %s538 = scalar_select %p537, %s35, 0
          %s539 = sadd.s32 %s538, %s536
          %s540 = smul.addr %s539, 8
          %s541 = scalar_lea.vmem %s2, %s540
        $region56: #{rin_forward.3} parent=43 // pred_fallthru
          _
        // Predicated region
        $region57: #{rin_forward.3} parent=43 // pred_check
          %p542 = pneg %p145
        $region58: #{rin_forward.3} parent=43 // pred_check_branch
          %544 = sbr.rel (%p542) target = $region60
        $region59: #{rin_forward.3} parent=43 // pred_region
          %p545 = scmp.lt.s32.totalorder %s34, 1
          %s546 = scalar_select %p545, %s34, 1
          %p547 = scmp.lt.s32.totalorder %s35, 0
          %s548 = scalar_select %p547, %s35, 0
          %s549 = sadd.s32 %s548, %s546
          %s550 = smul.addr %s549, 8
          %s551 = scalar_lea.vmem %s3, %s550
        $region60: #{rin_forward.3} parent=43 // pred_fallthru
          _
        // Predicated region
        $region61: #{rin_forward.3} parent=43 // pred_check
          %p552 = pneg %p173
        $region62: #{rin_forward.3} parent=43 // pred_check_branch
          %554 = sbr.rel (%p552) target = $region64
        $region63: #{rin_forward.3} parent=43 // pred_region
          %p555 = scmp.lt.s32.totalorder %s34, 1
          %s556 = scalar_select %p555, %s34, 1
          %p557 = scmp.lt.s32.totalorder %s35, 0
          %s558 = scalar_select %p557, %s35, 0
          %s559 = sadd.s32 %s558, %s556
          %s560 = smul.addr %s559, 8
          %s561 = scalar_lea.vmem %s4, %s560
        $region64: #{rin_forward.3} parent=43 // pred_fallthru
          _
      $region44: #{rin_forward.3} parent=5 // pred_fallthru
        _
      %p562 = scmp.le.s32.totalorder 1, %s27
      %p563 = scmp.lt.s32.totalorder %s27, 3
      %p564 = pnand %p562, %p563
      %p565 = pneg %p564
      // Predicated region
      $region65: #{rin_forward.3} parent=5 // pred_check
        _
      $region66: #{rin_forward.3} parent=5 // pred_check_branch
        %567 = sbr.rel (%p564) target = $region68
      $region67: #{rin_forward.3} parent=5 // pred_region
        %s568 = ssub.s32 %s27, 1
        // Predicated region
        $region69: #{rin_forward.3} parent=67 // pred_check
          %p569 = pneg %p326
        $region70: #{rin_forward.3} parent=67 // pred_check_branch
          %571 = sbr.rel (%p569) target = $region72
        $region71: #{rin_forward.3} parent=67 // pred_region
          %572 = dma.done [#allocation5], 16
        $region72: #{rin_forward.3} parent=67 // pred_fallthru
          _
        %573 = sfence
        %p574 = scmp.lt.s32.totalorder %s36, 1
        %s575 = scalar_select %p574, %s36, 1
        %p576 = scmp.lt.s32.totalorder %s37, 0
        %s577 = scalar_select %p576, %s37, 0
        %s578 = sadd.s32 %s577, %s575
        %s579 = smul.addr %s578, 8
        %s580 = scalar_lea.vmem %s0, %s579
        %p581 = pneg %p67
        %p582 = pneg %p64
        %p583 = scmp.lt.s32.totalorder %s36, 1
        %s584 = scalar_select %p583, %s36, 1
        %p585 = scmp.lt.s32.totalorder %s37, 0
        %s586 = scalar_select %p585, %s37, 0
        %s587 = sadd.s32 %s586, %s584
        %s588 = smul.addr %s587, 8
        %s589 = scalar_lea.vmem %s1, %s588
        %p590 = pneg %p95
        %p591 = pneg %p92
        %p592 = scmp.lt.s32.totalorder %s36, 1
        %s593 = scalar_select %p592, %s36, 1
        %p594 = scmp.lt.s32.totalorder %s37, 0
        %s595 = scalar_select %p594, %s37, 0
        %s596 = sadd.s32 %s595, %s593
        %s597 = smul.addr %s596, 8
        %s598 = scalar_lea.vmem %s2, %s597
        %p599 = pneg %p123
        %p600 = pneg %p120
        %p601 = scmp.lt.s32.totalorder %s36, 1
        %s602 = scalar_select %p601, %s36, 1
        %p603 = scmp.lt.s32.totalorder %s37, 0
        %s604 = scalar_select %p603, %s37, 0
        %s605 = sadd.s32 %s604, %s602
        %s606 = smul.addr %s605, 8
        %s607 = scalar_lea.vmem %s3, %s606
        %p608 = pneg %p151
        %p609 = pneg %p148
        %p610 = scmp.lt.s32.totalorder %s36, 1
        %s611 = scalar_select %p610, %s36, 1
        %p612 = scmp.lt.s32.totalorder %s37, 0
        %s613 = scalar_select %p612, %s37, 0
        %s614 = sadd.s32 %s613, %s611
        %s615 = smul.addr %s614, 8
        %s616 = scalar_lea.vmem %s4, %s615
        %p617 = pneg %p179
        %p618 = pneg %p176
        %p619 = pneg %p200
        %p620 = pneg %p197
        %p621 = pneg %p221
        %p622 = pneg %p218
        %p623 = pneg %p242
        %p624 = pneg %p239
        %p625 = pneg %p263
        %p626 = pneg %p260
        %p627 = pneg %p284
        %p628 = pneg %p281
        %p629 = pneg %p305
        %p630 = pneg %p302
        %p631 = pneg %p326
        %p632 = pneg %p323
        %p633 = pneg %p354
        %p634 = pneg %p351
        %p635 = scmp.lt.s32.totalorder %s36, 1
        %s636 = scalar_select %p635, %s36, 1
        %p637 = scmp.lt.s32.totalorder %s37, 0
        %s638 = scalar_select %p637, %s37, 0
        %s639 = sadd.s32 %s638, %s636
        %s640 = smul.addr %s639, 8
        %s641 = scalar_lea.vmem %s12, %s640
        %p642 = pneg %p382
        %p643 = pneg %p379
        %p644 = scmp.lt.s32.totalorder %s36, 1
        %s645 = scalar_select %p644, %s36, 1
        %p646 = scmp.lt.s32.totalorder %s37, 0
        %s647 = scalar_select %p646, %s37, 0
        %s648 = sadd.s32 %s647, %s645
        %s649 = smul.addr %s648, 8
        %s650 = scalar_lea.vmem %s13, %s649
        %p651 = pneg %p410
        %p652 = pneg %p407
        %p653 = scmp.lt.s32.totalorder %s36, 1
        %s654 = scalar_select %p653, %s36, 1
        %p655 = scmp.lt.s32.totalorder %s37, 0
        %s656 = scalar_select %p655, %s37, 0
        %s657 = sadd.s32 %s656, %s654
        %s658 = smul.addr %s657, 8
        %s659 = scalar_lea.vmem %s14, %s658
        %p660 = pneg %p438
        %p661 = pneg %p435
        %p662 = scmp.lt.s32.totalorder %s36, 1
        %s663 = scalar_select %p662, %s36, 1
        %p664 = scmp.lt.s32.totalorder %s37, 0
        %s665 = scalar_select %p664, %s37, 0
        %s666 = sadd.s32 %s665, %s663
        %s667 = smul.addr %s666, 8
        %s668 = scalar_lea.vmem %s15, %s667
        %p669 = pneg %p464
        %p670 = pneg %p461
        %s671 = sand.u32 %s451, 1
        %s672 = scalar_lea.sflag [#allocation4], %s671
        %s673 = sand.u32 %s451, 1
        %s674 = scalar_lea.vmem [#allocation6], %s673
        %p675 = scmp.lt.s32.totalorder %s36, 1
        %s676 = scalar_select %p675, %s36, 1
        %p677 = scmp.lt.s32.totalorder %s37, 0
        %s678 = scalar_select %p677, %s37, 0
        %s679 = sadd.s32 %s678, %s676
        %s680 = smul.addr %s679, 8
        %s681 = scalar_lea.vmem %s0, %s680
        %p682 = scmp.lt.s32.totalorder %s36, 1
        %s683 = scalar_select %p682, %s36, 1
        %p684 = scmp.lt.s32.totalorder %s37, 0
        %s685 = scalar_select %p684, %s37, 0
        %s686 = sadd.s32 %s685, %s683
        %s687 = smul.addr %s686, 8
        %s688 = scalar_lea.vmem %s1, %s687
        %p689 = scmp.lt.s32.totalorder %s36, 1
        %s690 = scalar_select %p689, %s36, 1
        %p691 = scmp.lt.s32.totalorder %s37, 0
        %s692 = scalar_select %p691, %s37, 0
        %s693 = sadd.s32 %s692, %s690
        %s694 = smul.addr %s693, 8
        %s695 = scalar_lea.vmem %s2, %s694
        %p696 = scmp.lt.s32.totalorder %s36, 1
        %s697 = scalar_select %p696, %s36, 1
        %p698 = scmp.lt.s32.totalorder %s37, 0
        %s699 = scalar_select %p698, %s37, 0
        %s700 = sadd.s32 %s699, %s697
        %s701 = smul.addr %s700, 8
        %s702 = scalar_lea.vmem %s3, %s701
        %p703 = scmp.lt.s32.totalorder %s36, 1
        %s704 = scalar_select %p703, %s36, 1
        %p705 = scmp.lt.s32.totalorder %s37, 0
        %s706 = scalar_select %p705, %s37, 0
        %s707 = sadd.s32 %s706, %s704
        %s708 = smul.addr %s707, 8
        %s709 = scalar_lea.vmem %s4, %s708
        %p710 = scmp.lt.s32.totalorder %s36, 1
        %s711 = scalar_select %p710, %s36, 1
        %p712 = scmp.lt.s32.totalorder %s37, 0
        %s713 = scalar_select %p712, %s37, 0
        %s714 = sadd.s32 %s713, %s711
        %s715 = smul.addr %s714, 8
        %s716 = scalar_lea.vmem %s12, %s715
        %p717 = scmp.lt.s32.totalorder %s36, 1
        %s718 = scalar_select %p717, %s36, 1
        %p719 = scmp.lt.s32.totalorder %s37, 0
        %s720 = scalar_select %p719, %s37, 0
        %s721 = sadd.s32 %s720, %s718
        %s722 = smul.addr %s721, 8
        %s723 = scalar_lea.vmem %s13, %s722
        %p724 = scmp.lt.s32.totalorder %s36, 1
        %s725 = scalar_select %p724, %s36, 1
        %p726 = scmp.lt.s32.totalorder %s37, 0
        %s727 = scalar_select %p726, %s37, 0
        %s728 = sadd.s32 %s727, %s725
        %s729 = smul.addr %s728, 8
        %s730 = scalar_lea.vmem %s14, %s729
        %p731 = scmp.lt.s32.totalorder %s36, 1
        %s732 = scalar_select %p731, %s36, 1
        %p733 = scmp.lt.s32.totalorder %s37, 0
        %s734 = scalar_select %p733, %s37, 0
        %s735 = sadd.s32 %s734, %s732
        %s736 = smul.addr %s735, 8
        %s737 = scalar_lea.vmem %s15, %s736
        %p738 = scmp.eq.s32.totalorder %s37, 0
        // Predicated region
        $region73: #{rin_forward.3} parent=67 // pred_check
          %p739 = pneg %p738
        $region74: #{rin_forward.3} parent=67 // pred_check_branch
          %741 = sbr.rel (%p739) target = $region76
        $region75: #{rin_forward.3} parent=67 // pred_region
          %vm742 = vcmask 253952
          %743 = vst.msk [vmem:[#allocation2] sm:$0x1] %vm742, 0.0
        $region76: #{rin_forward.3} parent=67 // pred_fallthru
          _
        %v744 = vld [vmem:[%s5] sm:$0xff]
        %v745 = vld [vmem:[%s5 + $0x8] sm:$0xff]
        %v746 = vld [vmem:[%s5 + $0x10] sm:$0xff]
        %v747 = vld [vmem:[%s5 + $0x18] sm:$0xff]
        %v748 = vld [vmem:[%s6] sm:$0x1]
        %v749 = vld [vmem:[%s7] sm:$0xf]
        %v750 = vld [vmem:[%s8] sm:$0x1]
        %v751 = vld [vmem:[%s9] sm:$0xf]
        %v752 = vld [vmem:[%s10] sm:$0x1]
        %s753 = sld [smem:[#allocation3]]
        %s754 = sld [smem:[#allocation3 + $0x1]]
        %s755 = sld [smem:[#allocation3 + $0x2]]
        %v756 = vld [vmem:[#allocation2] sm:$0x1]
        %v757 = vld [vmem:[%s681] sm:$0x1]
        %v758 = vld [vmem:[%s688] sm:$0x1]
        %v759 = vld [vmem:[%s695] sm:$0x1]
        %v760 = vld [vmem:[%s702] sm:$0x1]
        %v761 = vld [vmem:[%s709] sm:$0x1]
        %v762 = vmul.f32 %v756, %v760
        %vm763 = vcmask 261120
        %v765 = vsel %vm763, %v762, 0
        %767 = vmatprep.subr.mxu0 0.0
        %768 = vmatpush1.msra.mxu0 0.0
        %769 = vmatprep.subr.mxu0 0.0
        %770 = vmatpush1.msra.mxu0 0.0
        %771 = vmatprep.subr.mxu0 0.0
        %772 = vmatpush1.msra.mxu0 0.0
        %773 = vmatprep.subr.mxu0 0.0
        %774 = vmatpush1.msra.mxu0 0.0
        %775 = vmatprep.subr.mxu0 0.0
        %776 = vmatpush1.msra.mxu0 0.0
        %777 = vmatprep.subr.mxu0 0.0
        %778 = vmatpush1.msra.mxu0 0.0
        %779 = vmatprep.subr.mxu0 0.0
        %780 = vmatpush1.msra.mxu0 0.0
        %781 = vmatprep.subr.mxu0 0.0
        %782 = vmatpush1.msra.mxu0 0.0
        %783 = vmatprep.subr.mxu0 0.0
        %784 = vmatpush1.msra.mxu0 0.0
        %785 = vmatprep.subr.mxu0 0.0
        %786 = vmatpush1.msra.mxu0 0.0
        %787 = vmatprep.subr.mxu0 0.0
        %788 = vmatpush1.msra.mxu0 0.0
        %789 = vmatprep.subr.mxu0 0.0
        %790 = vmatpush1.msra.mxu0 0.0
        %791 = vmatprep.subr.mxu0 0.0
        %792 = vmatpush1.msra.mxu0 %v747
        %793 = vmatprep.subr.mxu0 0.0
        %794 = vmatpush1.msra.mxu0 %v746
        %795 = vmatprep.subr.mxu0 0.0
        %796 = vmatpush1.msra.mxu0 %v745
        %797 = vmatprep.subr.mxu0 0.0
        %798 = vmatpush1.msra.mxu0 %v744
        %799 = vmatprep.subr.mxu0 0.0
        %800 = vmatpush2.msra.mxu0 0.0
        %801 = vmatprep.subr.mxu0 0.0
        %802 = vmatpush2.msra.mxu0 0.0
        %803 = vmatprep.subr.mxu0 0.0
        %804 = vmatpush2.msra.mxu0 0.0
        %805 = vmatprep.subr.mxu0 0.0
        %806 = vmatpush2.msra.mxu0 0.0
        %807 = vmatprep.subr.mxu0 0.0
        %808 = vmatpush2.msra.mxu0 0.0
        %809 = vmatprep.subr.mxu0 0.0
        %810 = vmatpush2.msra.mxu0 0.0
        %811 = vmatprep.subr.mxu0 0.0
        %812 = vmatpush2.msra.mxu0 0.0
        %813 = vmatprep.subr.mxu0 0.0
        %814 = vmatpush2.msra.mxu0 0.0
        %815 = vmatprep.subr.mxu0 0.0
        %816 = vmatpush2.msra.mxu0 0.0
        %817 = vmatprep.subr.mxu0 0.0
        %818 = vmatpush2.msra.mxu0 0.0
        %819 = vmatprep.subr.mxu0 0.0
        %820 = vmatpush2.msra.mxu0 0.0
        %821 = vmatprep.subr.mxu0 0.0
        %822 = vmatpush2.msra.mxu0 0.0
        %823 = vmatprep.subr.mxu0 0.0
        %824 = vmatpush2.msra.mxu0 0.0
        %825 = vmatprep.subr.mxu0 0.0
        %826 = vmatpush2.msra.mxu0 0.0
        %827 = vmatprep.subr.mxu0 0.0
        %828 = vmatpush2.msra.mxu0 0.0
        %829 = vmatprep.subr.mxu0 0.0
        %830 = vmatpush2.msra.mxu0 0.0
        %831 = vmatprep.mubr.f32.mxu0 0.0
        %832 = vmatmul.mubr.f32.gmra.mxu0 %v765
        %v833 = vpop.f32.mrf.mxu0
        %v834 = vadd.f32 0.0, %v833
        %v835 = vpop.f32.mrf.mxu0
        %836 = vdwg.mxu0
        %v837 = vadd.f32 %v834, %v748
        %v838 = vsub.f32 1.0, %v758
        %v839 = vmul.f32 %v758, %v757
        %v840 = vmul.f32 %v838, %v837
        %v841 = vadd.f32 %v839, %v840
        %vm842 = vcmask 31744
        %v844 = vsel %vm842, %v841, 0
        %vm846 = vcmask 1043456
        %v848 = vsel %vm846, %v749, 0
        %850 = vmatprep.subr.mxu0 0.0
        %851 = vmatpush1.msra.mxu0 0.0
        %852 = vmatprep.subr.mxu0 0.0
        %853 = vmatpush1.msra.mxu0 0.0
        %854 = vmatprep.subr.mxu0 0.0
        %855 = vmatpush1.msra.mxu0 0.0
        %856 = vmatprep.subr.mxu0 0.0
        %857 = vmatpush1.msra.mxu0 0.0
        %858 = vmatprep.subr.mxu0 0.0
        %859 = vmatpush1.msra.mxu0 0.0
        %860 = vmatprep.subr.mxu0 0.0
        %861 = vmatpush1.msra.mxu0 0.0
        %862 = vmatprep.subr.mxu0 0.0
        %863 = vmatpush1.msra.mxu0 0.0
        %864 = vmatprep.subr.mxu0 0.0
        %865 = vmatpush1.msra.mxu0 0.0
        %866 = vmatprep.subr.mxu0 0.0
        %867 = vmatpush1.msra.mxu0 0.0
        %868 = vmatprep.subr.mxu0 0.0
        %869 = vmatpush1.msra.mxu0 0.0
        %870 = vmatprep.subr.mxu0 0.0
        %871 = vmatpush1.msra.mxu0 0.0
        %872 = vmatprep.subr.mxu0 0.0
        %873 = vmatpush1.msra.mxu0 0.0
        %874 = vmatprep.subr.mxu0 0.0
        %875 = vmatpush1.msra.mxu0 0.0
        %876 = vmatprep.subr.mxu0 0.0
        %877 = vmatpush1.msra.mxu0 0.0
        %878 = vmatprep.subr.mxu0 0.0
        %879 = vmatpush1.msra.mxu0 0.0
        %880 = vmatprep.subr.mxu0 0.0
        %881 = vmatpush1.msra.mxu0 %v848
        %882 = vmatprep.subr.mxu0 0.0
        %883 = vmatpush2.msra.mxu0 0.0
        %884 = vmatprep.subr.mxu0 0.0
        %885 = vmatpush2.msra.mxu0 0.0
        %886 = vmatprep.subr.mxu0 0.0
        %887 = vmatpush2.msra.mxu0 0.0
        %888 = vmatprep.subr.mxu0 0.0
        %889 = vmatpush2.msra.mxu0 0.0
        %890 = vmatprep.subr.mxu0 0.0
        %891 = vmatpush2.msra.mxu0 0.0
        %892 = vmatprep.subr.mxu0 0.0
        %893 = vmatpush2.msra.mxu0 0.0
        %894 = vmatprep.subr.mxu0 0.0
        %895 = vmatpush2.msra.mxu0 0.0
        %896 = vmatprep.subr.mxu0 0.0
        %897 = vmatpush2.msra.mxu0 0.0
        %898 = vmatprep.subr.mxu0 0.0
        %899 = vmatpush2.msra.mxu0 0.0
        %900 = vmatprep.subr.mxu0 0.0
        %901 = vmatpush2.msra.mxu0 0.0
        %902 = vmatprep.subr.mxu0 0.0
        %903 = vmatpush2.msra.mxu0 0.0
        %904 = vmatprep.subr.mxu0 0.0
        %905 = vmatpush2.msra.mxu0 0.0
        %906 = vmatprep.subr.mxu0 0.0
        %907 = vmatpush2.msra.mxu0 0.0
        %908 = vmatprep.subr.mxu0 0.0
        %909 = vmatpush2.msra.mxu0 0.0
        %910 = vmatprep.subr.mxu0 0.0
        %911 = vmatpush2.msra.mxu0 0.0
        %912 = vmatprep.subr.mxu0 0.0
        %913 = vmatpush2.msra.mxu0 0.0
        %914 = vmatprep.mubr.f32.mxu0 0.0
        %915 = vmatmul.mubr.f32.gmra.mxu0 %v844
        %v916 = vpop.f32.mrf.mxu0
        %v917 = vadd.f32 %v750, %v916
        %v918 = vpop.f32.mrf.mxu0
        %919 = vdwg.mxu0
        %v920 = vstv %s753
        %v921 = vmul.f32 %v920, %v759
        %v922 = vstv %s754
        %v923 = vmul.f32 %v922, %v917
        %v924 = vadd.f32 %v921, %v923
        %v925 = vstv %s755
        %v926 = vadd.f32 %v924, %v925
        %v927 = vmul.f32 %v838, %v926
        %v928 = vadd.f32 %v839, %v927
        %v930 = vsel %vm842, %v928, 0
        %v933 = vsel %vm846, %v751, 0
        %935 = vmatprep.subr.mxu0 0.0
        %936 = vmatpush1.msra.mxu0 0.0
        %937 = vmatprep.subr.mxu0 0.0
        %938 = vmatpush1.msra.mxu0 0.0
        %939 = vmatprep.subr.mxu0 0.0
        %940 = vmatpush1.msra.mxu0 0.0
        %941 = vmatprep.subr.mxu0 0.0
        %942 = vmatpush1.msra.mxu0 0.0
        %943 = vmatprep.subr.mxu0 0.0
        %944 = vmatpush1.msra.mxu0 0.0
        %945 = vmatprep.subr.mxu0 0.0
        %946 = vmatpush1.msra.mxu0 0.0
        %947 = vmatprep.subr.mxu0 0.0
        %948 = vmatpush1.msra.mxu0 0.0
        %949 = vmatprep.subr.mxu0 0.0
        %950 = vmatpush1.msra.mxu0 0.0
        %951 = vmatprep.subr.mxu0 0.0
        %952 = vmatpush1.msra.mxu0 0.0
        %953 = vmatprep.subr.mxu0 0.0
        %954 = vmatpush1.msra.mxu0 0.0
        %955 = vmatprep.subr.mxu0 0.0
        %956 = vmatpush1.msra.mxu0 0.0
        %957 = vmatprep.subr.mxu0 0.0
        %958 = vmatpush1.msra.mxu0 0.0
        %959 = vmatprep.subr.mxu0 0.0
        %960 = vmatpush1.msra.mxu0 0.0
        %961 = vmatprep.subr.mxu0 0.0
        %962 = vmatpush1.msra.mxu0 0.0
        %963 = vmatprep.subr.mxu0 0.0
        %964 = vmatpush1.msra.mxu0 0.0
        %965 = vmatprep.subr.mxu0 0.0
        %966 = vmatpush1.msra.mxu0 %v933
        %967 = vmatprep.subr.mxu0 0.0
        %968 = vmatpush2.msra.mxu0 0.0
        %969 = vmatprep.subr.mxu0 0.0
        %970 = vmatpush2.msra.mxu0 0.0
        %971 = vmatprep.subr.mxu0 0.0
        %972 = vmatpush2.msra.mxu0 0.0
        %973 = vmatprep.subr.mxu0 0.0
        %974 = vmatpush2.msra.mxu0 0.0
        %975 = vmatprep.subr.mxu0 0.0
        %976 = vmatpush2.msra.mxu0 0.0
        %977 = vmatprep.subr.mxu0 0.0
        %978 = vmatpush2.msra.mxu0 0.0
        %979 = vmatprep.subr.mxu0 0.0
        %980 = vmatpush2.msra.mxu0 0.0
        %981 = vmatprep.subr.mxu0 0.0
        %982 = vmatpush2.msra.mxu0 0.0
        %983 = vmatprep.subr.mxu0 0.0
        %984 = vmatpush2.msra.mxu0 0.0
        %985 = vmatprep.subr.mxu0 0.0
        %986 = vmatpush2.msra.mxu0 0.0
        %987 = vmatprep.subr.mxu0 0.0
        %988 = vmatpush2.msra.mxu0 0.0
        %989 = vmatprep.subr.mxu0 0.0
        %990 = vmatpush2.msra.mxu0 0.0
        %991 = vmatprep.subr.mxu0 0.0
        %992 = vmatpush2.msra.mxu0 0.0
        %993 = vmatprep.subr.mxu0 0.0
        %994 = vmatpush2.msra.mxu0 0.0
        %995 = vmatprep.subr.mxu0 0.0
        %996 = vmatpush2.msra.mxu0 0.0
        %997 = vmatprep.subr.mxu0 0.0
        %998 = vmatpush2.msra.mxu0 0.0
        %999 = vmatprep.mubr.f32.mxu0 0.0
        %1000 = vmatmul.mubr.f32.gmra.mxu0 %v930
        %v1001 = vpop.f32.mrf.mxu0
        %v1002 = vadd.f32 %v761, %v1001
        %v1003 = vpop.f32.mrf.mxu0
        %1004 = vdwg.mxu0
        %1006 = vrot.lane.b32.xlu0 %v834, 124
        %v1007 = vpop.permute.xlu0 %1006
        %v1009 = vadd.f32 %v1002, %v1007
        %v1010 = vxor.u32 %v1009, 2147483648
        %v1011 = vmul.f32 %v1010, 1.442695
        %v1012 = vpow.pop %v1011
        %v1013 = vadd.f32 %v1012, 1.0
        %v1014 = vrcp.pop %v1013
        %v1015 = vmul.f32 1.0, %v1014
        %v1017 = vlaneseq
        %v1018 = vshrl.u32 %v1017, 7
        %v1019 = vsub.s32 0, %v1018
        %v1020 = vrot.slane %v752, %v1019
        %1021 = vrot.lane.b32.xlu0 %v1020, 68
        %v1022 = vpop.permute.xlu0 %1021
        %v1024 = vadd.f32 %v834, %v1022
        %1026 = vrot.lane.b32.xlu0 %v1024, 60
        %v1027 = vpop.permute.xlu0 %1026
        %v1029 = vmul.f32 %v1015, %v1027
        %1031 = vrot.lane.b32.xlu0 %v1029, 64
        %v1032 = vpop.permute.xlu0 %1031
        %v1034 = vadd.f32 %v1002, %v1032
        %v1035 = vtanh.pop %v1034
        %v1036 = vsub.f32 1.0, %v1015
        %1038 = vrot.lane.b32.xlu0 %v1035, 96
        %v1039 = vpop.permute.xlu0 %1038
        %v1041 = vmul.f32 %v1036, %v1039
        %v1042 = vlaneseq
        %v1043 = vshrl.u32 %v1042, 7
        %v1044 = vsub.s32 0, %v1043
        %v1045 = vrot.slane %v762, %v1044
        %1046 = vrot.lane.b32.xlu0 %v1045, 32
        %v1047 = vpop.permute.xlu0 %1046
        %v1049 = vmul.f32 %v1015, %v1047
        %v1050 = vadd.f32 %v1041, %v1049
        %vm1051 = vcmask 24576
        %1052 = vst.msk [vmem:[%s716] sm:$0x1] %vm1051, %v928
        %1053 = vst.msk [vmem:[%s723] sm:$0x1] %vm1051, %v917
        %v1054 = vsub.f32 %v757, %v926
        %v1055 = vand.u32 2147483647, %v1054
        %v1056 = vmul.f32 %v1055, %v758
        %v1057 = vsel %vm1051, %v1056, 0.0
        %1058 = vadd.xlane.f32.xlu0 %v1057
        %v1059 = vpop.xlane.xlu0 %1058
        %vm1060 = vcmask 0
        %1061 = vst.msk [vmem:[%s730] sm:$0x1] %vm1060, %v1059
        %v1062 = vsel %vm1051, %v758, 0.0
        %1063 = vadd.xlane.f32.xlu0 %v1062
        %v1064 = vpop.xlane.xlu0 %1063
        %1065 = vst.msk [vmem:[%s737] sm:$0x1] %vm1060, %v1064
        %v1066 = vld [vmem:[%s681 + $0x1] sm:$0x1]
        %v1067 = vld [vmem:[%s688 + $0x1] sm:$0x1]
        %v1068 = vld [vmem:[%s695 + $0x1] sm:$0x1]
        %v1069 = vld [vmem:[%s702 + $0x1] sm:$0x1]
        %v1070 = vld [vmem:[%s709 + $0x1] sm:$0x1]
        %1072 = vrot.lane.b32.xlu0 %v1069, 32
        %v1073 = vpop.permute.xlu0 %1072
        %v1075 = vmul.f32 %v1050, %v1073
        %1077 = vrot.lane.b32.xlu0 %v1075, 96
        %v1078 = vpop.permute.xlu0 %1077
        %v1079 = vsel %vm763, %v1078, 0
        %1081 = vmatprep.subr.mxu0 0.0
        %1082 = vmatpush1.msra.mxu0 0.0
        %1083 = vmatprep.subr.mxu0 0.0
        %1084 = vmatpush1.msra.mxu0 0.0
        %1085 = vmatprep.subr.mxu0 0.0
        %1086 = vmatpush1.msra.mxu0 0.0
        %1087 = vmatprep.subr.mxu0 0.0
        %1088 = vmatpush1.msra.mxu0 0.0
        %1089 = vmatprep.subr.mxu0 0.0
        %1090 = vmatpush1.msra.mxu0 0.0
        %1091 = vmatprep.subr.mxu0 0.0
        %1092 = vmatpush1.msra.mxu0 0.0
        %1093 = vmatprep.subr.mxu0 0.0
        %1094 = vmatpush1.msra.mxu0 0.0
        %1095 = vmatprep.subr.mxu0 0.0
        %1096 = vmatpush1.msra.mxu0 0.0
        %1097 = vmatprep.subr.mxu0 0.0
        %1098 = vmatpush1.msra.mxu0 0.0
        %1099 = vmatprep.subr.mxu0 0.0
        %1100 = vmatpush1.msra.mxu0 0.0
        %1101 = vmatprep.subr.mxu0 0.0
        %1102 = vmatpush1.msra.mxu0 0.0
        %1103 = vmatprep.subr.mxu0 0.0
        %1104 = vmatpush1.msra.mxu0 0.0
        %1105 = vmatprep.subr.mxu0 0.0
        %1106 = vmatpush1.msra.mxu0 %v747
        %1107 = vmatprep.subr.mxu0 0.0
        %1108 = vmatpush1.msra.mxu0 %v746
        %1109 = vmatprep.subr.mxu0 0.0
        %1110 = vmatpush1.msra.mxu0 %v745
        %1111 = vmatprep.subr.mxu0 0.0
        %1112 = vmatpush1.msra.mxu0 %v744
        %1113 = vmatprep.subr.mxu0 0.0
        %1114 = vmatpush2.msra.mxu0 0.0
        %1115 = vmatprep.subr.mxu0 0.0
        %1116 = vmatpush2.msra.mxu0 0.0
        %1117 = vmatprep.subr.mxu0 0.0
        %1118 = vmatpush2.msra.mxu0 0.0
        %1119 = vmatprep.subr.mxu0 0.0
        %1120 = vmatpush2.msra.mxu0 0.0
        %1121 = vmatprep.subr.mxu0 0.0
        %1122 = vmatpush2.msra.mxu0 0.0
        %1123 = vmatprep.subr.mxu0 0.0
        %1124 = vmatpush2.msra.mxu0 0.0
        %1125 = vmatprep.subr.mxu0 0.0
        %1126 = vmatpush2.msra.mxu0 0.0
        %1127 = vmatprep.subr.mxu0 0.0
        %1128 = vmatpush2.msra.mxu0 0.0
        %1129 = vmatprep.subr.mxu0 0.0
        %1130 = vmatpush2.msra.mxu0 0.0
        %1131 = vmatprep.subr.mxu0 0.0
        %1132 = vmatpush2.msra.mxu0 0.0
        %1133 = vmatprep.subr.mxu0 0.0
        %1134 = vmatpush2.msra.mxu0 0.0
        %1135 = vmatprep.subr.mxu0 0.0
        %1136 = vmatpush2.msra.mxu0 0.0
        %1137 = vmatprep.subr.mxu0 0.0
        %1138 = vmatpush2.msra.mxu0 0.0
        %1139 = vmatprep.subr.mxu0 0.0
        %1140 = vmatpush2.msra.mxu0 0.0
        %1141 = vmatprep.subr.mxu0 0.0
        %1142 = vmatpush2.msra.mxu0 0.0
        %1143 = vmatprep.subr.mxu0 0.0
        %1144 = vmatpush2.msra.mxu0 0.0
        %1145 = vmatprep.mubr.f32.mxu0 0.0
        %1146 = vmatmul.mubr.f32.gmra.mxu0 %v1079
        %v1147 = vpop.f32.mrf.mxu0
        %v1148 = vadd.f32 0.0, %v1147
        %v1149 = vpop.f32.mrf.mxu0
        %1150 = vdwg.mxu0
        %v1151 = vadd.f32 %v1148, %v748
        %v1152 = vsub.f32 1.0, %v1067
        %v1153 = vmul.f32 %v1067, %v1066
        %v1154 = vmul.f32 %v1152, %v1151
        %v1155 = vadd.f32 %v1153, %v1154
        %v1157 = vsel %vm842, %v1155, 0
        %1159 = vmatprep.subr.mxu0 0.0
        %1160 = vmatpush1.msra.mxu0 0.0
        %1161 = vmatprep.subr.mxu0 0.0
        %1162 = vmatpush1.msra.mxu0 0.0
        %1163 = vmatprep.subr.mxu0 0.0
        %1164 = vmatpush1.msra.mxu0 0.0
        %1165 = vmatprep.subr.mxu0 0.0
        %1166 = vmatpush1.msra.mxu0 0.0
        %1167 = vmatprep.subr.mxu0 0.0
        %1168 = vmatpush1.msra.mxu0 0.0
        %1169 = vmatprep.subr.mxu0 0.0
        %1170 = vmatpush1.msra.mxu0 0.0
        %1171 = vmatprep.subr.mxu0 0.0
        %1172 = vmatpush1.msra.mxu0 0.0
        %1173 = vmatprep.subr.mxu0 0.0
        %1174 = vmatpush1.msra.mxu0 0.0
        %1175 = vmatprep.subr.mxu0 0.0
        %1176 = vmatpush1.msra.mxu0 0.0
        %1177 = vmatprep.subr.mxu0 0.0
        %1178 = vmatpush1.msra.mxu0 0.0
        %1179 = vmatprep.subr.mxu0 0.0
        %1180 = vmatpush1.msra.mxu0 0.0
        %1181 = vmatprep.subr.mxu0 0.0
        %1182 = vmatpush1.msra.mxu0 0.0
        %1183 = vmatprep.subr.mxu0 0.0
        %1184 = vmatpush1.msra.mxu0 0.0
        %1185 = vmatprep.subr.mxu0 0.0
        %1186 = vmatpush1.msra.mxu0 0.0
        %1187 = vmatprep.subr.mxu0 0.0
        %1188 = vmatpush1.msra.mxu0 0.0
        %1189 = vmatprep.subr.mxu0 0.0
        %1190 = vmatpush1.msra.mxu0 %v848
        %1191 = vmatprep.subr.mxu0 0.0
        %1192 = vmatpush2.msra.mxu0 0.0
        %1193 = vmatprep.subr.mxu0 0.0
        %1194 = vmatpush2.msra.mxu0 0.0
        %1195 = vmatprep.subr.mxu0 0.0
        %1196 = vmatpush2.msra.mxu0 0.0
        %1197 = vmatprep.subr.mxu0 0.0
        %1198 = vmatpush2.msra.mxu0 0.0
        %1199 = vmatprep.subr.mxu0 0.0
        %1200 = vmatpush2.msra.mxu0 0.0
        %1201 = vmatprep.subr.mxu0 0.0
        %1202 = vmatpush2.msra.mxu0 0.0
        %1203 = vmatprep.subr.mxu0 0.0
        %1204 = vmatpush2.msra.mxu0 0.0
        %1205 = vmatprep.subr.mxu0 0.0
        %1206 = vmatpush2.msra.mxu0 0.0
        %1207 = vmatprep.subr.mxu0 0.0
        %1208 = vmatpush2.msra.mxu0 0.0
        %1209 = vmatprep.subr.mxu0 0.0
        %1210 = vmatpush2.msra.mxu0 0.0
        %1211 = vmatprep.subr.mxu0 0.0
        %1212 = vmatpush2.msra.mxu0 0.0
        %1213 = vmatprep.subr.mxu0 0.0
        %1214 = vmatpush2.msra.mxu0 0.0
        %1215 = vmatprep.subr.mxu0 0.0
        %1216 = vmatpush2.msra.mxu0 0.0
        %1217 = vmatprep.subr.mxu0 0.0
        %1218 = vmatpush2.msra.mxu0 0.0
        %1219 = vmatprep.subr.mxu0 0.0
        %1220 = vmatpush2.msra.mxu0 0.0
        %1221 = vmatprep.subr.mxu0 0.0
        %1222 = vmatpush2.msra.mxu0 0.0
        %1223 = vmatprep.mubr.f32.mxu0 0.0
        %1224 = vmatmul.mubr.f32.gmra.mxu0 %v1157
        %v1225 = vpop.f32.mrf.mxu0
        %v1226 = vadd.f32 %v750, %v1225
        %v1227 = vpop.f32.mrf.mxu0
        %1228 = vdwg.mxu0
        %v1229 = vmul.f32 %v920, %v1068
        %v1230 = vmul.f32 %v922, %v1226
        %v1231 = vadd.f32 %v1229, %v1230
        %v1232 = vadd.f32 %v1231, %v925
        %v1233 = vmul.f32 %v1152, %v1232
        %v1234 = vadd.f32 %v1153, %v1233
        %v1236 = vsel %vm842, %v1234, 0
        %1238 = vmatprep.subr.mxu0 0.0
        %1239 = vmatpush1.msra.mxu0 0.0
        %1240 = vmatprep.subr.mxu0 0.0
        %1241 = vmatpush1.msra.mxu0 0.0
        %1242 = vmatprep.subr.mxu0 0.0
        %1243 = vmatpush1.msra.mxu0 0.0
        %1244 = vmatprep.subr.mxu0 0.0
        %1245 = vmatpush1.msra.mxu0 0.0
        %1246 = vmatprep.subr.mxu0 0.0
        %1247 = vmatpush1.msra.mxu0 0.0
        %1248 = vmatprep.subr.mxu0 0.0
        %1249 = vmatpush1.msra.mxu0 0.0
        %1250 = vmatprep.subr.mxu0 0.0
        %1251 = vmatpush1.msra.mxu0 0.0
        %1252 = vmatprep.subr.mxu0 0.0
        %1253 = vmatpush1.msra.mxu0 0.0
        %1254 = vmatprep.subr.mxu0 0.0
        %1255 = vmatpush1.msra.mxu0 0.0
        %1256 = vmatprep.subr.mxu0 0.0
        %1257 = vmatpush1.msra.mxu0 0.0
        %1258 = vmatprep.subr.mxu0 0.0
        %1259 = vmatpush1.msra.mxu0 0.0
        %1260 = vmatprep.subr.mxu0 0.0
        %1261 = vmatpush1.msra.mxu0 0.0
        %1262 = vmatprep.subr.mxu0 0.0
        %1263 = vmatpush1.msra.mxu0 0.0
        %1264 = vmatprep.subr.mxu0 0.0
        %1265 = vmatpush1.msra.mxu0 0.0
        %1266 = vmatprep.subr.mxu0 0.0
        %1267 = vmatpush1.msra.mxu0 0.0
        %1268 = vmatprep.subr.mxu0 0.0
        %1269 = vmatpush1.msra.mxu0 %v933
        %1270 = vmatprep.subr.mxu0 0.0
        %1271 = vmatpush2.msra.mxu0 0.0
        %1272 = vmatprep.subr.mxu0 0.0
        %1273 = vmatpush2.msra.mxu0 0.0
        %1274 = vmatprep.subr.mxu0 0.0
        %1275 = vmatpush2.msra.mxu0 0.0
        %1276 = vmatprep.subr.mxu0 0.0
        %1277 = vmatpush2.msra.mxu0 0.0
        %1278 = vmatprep.subr.mxu0 0.0
        %1279 = vmatpush2.msra.mxu0 0.0
        %1280 = vmatprep.subr.mxu0 0.0
        %1281 = vmatpush2.msra.mxu0 0.0
        %1282 = vmatprep.subr.mxu0 0.0
        %1283 = vmatpush2.msra.mxu0 0.0
        %1284 = vmatprep.subr.mxu0 0.0
        %1285 = vmatpush2.msra.mxu0 0.0
        %1286 = vmatprep.subr.mxu0 0.0
        %1287 = vmatpush2.msra.mxu0 0.0
        %1288 = vmatprep.subr.mxu0 0.0
        %1289 = vmatpush2.msra.mxu0 0.0
        %1290 = vmatprep.subr.mxu0 0.0
        %1291 = vmatpush2.msra.mxu0 0.0
        %1292 = vmatprep.subr.mxu0 0.0
        %1293 = vmatpush2.msra.mxu0 0.0
        %1294 = vmatprep.subr.mxu0 0.0
        %1295 = vmatpush2.msra.mxu0 0.0
        %1296 = vmatprep.subr.mxu0 0.0
        %1297 = vmatpush2.msra.mxu0 0.0
        %1298 = vmatprep.subr.mxu0 0.0
        %1299 = vmatpush2.msra.mxu0 0.0
        %1300 = vmatprep.subr.mxu0 0.0
        %1301 = vmatpush2.msra.mxu0 0.0
        %1302 = vmatprep.mubr.f32.mxu0 0.0
        %1303 = vmatmul.mubr.f32.gmra.mxu0 %v1236
        %v1304 = vpop.f32.mrf.mxu0
        %v1305 = vadd.f32 %v1070, %v1304
        %v1306 = vpop.f32.mrf.mxu0
        %1307 = vdwg.mxu0
        %1309 = vrot.lane.b32.xlu0 %v1148, 124
        %v1310 = vpop.permute.xlu0 %1309
        %v1312 = vadd.f32 %v1305, %v1310
        %v1313 = vxor.u32 %v1312, 2147483648
        %v1314 = vmul.f32 %v1313, 1.442695
        %v1315 = vpow.pop %v1314
        %v1316 = vadd.f32 %v1315, 1.0
        %v1317 = vrcp.pop %v1316
        %v1318 = vmul.f32 1.0, %v1317
        %v1319 = vadd.f32 %v1148, %v1022
        %1321 = vrot.lane.b32.xlu0 %v1319, 60
        %v1322 = vpop.permute.xlu0 %1321
        %v1324 = vmul.f32 %v1318, %v1322
        %1326 = vrot.lane.b32.xlu0 %v1324, 64
        %v1327 = vpop.permute.xlu0 %1326
        %v1329 = vadd.f32 %v1305, %v1327
        %v1330 = vtanh.pop %v1329
        %v1331 = vsub.f32 1.0, %v1318
        %1333 = vrot.lane.b32.xlu0 %v1330, 96
        %v1334 = vpop.permute.xlu0 %1333
        %v1336 = vmul.f32 %v1331, %v1334
        %v1337 = vmul.f32 %v1318, %v1075
        %v1338 = vadd.f32 %v1336, %v1337
        %1339 = vst.msk [vmem:[%s716 + $0x1] sm:$0x1] %vm1051, %v1234
        %1340 = vst.msk [vmem:[%s723 + $0x1] sm:$0x1] %vm1051, %v1226
        %v1341 = vsub.f32 %v1066, %v1232
        %v1342 = vand.u32 2147483647, %v1341
        %v1343 = vmul.f32 %v1342, %v1067
        %v1344 = vsel %vm1051, %v1343, 0.0
        %1345 = vadd.xlane.f32.xlu0 %v1344
        %v1346 = vpop.xlane.xlu0 %1345
        %1347 = vst.msk [vmem:[%s730 + $0x1] sm:$0x1] %vm1060, %v1346
        %v1348 = vsel %vm1051, %v1067, 0.0
        %1349 = vadd.xlane.f32.xlu0 %v1348
        %v1350 = vpop.xlane.xlu0 %1349
        %1351 = vst.msk [vmem:[%s737 + $0x1] sm:$0x1] %vm1060, %v1350
        %v1352 = vld [vmem:[%s681 + $0x2] sm:$0x1]
        %v1353 = vld [vmem:[%s688 + $0x2] sm:$0x1]
        %v1354 = vld [vmem:[%s695 + $0x2] sm:$0x1]
        %v1355 = vld [vmem:[%s702 + $0x2] sm:$0x1]
        %v1356 = vld [vmem:[%s709 + $0x2] sm:$0x1]
        %1358 = vrot.lane.b32.xlu0 %v1355, 32
        %v1359 = vpop.permute.xlu0 %1358
        %v1361 = vmul.f32 %v1338, %v1359
        %1363 = vrot.lane.b32.xlu0 %v1361, 96
        %v1364 = vpop.permute.xlu0 %1363
        %v1365 = vsel %vm763, %v1364, 0
        %1367 = vmatprep.subr.mxu0 0.0
        %1368 = vmatpush1.msra.mxu0 0.0
        %1369 = vmatprep.subr.mxu0 0.0
        %1370 = vmatpush1.msra.mxu0 0.0
        %1371 = vmatprep.subr.mxu0 0.0
        %1372 = vmatpush1.msra.mxu0 0.0
        %1373 = vmatprep.subr.mxu0 0.0
        %1374 = vmatpush1.msra.mxu0 0.0
        %1375 = vmatprep.subr.mxu0 0.0
        %1376 = vmatpush1.msra.mxu0 0.0
        %1377 = vmatprep.subr.mxu0 0.0
        %1378 = vmatpush1.msra.mxu0 0.0
        %1379 = vmatprep.subr.mxu0 0.0
        %1380 = vmatpush1.msra.mxu0 0.0
        %1381 = vmatprep.subr.mxu0 0.0
        %1382 = vmatpush1.msra.mxu0 0.0
        %1383 = vmatprep.subr.mxu0 0.0
        %1384 = vmatpush1.msra.mxu0 0.0
        %1385 = vmatprep.subr.mxu0 0.0
        %1386 = vmatpush1.msra.mxu0 0.0
        %1387 = vmatprep.subr.mxu0 0.0
        %1388 = vmatpush1.msra.mxu0 0.0
        %1389 = vmatprep.subr.mxu0 0.0
        %1390 = vmatpush1.msra.mxu0 0.0
        %1391 = vmatprep.subr.mxu0 0.0
        %1392 = vmatpush1.msra.mxu0 %v747
        %1393 = vmatprep.subr.mxu0 0.0
        %1394 = vmatpush1.msra.mxu0 %v746
        %1395 = vmatprep.subr.mxu0 0.0
        %1396 = vmatpush1.msra.mxu0 %v745
        %1397 = vmatprep.subr.mxu0 0.0
        %1398 = vmatpush1.msra.mxu0 %v744
        %1399 = vmatprep.subr.mxu0 0.0
        %1400 = vmatpush2.msra.mxu0 0.0
        %1401 = vmatprep.subr.mxu0 0.0
        %1402 = vmatpush2.msra.mxu0 0.0
        %1403 = vmatprep.subr.mxu0 0.0
        %1404 = vmatpush2.msra.mxu0 0.0
        %1405 = vmatprep.subr.mxu0 0.0
        %1406 = vmatpush2.msra.mxu0 0.0
        %1407 = vmatprep.subr.mxu0 0.0
        %1408 = vmatpush2.msra.mxu0 0.0
        %1409 = vmatprep.subr.mxu0 0.0
        %1410 = vmatpush2.msra.mxu0 0.0
        %1411 = vmatprep.subr.mxu0 0.0
        %1412 = vmatpush2.msra.mxu0 0.0
        %1413 = vmatprep.subr.mxu0 0.0
        %1414 = vmatpush2.msra.mxu0 0.0
        %1415 = vmatprep.subr.mxu0 0.0
        %1416 = vmatpush2.msra.mxu0 0.0
        %1417 = vmatprep.subr.mxu0 0.0
        %1418 = vmatpush2.msra.mxu0 0.0
        %1419 = vmatprep.subr.mxu0 0.0
        %1420 = vmatpush2.msra.mxu0 0.0
        %1421 = vmatprep.subr.mxu0 0.0
        %1422 = vmatpush2.msra.mxu0 0.0
        %1423 = vmatprep.subr.mxu0 0.0
        %1424 = vmatpush2.msra.mxu0 0.0
        %1425 = vmatprep.subr.mxu0 0.0
        %1426 = vmatpush2.msra.mxu0 0.0
        %1427 = vmatprep.subr.mxu0 0.0
        %1428 = vmatpush2.msra.mxu0 0.0
        %1429 = vmatprep.subr.mxu0 0.0
        %1430 = vmatpush2.msra.mxu0 0.0
        %1431 = vmatprep.mubr.f32.mxu0 0.0
        %1432 = vmatmul.mubr.f32.gmra.mxu0 %v1365
        %v1433 = vpop.f32.mrf.mxu0
        %v1434 = vadd.f32 0.0, %v1433
        %v1435 = vpop.f32.mrf.mxu0
        %1436 = vdwg.mxu0
        %v1437 = vadd.f32 %v1434, %v748
        %v1438 = vsub.f32 1.0, %v1353
        %v1439 = vmul.f32 %v1353, %v1352
        %v1440 = vmul.f32 %v1438, %v1437
        %v1441 = vadd.f32 %v1439, %v1440
        %v1443 = vsel %vm842, %v1441, 0
        %1445 = vmatprep.subr.mxu0 0.0
        %1446 = vmatpush1.msra.mxu0 0.0
        %1447 = vmatprep.subr.mxu0 0.0
        %1448 = vmatpush1.msra.mxu0 0.0
        %1449 = vmatprep.subr.mxu0 0.0
        %1450 = vmatpush1.msra.mxu0 0.0
        %1451 = vmatprep.subr.mxu0 0.0
        %1452 = vmatpush1.msra.mxu0 0.0
        %1453 = vmatprep.subr.mxu0 0.0
        %1454 = vmatpush1.msra.mxu0 0.0
        %1455 = vmatprep.subr.mxu0 0.0
        %1456 = vmatpush1.msra.mxu0 0.0
        %1457 = vmatprep.subr.mxu0 0.0
        %1458 = vmatpush1.msra.mxu0 0.0
        %1459 = vmatprep.subr.mxu0 0.0
        %1460 = vmatpush1.msra.mxu0 0.0
        %1461 = vmatprep.subr.mxu0 0.0
        %1462 = vmatpush1.msra.mxu0 0.0
        %1463 = vmatprep.subr.mxu0 0.0
        %1464 = vmatpush1.msra.mxu0 0.0
        %1465 = vmatprep.subr.mxu0 0.0
        %1466 = vmatpush1.msra.mxu0 0.0
        %1467 = vmatprep.subr.mxu0 0.0
        %1468 = vmatpush1.msra.mxu0 0.0
        %1469 = vmatprep.subr.mxu0 0.0
        %1470 = vmatpush1.msra.mxu0 0.0
        %1471 = vmatprep.subr.mxu0 0.0
        %1472 = vmatpush1.msra.mxu0 0.0
        %1473 = vmatprep.subr.mxu0 0.0
        %1474 = vmatpush1.msra.mxu0 0.0
        %1475 = vmatprep.subr.mxu0 0.0
        %1476 = vmatpush1.msra.mxu0 %v848
        %1477 = vmatprep.subr.mxu0 0.0
        %1478 = vmatpush2.msra.mxu0 0.0
        %1479 = vmatprep.subr.mxu0 0.0
        %1480 = vmatpush2.msra.mxu0 0.0
        %1481 = vmatprep.subr.mxu0 0.0
        %1482 = vmatpush2.msra.mxu0 0.0
        %1483 = vmatprep.subr.mxu0 0.0
        %1484 = vmatpush2.msra.mxu0 0.0
        %1485 = vmatprep.subr.mxu0 0.0
        %1486 = vmatpush2.msra.mxu0 0.0
        %1487 = vmatprep.subr.mxu0 0.0
        %1488 = vmatpush2.msra.mxu0 0.0
        %1489 = vmatprep.subr.mxu0 0.0
        %1490 = vmatpush2.msra.mxu0 0.0
        %1491 = vmatprep.subr.mxu0 0.0
        %1492 = vmatpush2.msra.mxu0 0.0
        %1493 = vmatprep.subr.mxu0 0.0
        %1494 = vmatpush2.msra.mxu0 0.0
        %1495 = vmatprep.subr.mxu0 0.0
        %1496 = vmatpush2.msra.mxu0 0.0
        %1497 = vmatprep.subr.mxu0 0.0
        %1498 = vmatpush2.msra.mxu0 0.0
        %1499 = vmatprep.subr.mxu0 0.0
        %1500 = vmatpush2.msra.mxu0 0.0
        %1501 = vmatprep.subr.mxu0 0.0
        %1502 = vmatpush2.msra.mxu0 0.0
        %1503 = vmatprep.subr.mxu0 0.0
        %1504 = vmatpush2.msra.mxu0 0.0
        %1505 = vmatprep.subr.mxu0 0.0
        %1506 = vmatpush2.msra.mxu0 0.0
        %1507 = vmatprep.subr.mxu0 0.0
        %1508 = vmatpush2.msra.mxu0 0.0
        %1509 = vmatprep.mubr.f32.mxu0 0.0
        %1510 = vmatmul.mubr.f32.gmra.mxu0 %v1443
        %v1511 = vpop.f32.mrf.mxu0
        %v1512 = vadd.f32 %v750, %v1511
        %v1513 = vpop.f32.mrf.mxu0
        %1514 = vdwg.mxu0
        %v1515 = vmul.f32 %v920, %v1354
        %v1516 = vmul.f32 %v922, %v1512
        %v1517 = vadd.f32 %v1515, %v1516
        %v1518 = vadd.f32 %v1517, %v925
        %v1519 = vmul.f32 %v1438, %v1518
        %v1520 = vadd.f32 %v1439, %v1519
        %v1522 = vsel %vm842, %v1520, 0
        %1524 = vmatprep.subr.mxu0 0.0
        %1525 = vmatpush1.msra.mxu0 0.0
        %1526 = vmatprep.subr.mxu0 0.0
        %1527 = vmatpush1.msra.mxu0 0.0
        %1528 = vmatprep.subr.mxu0 0.0
        %1529 = vmatpush1.msra.mxu0 0.0
        %1530 = vmatprep.subr.mxu0 0.0
        %1531 = vmatpush1.msra.mxu0 0.0
        %1532 = vmatprep.subr.mxu0 0.0
        %1533 = vmatpush1.msra.mxu0 0.0
        %1534 = vmatprep.subr.mxu0 0.0
        %1535 = vmatpush1.msra.mxu0 0.0
        %1536 = vmatprep.subr.mxu0 0.0
        %1537 = vmatpush1.msra.mxu0 0.0
        %1538 = vmatprep.subr.mxu0 0.0
        %1539 = vmatpush1.msra.mxu0 0.0
        %1540 = vmatprep.subr.mxu0 0.0
        %1541 = vmatpush1.msra.mxu0 0.0
        %1542 = vmatprep.subr.mxu0 0.0
        %1543 = vmatpush1.msra.mxu0 0.0
        %1544 = vmatprep.subr.mxu0 0.0
        %1545 = vmatpush1.msra.mxu0 0.0
        %1546 = vmatprep.subr.mxu0 0.0
        %1547 = vmatpush1.msra.mxu0 0.0
        %1548 = vmatprep.subr.mxu0 0.0
        %1549 = vmatpush1.msra.mxu0 0.0
        %1550 = vmatprep.subr.mxu0 0.0
        %1551 = vmatpush1.msra.mxu0 0.0
        %1552 = vmatprep.subr.mxu0 0.0
        %1553 = vmatpush1.msra.mxu0 0.0
        %1554 = vmatprep.subr.mxu0 0.0
        %1555 = vmatpush1.msra.mxu0 %v933
        %1556 = vmatprep.subr.mxu0 0.0
        %1557 = vmatpush2.msra.mxu0 0.0
        %1558 = vmatprep.subr.mxu0 0.0
        %1559 = vmatpush2.msra.mxu0 0.0
        %1560 = vmatprep.subr.mxu0 0.0
        %1561 = vmatpush2.msra.mxu0 0.0
        %1562 = vmatprep.subr.mxu0 0.0
        %1563 = vmatpush2.msra.mxu0 0.0
        %1564 = vmatprep.subr.mxu0 0.0
        %1565 = vmatpush2.msra.mxu0 0.0
        %1566 = vmatprep.subr.mxu0 0.0
        %1567 = vmatpush2.msra.mxu0 0.0
        %1568 = vmatprep.subr.mxu0 0.0
        %1569 = vmatpush2.msra.mxu0 0.0
        %1570 = vmatprep.subr.mxu0 0.0
        %1571 = vmatpush2.msra.mxu0 0.0
        %1572 = vmatprep.subr.mxu0 0.0
        %1573 = vmatpush2.msra.mxu0 0.0
        %1574 = vmatprep.subr.mxu0 0.0
        %1575 = vmatpush2.msra.mxu0 0.0
        %1576 = vmatprep.subr.mxu0 0.0
        %1577 = vmatpush2.msra.mxu0 0.0
        %1578 = vmatprep.subr.mxu0 0.0
        %1579 = vmatpush2.msra.mxu0 0.0
        %1580 = vmatprep.subr.mxu0 0.0
        %1581 = vmatpush2.msra.mxu0 0.0
        %1582 = vmatprep.subr.mxu0 0.0
        %1583 = vmatpush2.msra.mxu0 0.0
        %1584 = vmatprep.subr.mxu0 0.0
        %1585 = vmatpush2.msra.mxu0 0.0
        %1586 = vmatprep.subr.mxu0 0.0
        %1587 = vmatpush2.msra.mxu0 0.0
        %1588 = vmatprep.mubr.f32.mxu0 0.0
        %1589 = vmatmul.mubr.f32.gmra.mxu0 %v1522
        %v1590 = vpop.f32.mrf.mxu0
        %v1591 = vadd.f32 %v1356, %v1590
        %v1592 = vpop.f32.mrf.mxu0
        %1593 = vdwg.mxu0
        %1595 = vrot.lane.b32.xlu0 %v1434, 124
        %v1596 = vpop.permute.xlu0 %1595
        %v1598 = vadd.f32 %v1591, %v1596
        %v1599 = vxor.u32 %v1598, 2147483648
        %v1600 = vmul.f32 %v1599, 1.442695
        %v1601 = vpow.pop %v1600
        %v1602 = vadd.f32 %v1601, 1.0
        %v1603 = vrcp.pop %v1602
        %v1604 = vmul.f32 1.0, %v1603
        %v1605 = vadd.f32 %v1434, %v1022
        %1607 = vrot.lane.b32.xlu0 %v1605, 60
        %v1608 = vpop.permute.xlu0 %1607
        %v1610 = vmul.f32 %v1604, %v1608
        %1612 = vrot.lane.b32.xlu0 %v1610, 64
        %v1613 = vpop.permute.xlu0 %1612
        %v1615 = vadd.f32 %v1591, %v1613
        %v1616 = vtanh.pop %v1615
        %v1617 = vsub.f32 1.0, %v1604
        %1619 = vrot.lane.b32.xlu0 %v1616, 96
        %v1620 = vpop.permute.xlu0 %1619
        %v1622 = vmul.f32 %v1617, %v1620
        %v1623 = vmul.f32 %v1604, %v1361
        %v1624 = vadd.f32 %v1622, %v1623
        %1625 = vst.msk [vmem:[%s716 + $0x2] sm:$0x1] %vm1051, %v1520
        %1626 = vst.msk [vmem:[%s723 + $0x2] sm:$0x1] %vm1051, %v1512
        %v1627 = vsub.f32 %v1352, %v1518
        %v1628 = vand.u32 2147483647, %v1627
        %v1629 = vmul.f32 %v1628, %v1353
        %v1630 = vsel %vm1051, %v1629, 0.0
        %1631 = vadd.xlane.f32.xlu0 %v1630
        %v1632 = vpop.xlane.xlu0 %1631
        %1633 = vst.msk [vmem:[%s730 + $0x2] sm:$0x1] %vm1060, %v1632
        %v1634 = vsel %vm1051, %v1353, 0.0
        %1635 = vadd.xlane.f32.xlu0 %v1634
        %v1636 = vpop.xlane.xlu0 %1635
        %1637 = vst.msk [vmem:[%s737 + $0x2] sm:$0x1] %vm1060, %v1636
        %v1638 = vld [vmem:[%s681 + $0x3] sm:$0x1]
        %v1639 = vld [vmem:[%s688 + $0x3] sm:$0x1]
        %v1640 = vld [vmem:[%s695 + $0x3] sm:$0x1]
        %v1641 = vld [vmem:[%s702 + $0x3] sm:$0x1]
        %v1642 = vld [vmem:[%s709 + $0x3] sm:$0x1]
        %1644 = vrot.lane.b32.xlu0 %v1641, 32
        %v1645 = vpop.permute.xlu0 %1644
        %v1647 = vmul.f32 %v1624, %v1645
        %1649 = vrot.lane.b32.xlu0 %v1647, 96
        %v1650 = vpop.permute.xlu0 %1649
        %v1651 = vsel %vm763, %v1650, 0
        %1653 = vmatprep.subr.mxu0 0.0
        %1654 = vmatpush1.msra.mxu0 0.0
        %1655 = vmatprep.subr.mxu0 0.0
        %1656 = vmatpush1.msra.mxu0 0.0
        %1657 = vmatprep.subr.mxu0 0.0
        %1658 = vmatpush1.msra.mxu0 0.0
        %1659 = vmatprep.subr.mxu0 0.0
        %1660 = vmatpush1.msra.mxu0 0.0
        %1661 = vmatprep.subr.mxu0 0.0
        %1662 = vmatpush1.msra.mxu0 0.0
        %1663 = vmatprep.subr.mxu0 0.0
        %1664 = vmatpush1.msra.mxu0 0.0
        %1665 = vmatprep.subr.mxu0 0.0
        %1666 = vmatpush1.msra.mxu0 0.0
        %1667 = vmatprep.subr.mxu0 0.0
        %1668 = vmatpush1.msra.mxu0 0.0
        %1669 = vmatprep.subr.mxu0 0.0
        %1670 = vmatpush1.msra.mxu0 0.0
        %1671 = vmatprep.subr.mxu0 0.0
        %1672 = vmatpush1.msra.mxu0 0.0
        %1673 = vmatprep.subr.mxu0 0.0
        %1674 = vmatpush1.msra.mxu0 0.0
        %1675 = vmatprep.subr.mxu0 0.0
        %1676 = vmatpush1.msra.mxu0 0.0
        %1677 = vmatprep.subr.mxu0 0.0
        %1678 = vmatpush1.msra.mxu0 %v747
        %1679 = vmatprep.subr.mxu0 0.0
        %1680 = vmatpush1.msra.mxu0 %v746
        %1681 = vmatprep.subr.mxu0 0.0
        %1682 = vmatpush1.msra.mxu0 %v745
        %1683 = vmatprep.subr.mxu0 0.0
        %1684 = vmatpush1.msra.mxu0 %v744
        %1685 = vmatprep.subr.mxu0 0.0
        %1686 = vmatpush2.msra.mxu0 0.0
        %1687 = vmatprep.subr.mxu0 0.0
        %1688 = vmatpush2.msra.mxu0 0.0
        %1689 = vmatprep.subr.mxu0 0.0
        %1690 = vmatpush2.msra.mxu0 0.0
        %1691 = vmatprep.subr.mxu0 0.0
        %1692 = vmatpush2.msra.mxu0 0.0
        %1693 = vmatprep.subr.mxu0 0.0
        %1694 = vmatpush2.msra.mxu0 0.0
        %1695 = vmatprep.subr.mxu0 0.0
        %1696 = vmatpush2.msra.mxu0 0.0
        %1697 = vmatprep.subr.mxu0 0.0
        %1698 = vmatpush2.msra.mxu0 0.0
        %1699 = vmatprep.subr.mxu0 0.0
        %1700 = vmatpush2.msra.mxu0 0.0
        %1701 = vmatprep.subr.mxu0 0.0
        %1702 = vmatpush2.msra.mxu0 0.0
        %1703 = vmatprep.subr.mxu0 0.0
        %1704 = vmatpush2.msra.mxu0 0.0
        %1705 = vmatprep.subr.mxu0 0.0
        %1706 = vmatpush2.msra.mxu0 0.0
        %1707 = vmatprep.subr.mxu0 0.0
        %1708 = vmatpush2.msra.mxu0 0.0
        %1709 = vmatprep.subr.mxu0 0.0
        %1710 = vmatpush2.msra.mxu0 0.0
        %1711 = vmatprep.subr.mxu0 0.0
        %1712 = vmatpush2.msra.mxu0 0.0
        %1713 = vmatprep.subr.mxu0 0.0
        %1714 = vmatpush2.msra.mxu0 0.0
        %1715 = vmatprep.subr.mxu0 0.0
        %1716 = vmatpush2.msra.mxu0 0.0
        %1717 = vmatprep.mubr.f32.mxu0 0.0
        %1718 = vmatmul.mubr.f32.gmra.mxu0 %v1651
        %v1719 = vpop.f32.mrf.mxu0
        %v1720 = vadd.f32 0.0, %v1719
        %v1721 = vpop.f32.mrf.mxu0
        %1722 = vdwg.mxu0
        %v1723 = vadd.f32 %v1720, %v748
        %v1724 = vsub.f32 1.0, %v1639
        %v1725 = vmul.f32 %v1639, %v1638
        %v1726 = vmul.f32 %v1724, %v1723
        %v1727 = vadd.f32 %v1725, %v1726
        %v1729 = vsel %vm842, %v1727, 0
        %1731 = vmatprep.subr.mxu0 0.0
        %1732 = vmatpush1.msra.mxu0 0.0
        %1733 = vmatprep.subr.mxu0 0.0
        %1734 = vmatpush1.msra.mxu0 0.0
        %1735 = vmatprep.subr.mxu0 0.0
        %1736 = vmatpush1.msra.mxu0 0.0
        %1737 = vmatprep.subr.mxu0 0.0
        %1738 = vmatpush1.msra.mxu0 0.0
        %1739 = vmatprep.subr.mxu0 0.0
        %1740 = vmatpush1.msra.mxu0 0.0
        %1741 = vmatprep.subr.mxu0 0.0
        %1742 = vmatpush1.msra.mxu0 0.0
        %1743 = vmatprep.subr.mxu0 0.0
        %1744 = vmatpush1.msra.mxu0 0.0
        %1745 = vmatprep.subr.mxu0 0.0
        %1746 = vmatpush1.msra.mxu0 0.0
        %1747 = vmatprep.subr.mxu0 0.0
        %1748 = vmatpush1.msra.mxu0 0.0
        %1749 = vmatprep.subr.mxu0 0.0
        %1750 = vmatpush1.msra.mxu0 0.0
        %1751 = vmatprep.subr.mxu0 0.0
        %1752 = vmatpush1.msra.mxu0 0.0
        %1753 = vmatprep.subr.mxu0 0.0
        %1754 = vmatpush1.msra.mxu0 0.0
        %1755 = vmatprep.subr.mxu0 0.0
        %1756 = vmatpush1.msra.mxu0 0.0
        %1757 = vmatprep.subr.mxu0 0.0
        %1758 = vmatpush1.msra.mxu0 0.0
        %1759 = vmatprep.subr.mxu0 0.0
        %1760 = vmatpush1.msra.mxu0 0.0
        %1761 = vmatprep.subr.mxu0 0.0
        %1762 = vmatpush1.msra.mxu0 %v848
        %1763 = vmatprep.subr.mxu0 0.0
        %1764 = vmatpush2.msra.mxu0 0.0
        %1765 = vmatprep.subr.mxu0 0.0
        %1766 = vmatpush2.msra.mxu0 0.0
        %1767 = vmatprep.subr.mxu0 0.0
        %1768 = vmatpush2.msra.mxu0 0.0
        %1769 = vmatprep.subr.mxu0 0.0
        %1770 = vmatpush2.msra.mxu0 0.0
        %1771 = vmatprep.subr.mxu0 0.0
        %1772 = vmatpush2.msra.mxu0 0.0
        %1773 = vmatprep.subr.mxu0 0.0
        %1774 = vmatpush2.msra.mxu0 0.0
        %1775 = vmatprep.subr.mxu0 0.0
        %1776 = vmatpush2.msra.mxu0 0.0
        %1777 = vmatprep.subr.mxu0 0.0
        %1778 = vmatpush2.msra.mxu0 0.0
        %1779 = vmatprep.subr.mxu0 0.0
        %1780 = vmatpush2.msra.mxu0 0.0
        %1781 = vmatprep.subr.mxu0 0.0
        %1782 = vmatpush2.msra.mxu0 0.0
        %1783 = vmatprep.subr.mxu0 0.0
        %1784 = vmatpush2.msra.mxu0 0.0
        %1785 = vmatprep.subr.mxu0 0.0
        %1786 = vmatpush2.msra.mxu0 0.0
        %1787 = vmatprep.subr.mxu0 0.0
        %1788 = vmatpush2.msra.mxu0 0.0
        %1789 = vmatprep.subr.mxu0 0.0
        %1790 = vmatpush2.msra.mxu0 0.0
        %1791 = vmatprep.subr.mxu0 0.0
        %1792 = vmatpush2.msra.mxu0 0.0
        %1793 = vmatprep.subr.mxu0 0.0
        %1794 = vmatpush2.msra.mxu0 0.0
        %1795 = vmatprep.mubr.f32.mxu0 0.0
        %1796 = vmatmul.mubr.f32.gmra.mxu0 %v1729
        %v1797 = vpop.f32.mrf.mxu0
        %v1798 = vadd.f32 %v750, %v1797
        %v1799 = vpop.f32.mrf.mxu0
        %1800 = vdwg.mxu0
        %v1801 = vmul.f32 %v920, %v1640
        %v1802 = vmul.f32 %v922, %v1798
        %v1803 = vadd.f32 %v1801, %v1802
        %v1804 = vadd.f32 %v1803, %v925
        %v1805 = vmul.f32 %v1724, %v1804
        %v1806 = vadd.f32 %v1725, %v1805
        %v1808 = vsel %vm842, %v1806, 0
        %1810 = vmatprep.subr.mxu0 0.0
        %1811 = vmatpush1.msra.mxu0 0.0
        %1812 = vmatprep.subr.mxu0 0.0
        %1813 = vmatpush1.msra.mxu0 0.0
        %1814 = vmatprep.subr.mxu0 0.0
        %1815 = vmatpush1.msra.mxu0 0.0
        %1816 = vmatprep.subr.mxu0 0.0
        %1817 = vmatpush1.msra.mxu0 0.0
        %1818 = vmatprep.subr.mxu0 0.0
        %1819 = vmatpush1.msra.mxu0 0.0
        %1820 = vmatprep.subr.mxu0 0.0
        %1821 = vmatpush1.msra.mxu0 0.0
        %1822 = vmatprep.subr.mxu0 0.0
        %1823 = vmatpush1.msra.mxu0 0.0
        %1824 = vmatprep.subr.mxu0 0.0
        %1825 = vmatpush1.msra.mxu0 0.0
        %1826 = vmatprep.subr.mxu0 0.0
        %1827 = vmatpush1.msra.mxu0 0.0
        %1828 = vmatprep.subr.mxu0 0.0
        %1829 = vmatpush1.msra.mxu0 0.0
        %1830 = vmatprep.subr.mxu0 0.0
        %1831 = vmatpush1.msra.mxu0 0.0
        %1832 = vmatprep.subr.mxu0 0.0
        %1833 = vmatpush1.msra.mxu0 0.0
        %1834 = vmatprep.subr.mxu0 0.0
        %1835 = vmatpush1.msra.mxu0 0.0
        %1836 = vmatprep.subr.mxu0 0.0
        %1837 = vmatpush1.msra.mxu0 0.0
        %1838 = vmatprep.subr.mxu0 0.0
        %1839 = vmatpush1.msra.mxu0 0.0
        %1840 = vmatprep.subr.mxu0 0.0
        %1841 = vmatpush1.msra.mxu0 %v933
        %1842 = vmatprep.subr.mxu0 0.0
        %1843 = vmatpush2.msra.mxu0 0.0
        %1844 = vmatprep.subr.mxu0 0.0
        %1845 = vmatpush2.msra.mxu0 0.0
        %1846 = vmatprep.subr.mxu0 0.0
        %1847 = vmatpush2.msra.mxu0 0.0
        %1848 = vmatprep.subr.mxu0 0.0
        %1849 = vmatpush2.msra.mxu0 0.0
        %1850 = vmatprep.subr.mxu0 0.0
        %1851 = vmatpush2.msra.mxu0 0.0
        %1852 = vmatprep.subr.mxu0 0.0
        %1853 = vmatpush2.msra.mxu0 0.0
        %1854 = vmatprep.subr.mxu0 0.0
        %1855 = vmatpush2.msra.mxu0 0.0
        %1856 = vmatprep.subr.mxu0 0.0
        %1857 = vmatpush2.msra.mxu0 0.0
        %1858 = vmatprep.subr.mxu0 0.0
        %1859 = vmatpush2.msra.mxu0 0.0
        %1860 = vmatprep.subr.mxu0 0.0
        %1861 = vmatpush2.msra.mxu0 0.0
        %1862 = vmatprep.subr.mxu0 0.0
        %1863 = vmatpush2.msra.mxu0 0.0
        %1864 = vmatprep.subr.mxu0 0.0
        %1865 = vmatpush2.msra.mxu0 0.0
        %1866 = vmatprep.subr.mxu0 0.0
        %1867 = vmatpush2.msra.mxu0 0.0
        %1868 = vmatprep.subr.mxu0 0.0
        %1869 = vmatpush2.msra.mxu0 0.0
        %1870 = vmatprep.subr.mxu0 0.0
        %1871 = vmatpush2.msra.mxu0 0.0
        %1872 = vmatprep.subr.mxu0 0.0
        %1873 = vmatpush2.msra.mxu0 0.0
        %1874 = vmatprep.mubr.f32.mxu0 0.0
        %1875 = vmatmul.mubr.f32.gmra.mxu0 %v1808
        %v1876 = vpop.f32.mrf.mxu0
        %v1877 = vadd.f32 %v1642, %v1876
        %v1878 = vpop.f32.mrf.mxu0
        %1879 = vdwg.mxu0
        %1881 = vrot.lane.b32.xlu0 %v1720, 124
        %v1882 = vpop.permute.xlu0 %1881
        %v1884 = vadd.f32 %v1877, %v1882
        %v1885 = vxor.u32 %v1884, 2147483648
        %v1886 = vmul.f32 %v1885, 1.442695
        %v1887 = vpow.pop %v1886
        %v1888 = vadd.f32 %v1887, 1.0
        %v1889 = vrcp.pop %v1888
        %v1890 = vmul.f32 1.0, %v1889
        %v1891 = vadd.f32 %v1720, %v1022
        %1893 = vrot.lane.b32.xlu0 %v1891, 60
        %v1894 = vpop.permute.xlu0 %1893
        %v1896 = vmul.f32 %v1890, %v1894
        %1898 = vrot.lane.b32.xlu0 %v1896, 64
        %v1899 = vpop.permute.xlu0 %1898
        %v1901 = vadd.f32 %v1877, %v1899
        %v1902 = vtanh.pop %v1901
        %v1903 = vsub.f32 1.0, %v1890
        %1905 = vrot.lane.b32.xlu0 %v1902, 96
        %v1906 = vpop.permute.xlu0 %1905
        %v1908 = vmul.f32 %v1903, %v1906
        %v1909 = vmul.f32 %v1890, %v1647
        %v1910 = vadd.f32 %v1908, %v1909
        %1911 = vst.msk [vmem:[%s716 + $0x3] sm:$0x1] %vm1051, %v1806
        %1912 = vst.msk [vmem:[%s723 + $0x3] sm:$0x1] %vm1051, %v1798
        %v1913 = vsub.f32 %v1638, %v1804
        %v1914 = vand.u32 2147483647, %v1913
        %v1915 = vmul.f32 %v1914, %v1639
        %v1916 = vsel %vm1051, %v1915, 0.0
        %1917 = vadd.xlane.f32.xlu0 %v1916
        %v1918 = vpop.xlane.xlu0 %1917
        %1919 = vst.msk [vmem:[%s730 + $0x3] sm:$0x1] %vm1060, %v1918
        %v1920 = vsel %vm1051, %v1639, 0.0
        %1921 = vadd.xlane.f32.xlu0 %v1920
        %v1922 = vpop.xlane.xlu0 %1921
        %1923 = vst.msk [vmem:[%s737 + $0x3] sm:$0x1] %vm1060, %v1922
        %v1924 = vld [vmem:[%s681 + $0x4] sm:$0x1]
        %v1925 = vld [vmem:[%s688 + $0x4] sm:$0x1]
        %v1926 = vld [vmem:[%s695 + $0x4] sm:$0x1]
        %v1927 = vld [vmem:[%s702 + $0x4] sm:$0x1]
        %v1928 = vld [vmem:[%s709 + $0x4] sm:$0x1]
        %1930 = vrot.lane.b32.xlu0 %v1927, 32
        %v1931 = vpop.permute.xlu0 %1930
        %v1933 = vmul.f32 %v1910, %v1931
        %1935 = vrot.lane.b32.xlu0 %v1933, 96
        %v1936 = vpop.permute.xlu0 %1935
        %v1937 = vsel %vm763, %v1936, 0
        %1939 = vmatprep.subr.mxu0 0.0
        %1940 = vmatpush1.msra.mxu0 0.0
        %1941 = vmatprep.subr.mxu0 0.0
        %1942 = vmatpush1.msra.mxu0 0.0
        %1943 = vmatprep.subr.mxu0 0.0
        %1944 = vmatpush1.msra.mxu0 0.0
        %1945 = vmatprep.subr.mxu0 0.0
        %1946 = vmatpush1.msra.mxu0 0.0
        %1947 = vmatprep.subr.mxu0 0.0
        %1948 = vmatpush1.msra.mxu0 0.0
        %1949 = vmatprep.subr.mxu0 0.0
        %1950 = vmatpush1.msra.mxu0 0.0
        %1951 = vmatprep.subr.mxu0 0.0
        %1952 = vmatpush1.msra.mxu0 0.0
        %1953 = vmatprep.subr.mxu0 0.0
        %1954 = vmatpush1.msra.mxu0 0.0
        %1955 = vmatprep.subr.mxu0 0.0
        %1956 = vmatpush1.msra.mxu0 0.0
        %1957 = vmatprep.subr.mxu0 0.0
        %1958 = vmatpush1.msra.mxu0 0.0
        %1959 = vmatprep.subr.mxu0 0.0
        %1960 = vmatpush1.msra.mxu0 0.0
        %1961 = vmatprep.subr.mxu0 0.0
        %1962 = vmatpush1.msra.mxu0 0.0
        %1963 = vmatprep.subr.mxu0 0.0
        %1964 = vmatpush1.msra.mxu0 %v747
        %1965 = vmatprep.subr.mxu0 0.0
        %1966 = vmatpush1.msra.mxu0 %v746
        %1967 = vmatprep.subr.mxu0 0.0
        %1968 = vmatpush1.msra.mxu0 %v745
        %1969 = vmatprep.subr.mxu0 0.0
        %1970 = vmatpush1.msra.mxu0 %v744
        %1971 = vmatprep.subr.mxu0 0.0
        %1972 = vmatpush2.msra.mxu0 0.0
        %1973 = vmatprep.subr.mxu0 0.0
        %1974 = vmatpush2.msra.mxu0 0.0
        %1975 = vmatprep.subr.mxu0 0.0
        %1976 = vmatpush2.msra.mxu0 0.0
        %1977 = vmatprep.subr.mxu0 0.0
        %1978 = vmatpush2.msra.mxu0 0.0
        %1979 = vmatprep.subr.mxu0 0.0
        %1980 = vmatpush2.msra.mxu0 0.0
        %1981 = vmatprep.subr.mxu0 0.0
        %1982 = vmatpush2.msra.mxu0 0.0
        %1983 = vmatprep.subr.mxu0 0.0
        %1984 = vmatpush2.msra.mxu0 0.0
        %1985 = vmatprep.subr.mxu0 0.0
        %1986 = vmatpush2.msra.mxu0 0.0
        %1987 = vmatprep.subr.mxu0 0.0
        %1988 = vmatpush2.msra.mxu0 0.0
        %1989 = vmatprep.subr.mxu0 0.0
        %1990 = vmatpush2.msra.mxu0 0.0
        %1991 = vmatprep.subr.mxu0 0.0
        %1992 = vmatpush2.msra.mxu0 0.0
        %1993 = vmatprep.subr.mxu0 0.0
        %1994 = vmatpush2.msra.mxu0 0.0
        %1995 = vmatprep.subr.mxu0 0.0
        %1996 = vmatpush2.msra.mxu0 0.0
        %1997 = vmatprep.subr.mxu0 0.0
        %1998 = vmatpush2.msra.mxu0 0.0
        %1999 = vmatprep.subr.mxu0 0.0
        %2000 = vmatpush2.msra.mxu0 0.0
        %2001 = vmatprep.subr.mxu0 0.0
        %2002 = vmatpush2.msra.mxu0 0.0
        %2003 = vmatprep.mubr.f32.mxu0 0.0
        %2004 = vmatmul.mubr.f32.gmra.mxu0 %v1937
        %v2005 = vpop.f32.mrf.mxu0
        %v2006 = vadd.f32 0.0, %v2005
        %v2007 = vpop.f32.mrf.mxu0
        %2008 = vdwg.mxu0
        %v2009 = vadd.f32 %v2006, %v748
        %v2010 = vsub.f32 1.0, %v1925
        %v2011 = vmul.f32 %v1925, %v1924
        %v2012 = vmul.f32 %v2010, %v2009
        %v2013 = vadd.f32 %v2011, %v2012
        %v2015 = vsel %vm842, %v2013, 0
        %2017 = vmatprep.subr.mxu0 0.0
        %2018 = vmatpush1.msra.mxu0 0.0
        %2019 = vmatprep.subr.mxu0 0.0
        %2020 = vmatpush1.msra.mxu0 0.0
        %2021 = vmatprep.subr.mxu0 0.0
        %2022 = vmatpush1.msra.mxu0 0.0
        %2023 = vmatprep.subr.mxu0 0.0
        %2024 = vmatpush1.msra.mxu0 0.0
        %2025 = vmatprep.subr.mxu0 0.0
        %2026 = vmatpush1.msra.mxu0 0.0
        %2027 = vmatprep.subr.mxu0 0.0
        %2028 = vmatpush1.msra.mxu0 0.0
        %2029 = vmatprep.subr.mxu0 0.0
        %2030 = vmatpush1.msra.mxu0 0.0
        %2031 = vmatprep.subr.mxu0 0.0
        %2032 = vmatpush1.msra.mxu0 0.0
        %2033 = vmatprep.subr.mxu0 0.0
        %2034 = vmatpush1.msra.mxu0 0.0
        %2035 = vmatprep.subr.mxu0 0.0
        %2036 = vmatpush1.msra.mxu0 0.0
        %2037 = vmatprep.subr.mxu0 0.0
        %2038 = vmatpush1.msra.mxu0 0.0
        %2039 = vmatprep.subr.mxu0 0.0
        %2040 = vmatpush1.msra.mxu0 0.0
        %2041 = vmatprep.subr.mxu0 0.0
        %2042 = vmatpush1.msra.mxu0 0.0
        %2043 = vmatprep.subr.mxu0 0.0
        %2044 = vmatpush1.msra.mxu0 0.0
        %2045 = vmatprep.subr.mxu0 0.0
        %2046 = vmatpush1.msra.mxu0 0.0
        %2047 = vmatprep.subr.mxu0 0.0
        %2048 = vmatpush1.msra.mxu0 %v848
        %2049 = vmatprep.subr.mxu0 0.0
        %2050 = vmatpush2.msra.mxu0 0.0
        %2051 = vmatprep.subr.mxu0 0.0
        %2052 = vmatpush2.msra.mxu0 0.0
        %2053 = vmatprep.subr.mxu0 0.0
        %2054 = vmatpush2.msra.mxu0 0.0
        %2055 = vmatprep.subr.mxu0 0.0
        %2056 = vmatpush2.msra.mxu0 0.0
        %2057 = vmatprep.subr.mxu0 0.0
        %2058 = vmatpush2.msra.mxu0 0.0
        %2059 = vmatprep.subr.mxu0 0.0
        %2060 = vmatpush2.msra.mxu0 0.0
        %2061 = vmatprep.subr.mxu0 0.0
        %2062 = vmatpush2.msra.mxu0 0.0
        %2063 = vmatprep.subr.mxu0 0.0
        %2064 = vmatpush2.msra.mxu0 0.0
        %2065 = vmatprep.subr.mxu0 0.0
        %2066 = vmatpush2.msra.mxu0 0.0
        %2067 = vmatprep.subr.mxu0 0.0
        %2068 = vmatpush2.msra.mxu0 0.0
        %2069 = vmatprep.subr.mxu0 0.0
        %2070 = vmatpush2.msra.mxu0 0.0
        %2071 = vmatprep.subr.mxu0 0.0
        %2072 = vmatpush2.msra.mxu0 0.0
        %2073 = vmatprep.subr.mxu0 0.0
        %2074 = vmatpush2.msra.mxu0 0.0
        %2075 = vmatprep.subr.mxu0 0.0
        %2076 = vmatpush2.msra.mxu0 0.0
        %2077 = vmatprep.subr.mxu0 0.0
        %2078 = vmatpush2.msra.mxu0 0.0
        %2079 = vmatprep.subr.mxu0 0.0
        %2080 = vmatpush2.msra.mxu0 0.0
        %2081 = vmatprep.mubr.f32.mxu0 0.0
        %2082 = vmatmul.mubr.f32.gmra.mxu0 %v2015
        %v2083 = vpop.f32.mrf.mxu0
        %v2084 = vadd.f32 %v750, %v2083
        %v2085 = vpop.f32.mrf.mxu0
        %2086 = vdwg.mxu0
        %v2087 = vmul.f32 %v920, %v1926
        %v2088 = vmul.f32 %v922, %v2084
        %v2089 = vadd.f32 %v2087, %v2088
        %v2090 = vadd.f32 %v2089, %v925
        %v2091 = vmul.f32 %v2010, %v2090
        %v2092 = vadd.f32 %v2011, %v2091
        %v2094 = vsel %vm842, %v2092, 0
        %2096 = vmatprep.subr.mxu0 0.0
        %2097 = vmatpush1.msra.mxu0 0.0
        %2098 = vmatprep.subr.mxu0 0.0
        %2099 = vmatpush1.msra.mxu0 0.0
        %2100 = vmatprep.subr.mxu0 0.0
        %2101 = vmatpush1.msra.mxu0 0.0
        %2102 = vmatprep.subr.mxu0 0.0
        %2103 = vmatpush1.msra.mxu0 0.0
        %2104 = vmatprep.subr.mxu0 0.0
        %2105 = vmatpush1.msra.mxu0 0.0
        %2106 = vmatprep.subr.mxu0 0.0
        %2107 = vmatpush1.msra.mxu0 0.0
        %2108 = vmatprep.subr.mxu0 0.0
        %2109 = vmatpush1.msra.mxu0 0.0
        %2110 = vmatprep.subr.mxu0 0.0
        %2111 = vmatpush1.msra.mxu0 0.0
        %2112 = vmatprep.subr.mxu0 0.0
        %2113 = vmatpush1.msra.mxu0 0.0
        %2114 = vmatprep.subr.mxu0 0.0
        %2115 = vmatpush1.msra.mxu0 0.0
        %2116 = vmatprep.subr.mxu0 0.0
        %2117 = vmatpush1.msra.mxu0 0.0
        %2118 = vmatprep.subr.mxu0 0.0
        %2119 = vmatpush1.msra.mxu0 0.0
        %2120 = vmatprep.subr.mxu0 0.0
        %2121 = vmatpush1.msra.mxu0 0.0
        %2122 = vmatprep.subr.mxu0 0.0
        %2123 = vmatpush1.msra.mxu0 0.0
        %2124 = vmatprep.subr.mxu0 0.0
        %2125 = vmatpush1.msra.mxu0 0.0
        %2126 = vmatprep.subr.mxu0 0.0
        %2127 = vmatpush1.msra.mxu0 %v933
        %2128 = vmatprep.subr.mxu0 0.0
        %2129 = vmatpush2.msra.mxu0 0.0
        %2130 = vmatprep.subr.mxu0 0.0
        %2131 = vmatpush2.msra.mxu0 0.0
        %2132 = vmatprep.subr.mxu0 0.0
        %2133 = vmatpush2.msra.mxu0 0.0
        %2134 = vmatprep.subr.mxu0 0.0
        %2135 = vmatpush2.msra.mxu0 0.0
        %2136 = vmatprep.subr.mxu0 0.0
        %2137 = vmatpush2.msra.mxu0 0.0
        %2138 = vmatprep.subr.mxu0 0.0
        %2139 = vmatpush2.msra.mxu0 0.0
        %2140 = vmatprep.subr.mxu0 0.0
        %2141 = vmatpush2.msra.mxu0 0.0
        %2142 = vmatprep.subr.mxu0 0.0
        %2143 = vmatpush2.msra.mxu0 0.0
        %2144 = vmatprep.subr.mxu0 0.0
        %2145 = vmatpush2.msra.mxu0 0.0
        %2146 = vmatprep.subr.mxu0 0.0
        %2147 = vmatpush2.msra.mxu0 0.0
        %2148 = vmatprep.subr.mxu0 0.0
        %2149 = vmatpush2.msra.mxu0 0.0
        %2150 = vmatprep.subr.mxu0 0.0
        %2151 = vmatpush2.msra.mxu0 0.0
        %2152 = vmatprep.subr.mxu0 0.0
        %2153 = vmatpush2.msra.mxu0 0.0
        %2154 = vmatprep.subr.mxu0 0.0
        %2155 = vmatpush2.msra.mxu0 0.0
        %2156 = vmatprep.subr.mxu0 0.0
        %2157 = vmatpush2.msra.mxu0 0.0
        %2158 = vmatprep.subr.mxu0 0.0
        %2159 = vmatpush2.msra.mxu0 0.0
        %2160 = vmatprep.mubr.f32.mxu0 0.0
        %2161 = vmatmul.mubr.f32.gmra.mxu0 %v2094
        %v2162 = vpop.f32.mrf.mxu0
        %v2163 = vadd.f32 %v1928, %v2162
        %v2164 = vpop.f32.mrf.mxu0
        %2165 = vdwg.mxu0
        %2167 = vrot.lane.b32.xlu0 %v2006, 124
        %v2168 = vpop.permute.xlu0 %2167
        %v2170 = vadd.f32 %v2163, %v2168
        %v2171 = vxor.u32 %v2170, 2147483648
        %v2172 = vmul.f32 %v2171, 1.442695
        %v2173 = vpow.pop %v2172
        %v2174 = vadd.f32 %v2173, 1.0
        %v2175 = vrcp.pop %v2174
        %v2176 = vmul.f32 1.0, %v2175
        %v2177 = vadd.f32 %v2006, %v1022
        %2179 = vrot.lane.b32.xlu0 %v2177, 60
        %v2180 = vpop.permute.xlu0 %2179
        %v2182 = vmul.f32 %v2176, %v2180
        %2184 = vrot.lane.b32.xlu0 %v2182, 64
        %v2185 = vpop.permute.xlu0 %2184
        %v2187 = vadd.f32 %v2163, %v2185
        %v2188 = vtanh.pop %v2187
        %v2189 = vsub.f32 1.0, %v2176
        %2191 = vrot.lane.b32.xlu0 %v2188, 96
        %v2192 = vpop.permute.xlu0 %2191
        %v2194 = vmul.f32 %v2189, %v2192
        %v2195 = vmul.f32 %v2176, %v1933
        %v2196 = vadd.f32 %v2194, %v2195
        %2197 = vst.msk [vmem:[%s716 + $0x4] sm:$0x1] %vm1051, %v2092
        %2198 = vst.msk [vmem:[%s723 + $0x4] sm:$0x1] %vm1051, %v2084
        %v2199 = vsub.f32 %v1924, %v2090
        %v2200 = vand.u32 2147483647, %v2199
        %v2201 = vmul.f32 %v2200, %v1925
        %v2202 = vsel %vm1051, %v2201, 0.0
        %2203 = vadd.xlane.f32.xlu0 %v2202
        %v2204 = vpop.xlane.xlu0 %2203
        %2205 = vst.msk [vmem:[%s730 + $0x4] sm:$0x1] %vm1060, %v2204
        %v2206 = vsel %vm1051, %v1925, 0.0
        %2207 = vadd.xlane.f32.xlu0 %v2206
        %v2208 = vpop.xlane.xlu0 %2207
        %2209 = vst.msk [vmem:[%s737 + $0x4] sm:$0x1] %vm1060, %v2208
        %v2210 = vld [vmem:[%s681 + $0x5] sm:$0x1]
        %v2211 = vld [vmem:[%s688 + $0x5] sm:$0x1]
        %v2212 = vld [vmem:[%s695 + $0x5] sm:$0x1]
        %v2213 = vld [vmem:[%s702 + $0x5] sm:$0x1]
        %v2214 = vld [vmem:[%s709 + $0x5] sm:$0x1]
        %2216 = vrot.lane.b32.xlu0 %v2213, 32
        %v2217 = vpop.permute.xlu0 %2216
        %v2219 = vmul.f32 %v2196, %v2217
        %2221 = vrot.lane.b32.xlu0 %v2219, 96
        %v2222 = vpop.permute.xlu0 %2221
        %v2223 = vsel %vm763, %v2222, 0
        %2225 = vmatprep.subr.mxu0 0.0
        %2226 = vmatpush1.msra.mxu0 0.0
        %2227 = vmatprep.subr.mxu0 0.0
        %2228 = vmatpush1.msra.mxu0 0.0
        %2229 = vmatprep.subr.mxu0 0.0
        %2230 = vmatpush1.msra.mxu0 0.0
        %2231 = vmatprep.subr.mxu0 0.0
        %2232 = vmatpush1.msra.mxu0 0.0
        %2233 = vmatprep.subr.mxu0 0.0
        %2234 = vmatpush1.msra.mxu0 0.0
        %2235 = vmatprep.subr.mxu0 0.0
        %2236 = vmatpush1.msra.mxu0 0.0
        %2237 = vmatprep.subr.mxu0 0.0
        %2238 = vmatpush1.msra.mxu0 0.0
        %2239 = vmatprep.subr.mxu0 0.0
        %2240 = vmatpush1.msra.mxu0 0.0
        %2241 = vmatprep.subr.mxu0 0.0
        %2242 = vmatpush1.msra.mxu0 0.0
        %2243 = vmatprep.subr.mxu0 0.0
        %2244 = vmatpush1.msra.mxu0 0.0
        %2245 = vmatprep.subr.mxu0 0.0
        %2246 = vmatpush1.msra.mxu0 0.0
        %2247 = vmatprep.subr.mxu0 0.0
        %2248 = vmatpush1.msra.mxu0 0.0
        %2249 = vmatprep.subr.mxu0 0.0
        %2250 = vmatpush1.msra.mxu0 %v747
        %2251 = vmatprep.subr.mxu0 0.0
        %2252 = vmatpush1.msra.mxu0 %v746
        %2253 = vmatprep.subr.mxu0 0.0
        %2254 = vmatpush1.msra.mxu0 %v745
        %2255 = vmatprep.subr.mxu0 0.0
        %2256 = vmatpush1.msra.mxu0 %v744
        %2257 = vmatprep.subr.mxu0 0.0
        %2258 = vmatpush2.msra.mxu0 0.0
        %2259 = vmatprep.subr.mxu0 0.0
        %2260 = vmatpush2.msra.mxu0 0.0
        %2261 = vmatprep.subr.mxu0 0.0
        %2262 = vmatpush2.msra.mxu0 0.0
        %2263 = vmatprep.subr.mxu0 0.0
        %2264 = vmatpush2.msra.mxu0 0.0
        %2265 = vmatprep.subr.mxu0 0.0
        %2266 = vmatpush2.msra.mxu0 0.0
        %2267 = vmatprep.subr.mxu0 0.0
        %2268 = vmatpush2.msra.mxu0 0.0
        %2269 = vmatprep.subr.mxu0 0.0
        %2270 = vmatpush2.msra.mxu0 0.0
        %2271 = vmatprep.subr.mxu0 0.0
        %2272 = vmatpush2.msra.mxu0 0.0
        %2273 = vmatprep.subr.mxu0 0.0
        %2274 = vmatpush2.msra.mxu0 0.0
        %2275 = vmatprep.subr.mxu0 0.0
        %2276 = vmatpush2.msra.mxu0 0.0
        %2277 = vmatprep.subr.mxu0 0.0
        %2278 = vmatpush2.msra.mxu0 0.0
        %2279 = vmatprep.subr.mxu0 0.0
        %2280 = vmatpush2.msra.mxu0 0.0
        %2281 = vmatprep.subr.mxu0 0.0
        %2282 = vmatpush2.msra.mxu0 0.0
        %2283 = vmatprep.subr.mxu0 0.0
        %2284 = vmatpush2.msra.mxu0 0.0
        %2285 = vmatprep.subr.mxu0 0.0
        %2286 = vmatpush2.msra.mxu0 0.0
        %2287 = vmatprep.subr.mxu0 0.0
        %2288 = vmatpush2.msra.mxu0 0.0
        %2289 = vmatprep.mubr.f32.mxu0 0.0
        %2290 = vmatmul.mubr.f32.gmra.mxu0 %v2223
        %v2291 = vpop.f32.mrf.mxu0
        %v2292 = vadd.f32 0.0, %v2291
        %v2293 = vpop.f32.mrf.mxu0
        %2294 = vdwg.mxu0
        %v2295 = vadd.f32 %v2292, %v748
        %v2296 = vsub.f32 1.0, %v2211
        %v2297 = vmul.f32 %v2211, %v2210
        %v2298 = vmul.f32 %v2296, %v2295
        %v2299 = vadd.f32 %v2297, %v2298
        %v2301 = vsel %vm842, %v2299, 0
        %2303 = vmatprep.subr.mxu0 0.0
        %2304 = vmatpush1.msra.mxu0 0.0
        %2305 = vmatprep.subr.mxu0 0.0
        %2306 = vmatpush1.msra.mxu0 0.0
        %2307 = vmatprep.subr.mxu0 0.0
        %2308 = vmatpush1.msra.mxu0 0.0
        %2309 = vmatprep.subr.mxu0 0.0
        %2310 = vmatpush1.msra.mxu0 0.0
        %2311 = vmatprep.subr.mxu0 0.0
        %2312 = vmatpush1.msra.mxu0 0.0
        %2313 = vmatprep.subr.mxu0 0.0
        %2314 = vmatpush1.msra.mxu0 0.0
        %2315 = vmatprep.subr.mxu0 0.0
        %2316 = vmatpush1.msra.mxu0 0.0
        %2317 = vmatprep.subr.mxu0 0.0
        %2318 = vmatpush1.msra.mxu0 0.0
        %2319 = vmatprep.subr.mxu0 0.0
        %2320 = vmatpush1.msra.mxu0 0.0
        %2321 = vmatprep.subr.mxu0 0.0
        %2322 = vmatpush1.msra.mxu0 0.0
        %2323 = vmatprep.subr.mxu0 0.0
        %2324 = vmatpush1.msra.mxu0 0.0
        %2325 = vmatprep.subr.mxu0 0.0
        %2326 = vmatpush1.msra.mxu0 0.0
        %2327 = vmatprep.subr.mxu0 0.0
        %2328 = vmatpush1.msra.mxu0 0.0
        %2329 = vmatprep.subr.mxu0 0.0
        %2330 = vmatpush1.msra.mxu0 0.0
        %2331 = vmatprep.subr.mxu0 0.0
        %2332 = vmatpush1.msra.mxu0 0.0
        %2333 = vmatprep.subr.mxu0 0.0
        %2334 = vmatpush1.msra.mxu0 %v848
        %2335 = vmatprep.subr.mxu0 0.0
        %2336 = vmatpush2.msra.mxu0 0.0
        %2337 = vmatprep.subr.mxu0 0.0
        %2338 = vmatpush2.msra.mxu0 0.0
        %2339 = vmatprep.subr.mxu0 0.0
        %2340 = vmatpush2.msra.mxu0 0.0
        %2341 = vmatprep.subr.mxu0 0.0
        %2342 = vmatpush2.msra.mxu0 0.0
        %2343 = vmatprep.subr.mxu0 0.0
        %2344 = vmatpush2.msra.mxu0 0.0
        %2345 = vmatprep.subr.mxu0 0.0
        %2346 = vmatpush2.msra.mxu0 0.0
        %2347 = vmatprep.subr.mxu0 0.0
        %2348 = vmatpush2.msra.mxu0 0.0
        %2349 = vmatprep.subr.mxu0 0.0
        %2350 = vmatpush2.msra.mxu0 0.0
        %2351 = vmatprep.subr.mxu0 0.0
        %2352 = vmatpush2.msra.mxu0 0.0
        %2353 = vmatprep.subr.mxu0 0.0
        %2354 = vmatpush2.msra.mxu0 0.0
        %2355 = vmatprep.subr.mxu0 0.0
        %2356 = vmatpush2.msra.mxu0 0.0
        %2357 = vmatprep.subr.mxu0 0.0
        %2358 = vmatpush2.msra.mxu0 0.0
        %2359 = vmatprep.subr.mxu0 0.0
        %2360 = vmatpush2.msra.mxu0 0.0
        %2361 = vmatprep.subr.mxu0 0.0
        %2362 = vmatpush2.msra.mxu0 0.0
        %2363 = vmatprep.subr.mxu0 0.0
        %2364 = vmatpush2.msra.mxu0 0.0
        %2365 = vmatprep.subr.mxu0 0.0
        %2366 = vmatpush2.msra.mxu0 0.0
        %2367 = vmatprep.mubr.f32.mxu0 0.0
        %2368 = vmatmul.mubr.f32.gmra.mxu0 %v2301
        %v2369 = vpop.f32.mrf.mxu0
        %v2370 = vadd.f32 %v750, %v2369
        %v2371 = vpop.f32.mrf.mxu0
        %2372 = vdwg.mxu0
        %v2373 = vmul.f32 %v920, %v2212
        %v2374 = vmul.f32 %v922, %v2370
        %v2375 = vadd.f32 %v2373, %v2374
        %v2376 = vadd.f32 %v2375, %v925
        %v2377 = vmul.f32 %v2296, %v2376
        %v2378 = vadd.f32 %v2297, %v2377
        %v2380 = vsel %vm842, %v2378, 0
        %2382 = vmatprep.subr.mxu0 0.0
        %2383 = vmatpush1.msra.mxu0 0.0
        %2384 = vmatprep.subr.mxu0 0.0
        %2385 = vmatpush1.msra.mxu0 0.0
        %2386 = vmatprep.subr.mxu0 0.0
        %2387 = vmatpush1.msra.mxu0 0.0
        %2388 = vmatprep.subr.mxu0 0.0
        %2389 = vmatpush1.msra.mxu0 0.0
        %2390 = vmatprep.subr.mxu0 0.0
        %2391 = vmatpush1.msra.mxu0 0.0
        %2392 = vmatprep.subr.mxu0 0.0
        %2393 = vmatpush1.msra.mxu0 0.0
        %2394 = vmatprep.subr.mxu0 0.0
        %2395 = vmatpush1.msra.mxu0 0.0
        %2396 = vmatprep.subr.mxu0 0.0
        %2397 = vmatpush1.msra.mxu0 0.0
        %2398 = vmatprep.subr.mxu0 0.0
        %2399 = vmatpush1.msra.mxu0 0.0
        %2400 = vmatprep.subr.mxu0 0.0
        %2401 = vmatpush1.msra.mxu0 0.0
        %2402 = vmatprep.subr.mxu0 0.0
        %2403 = vmatpush1.msra.mxu0 0.0
        %2404 = vmatprep.subr.mxu0 0.0
        %2405 = vmatpush1.msra.mxu0 0.0
        %2406 = vmatprep.subr.mxu0 0.0
        %2407 = vmatpush1.msra.mxu0 0.0
        %2408 = vmatprep.subr.mxu0 0.0
        %2409 = vmatpush1.msra.mxu0 0.0
        %2410 = vmatprep.subr.mxu0 0.0
        %2411 = vmatpush1.msra.mxu0 0.0
        %2412 = vmatprep.subr.mxu0 0.0
        %2413 = vmatpush1.msra.mxu0 %v933
        %2414 = vmatprep.subr.mxu0 0.0
        %2415 = vmatpush2.msra.mxu0 0.0
        %2416 = vmatprep.subr.mxu0 0.0
        %2417 = vmatpush2.msra.mxu0 0.0
        %2418 = vmatprep.subr.mxu0 0.0
        %2419 = vmatpush2.msra.mxu0 0.0
        %2420 = vmatprep.subr.mxu0 0.0
        %2421 = vmatpush2.msra.mxu0 0.0
        %2422 = vmatprep.subr.mxu0 0.0
        %2423 = vmatpush2.msra.mxu0 0.0
        %2424 = vmatprep.subr.mxu0 0.0
        %2425 = vmatpush2.msra.mxu0 0.0
        %2426 = vmatprep.subr.mxu0 0.0
        %2427 = vmatpush2.msra.mxu0 0.0
        %2428 = vmatprep.subr.mxu0 0.0
        %2429 = vmatpush2.msra.mxu0 0.0
        %2430 = vmatprep.subr.mxu0 0.0
        %2431 = vmatpush2.msra.mxu0 0.0
        %2432 = vmatprep.subr.mxu0 0.0
        %2433 = vmatpush2.msra.mxu0 0.0
        %2434 = vmatprep.subr.mxu0 0.0
        %2435 = vmatpush2.msra.mxu0 0.0
        %2436 = vmatprep.subr.mxu0 0.0
        %2437 = vmatpush2.msra.mxu0 0.0
        %2438 = vmatprep.subr.mxu0 0.0
        %2439 = vmatpush2.msra.mxu0 0.0
        %2440 = vmatprep.subr.mxu0 0.0
        %2441 = vmatpush2.msra.mxu0 0.0
        %2442 = vmatprep.subr.mxu0 0.0
        %2443 = vmatpush2.msra.mxu0 0.0
        %2444 = vmatprep.subr.mxu0 0.0
        %2445 = vmatpush2.msra.mxu0 0.0
        %2446 = vmatprep.mubr.f32.mxu0 0.0
        %2447 = vmatmul.mubr.f32.gmra.mxu0 %v2380
        %v2448 = vpop.f32.mrf.mxu0
        %v2449 = vadd.f32 %v2214, %v2448
        %v2450 = vpop.f32.mrf.mxu0
        %2451 = vdwg.mxu0
        %2453 = vrot.lane.b32.xlu0 %v2292, 124
        %v2454 = vpop.permute.xlu0 %2453
        %v2456 = vadd.f32 %v2449, %v2454
        %v2457 = vxor.u32 %v2456, 2147483648
        %v2458 = vmul.f32 %v2457, 1.442695
        %v2459 = vpow.pop %v2458
        %v2460 = vadd.f32 %v2459, 1.0
        %v2461 = vrcp.pop %v2460
        %v2462 = vmul.f32 1.0, %v2461
        %v2463 = vadd.f32 %v2292, %v1022
        %2465 = vrot.lane.b32.xlu0 %v2463, 60
        %v2466 = vpop.permute.xlu0 %2465
        %v2468 = vmul.f32 %v2462, %v2466
        %2470 = vrot.lane.b32.xlu0 %v2468, 64
        %v2471 = vpop.permute.xlu0 %2470
        %v2473 = vadd.f32 %v2449, %v2471
        %v2474 = vtanh.pop %v2473
        %v2475 = vsub.f32 1.0, %v2462
        %2477 = vrot.lane.b32.xlu0 %v2474, 96
        %v2478 = vpop.permute.xlu0 %2477
        %v2480 = vmul.f32 %v2475, %v2478
        %v2481 = vmul.f32 %v2462, %v2219
        %v2482 = vadd.f32 %v2480, %v2481
        %2483 = vst.msk [vmem:[%s716 + $0x5] sm:$0x1] %vm1051, %v2378
        %2484 = vst.msk [vmem:[%s723 + $0x5] sm:$0x1] %vm1051, %v2370
        %v2485 = vsub.f32 %v2210, %v2376
        %v2486 = vand.u32 2147483647, %v2485
        %v2487 = vmul.f32 %v2486, %v2211
        %v2488 = vsel %vm1051, %v2487, 0.0
        %2489 = vadd.xlane.f32.xlu0 %v2488
        %v2490 = vpop.xlane.xlu0 %2489
        %2491 = vst.msk [vmem:[%s730 + $0x5] sm:$0x1] %vm1060, %v2490
        %v2492 = vsel %vm1051, %v2211, 0.0
        %2493 = vadd.xlane.f32.xlu0 %v2492
        %v2494 = vpop.xlane.xlu0 %2493
        %2495 = vst.msk [vmem:[%s737 + $0x5] sm:$0x1] %vm1060, %v2494
        %v2496 = vld [vmem:[%s681 + $0x6] sm:$0x1]
        %v2497 = vld [vmem:[%s688 + $0x6] sm:$0x1]
        %v2498 = vld [vmem:[%s695 + $0x6] sm:$0x1]
        %v2499 = vld [vmem:[%s702 + $0x6] sm:$0x1]
        %v2500 = vld [vmem:[%s709 + $0x6] sm:$0x1]
        %2502 = vrot.lane.b32.xlu0 %v2499, 32
        %v2503 = vpop.permute.xlu0 %2502
        %v2505 = vmul.f32 %v2482, %v2503
        %2507 = vrot.lane.b32.xlu0 %v2505, 96
        %v2508 = vpop.permute.xlu0 %2507
        %v2509 = vsel %vm763, %v2508, 0
        %2511 = vmatprep.subr.mxu0 0.0
        %2512 = vmatpush1.msra.mxu0 0.0
        %2513 = vmatprep.subr.mxu0 0.0
        %2514 = vmatpush1.msra.mxu0 0.0
        %2515 = vmatprep.subr.mxu0 0.0
        %2516 = vmatpush1.msra.mxu0 0.0
        %2517 = vmatprep.subr.mxu0 0.0
        %2518 = vmatpush1.msra.mxu0 0.0
        %2519 = vmatprep.subr.mxu0 0.0
        %2520 = vmatpush1.msra.mxu0 0.0
        %2521 = vmatprep.subr.mxu0 0.0
        %2522 = vmatpush1.msra.mxu0 0.0
        %2523 = vmatprep.subr.mxu0 0.0
        %2524 = vmatpush1.msra.mxu0 0.0
        %2525 = vmatprep.subr.mxu0 0.0
        %2526 = vmatpush1.msra.mxu0 0.0
        %2527 = vmatprep.subr.mxu0 0.0
        %2528 = vmatpush1.msra.mxu0 0.0
        %2529 = vmatprep.subr.mxu0 0.0
        %2530 = vmatpush1.msra.mxu0 0.0
        %2531 = vmatprep.subr.mxu0 0.0
        %2532 = vmatpush1.msra.mxu0 0.0
        %2533 = vmatprep.subr.mxu0 0.0
        %2534 = vmatpush1.msra.mxu0 0.0
        %2535 = vmatprep.subr.mxu0 0.0
        %2536 = vmatpush1.msra.mxu0 %v747
        %2537 = vmatprep.subr.mxu0 0.0
        %2538 = vmatpush1.msra.mxu0 %v746
        %2539 = vmatprep.subr.mxu0 0.0
        %2540 = vmatpush1.msra.mxu0 %v745
        %2541 = vmatprep.subr.mxu0 0.0
        %2542 = vmatpush1.msra.mxu0 %v744
        %2543 = vmatprep.subr.mxu0 0.0
        %2544 = vmatpush2.msra.mxu0 0.0
        %2545 = vmatprep.subr.mxu0 0.0
        %2546 = vmatpush2.msra.mxu0 0.0
        %2547 = vmatprep.subr.mxu0 0.0
        %2548 = vmatpush2.msra.mxu0 0.0
        %2549 = vmatprep.subr.mxu0 0.0
        %2550 = vmatpush2.msra.mxu0 0.0
        %2551 = vmatprep.subr.mxu0 0.0
        %2552 = vmatpush2.msra.mxu0 0.0
        %2553 = vmatprep.subr.mxu0 0.0
        %2554 = vmatpush2.msra.mxu0 0.0
        %2555 = vmatprep.subr.mxu0 0.0
        %2556 = vmatpush2.msra.mxu0 0.0
        %2557 = vmatprep.subr.mxu0 0.0
        %2558 = vmatpush2.msra.mxu0 0.0
        %2559 = vmatprep.subr.mxu0 0.0
        %2560 = vmatpush2.msra.mxu0 0.0
        %2561 = vmatprep.subr.mxu0 0.0
        %2562 = vmatpush2.msra.mxu0 0.0
        %2563 = vmatprep.subr.mxu0 0.0
        %2564 = vmatpush2.msra.mxu0 0.0
        %2565 = vmatprep.subr.mxu0 0.0
        %2566 = vmatpush2.msra.mxu0 0.0
        %2567 = vmatprep.subr.mxu0 0.0
        %2568 = vmatpush2.msra.mxu0 0.0
        %2569 = vmatprep.subr.mxu0 0.0
        %2570 = vmatpush2.msra.mxu0 0.0
        %2571 = vmatprep.subr.mxu0 0.0
        %2572 = vmatpush2.msra.mxu0 0.0
        %2573 = vmatprep.subr.mxu0 0.0
        %2574 = vmatpush2.msra.mxu0 0.0
        %2575 = vmatprep.mubr.f32.mxu0 0.0
        %2576 = vmatmul.mubr.f32.gmra.mxu0 %v2509
        %v2577 = vpop.f32.mrf.mxu0
        %v2578 = vadd.f32 0.0, %v2577
        %v2579 = vpop.f32.mrf.mxu0
        %2580 = vdwg.mxu0
        %v2581 = vadd.f32 %v2578, %v748
        %v2582 = vsub.f32 1.0, %v2497
        %v2583 = vmul.f32 %v2497, %v2496
        %v2584 = vmul.f32 %v2582, %v2581
        %v2585 = vadd.f32 %v2583, %v2584
        %v2587 = vsel %vm842, %v2585, 0
        %2589 = vmatprep.subr.mxu0 0.0
        %2590 = vmatpush1.msra.mxu0 0.0
        %2591 = vmatprep.subr.mxu0 0.0
        %2592 = vmatpush1.msra.mxu0 0.0
        %2593 = vmatprep.subr.mxu0 0.0
        %2594 = vmatpush1.msra.mxu0 0.0
        %2595 = vmatprep.subr.mxu0 0.0
        %2596 = vmatpush1.msra.mxu0 0.0
        %2597 = vmatprep.subr.mxu0 0.0
        %2598 = vmatpush1.msra.mxu0 0.0
        %2599 = vmatprep.subr.mxu0 0.0
        %2600 = vmatpush1.msra.mxu0 0.0
        %2601 = vmatprep.subr.mxu0 0.0
        %2602 = vmatpush1.msra.mxu0 0.0
        %2603 = vmatprep.subr.mxu0 0.0
        %2604 = vmatpush1.msra.mxu0 0.0
        %2605 = vmatprep.subr.mxu0 0.0
        %2606 = vmatpush1.msra.mxu0 0.0
        %2607 = vmatprep.subr.mxu0 0.0
        %2608 = vmatpush1.msra.mxu0 0.0
        %2609 = vmatprep.subr.mxu0 0.0
        %2610 = vmatpush1.msra.mxu0 0.0
        %2611 = vmatprep.subr.mxu0 0.0
        %2612 = vmatpush1.msra.mxu0 0.0
        %2613 = vmatprep.subr.mxu0 0.0
        %2614 = vmatpush1.msra.mxu0 0.0
        %2615 = vmatprep.subr.mxu0 0.0
        %2616 = vmatpush1.msra.mxu0 0.0
        %2617 = vmatprep.subr.mxu0 0.0
        %2618 = vmatpush1.msra.mxu0 0.0
        %2619 = vmatprep.subr.mxu0 0.0
        %2620 = vmatpush1.msra.mxu0 %v848
        %2621 = vmatprep.subr.mxu0 0.0
        %2622 = vmatpush2.msra.mxu0 0.0
        %2623 = vmatprep.subr.mxu0 0.0
        %2624 = vmatpush2.msra.mxu0 0.0
        %2625 = vmatprep.subr.mxu0 0.0
        %2626 = vmatpush2.msra.mxu0 0.0
        %2627 = vmatprep.subr.mxu0 0.0
        %2628 = vmatpush2.msra.mxu0 0.0
        %2629 = vmatprep.subr.mxu0 0.0
        %2630 = vmatpush2.msra.mxu0 0.0
        %2631 = vmatprep.subr.mxu0 0.0
        %2632 = vmatpush2.msra.mxu0 0.0
        %2633 = vmatprep.subr.mxu0 0.0
        %2634 = vmatpush2.msra.mxu0 0.0
        %2635 = vmatprep.subr.mxu0 0.0
        %2636 = vmatpush2.msra.mxu0 0.0
        %2637 = vmatprep.subr.mxu0 0.0
        %2638 = vmatpush2.msra.mxu0 0.0
        %2639 = vmatprep.subr.mxu0 0.0
        %2640 = vmatpush2.msra.mxu0 0.0
        %2641 = vmatprep.subr.mxu0 0.0
        %2642 = vmatpush2.msra.mxu0 0.0
        %2643 = vmatprep.subr.mxu0 0.0
        %2644 = vmatpush2.msra.mxu0 0.0
        %2645 = vmatprep.subr.mxu0 0.0
        %2646 = vmatpush2.msra.mxu0 0.0
        %2647 = vmatprep.subr.mxu0 0.0
        %2648 = vmatpush2.msra.mxu0 0.0
        %2649 = vmatprep.subr.mxu0 0.0
        %2650 = vmatpush2.msra.mxu0 0.0
        %2651 = vmatprep.subr.mxu0 0.0
        %2652 = vmatpush2.msra.mxu0 0.0
        %2653 = vmatprep.mubr.f32.mxu0 0.0
        %2654 = vmatmul.mubr.f32.gmra.mxu0 %v2587
        %v2655 = vpop.f32.mrf.mxu0
        %v2656 = vadd.f32 %v750, %v2655
        %v2657 = vpop.f32.mrf.mxu0
        %2658 = vdwg.mxu0
        %v2659 = vmul.f32 %v920, %v2498
        %v2660 = vmul.f32 %v922, %v2656
        %v2661 = vadd.f32 %v2659, %v2660
        %v2662 = vadd.f32 %v2661, %v925
        %v2663 = vmul.f32 %v2582, %v2662
        %v2664 = vadd.f32 %v2583, %v2663
        %v2666 = vsel %vm842, %v2664, 0
        %2668 = vmatprep.subr.mxu0 0.0
        %2669 = vmatpush1.msra.mxu0 0.0
        %2670 = vmatprep.subr.mxu0 0.0
        %2671 = vmatpush1.msra.mxu0 0.0
        %2672 = vmatprep.subr.mxu0 0.0
        %2673 = vmatpush1.msra.mxu0 0.0
        %2674 = vmatprep.subr.mxu0 0.0
        %2675 = vmatpush1.msra.mxu0 0.0
        %2676 = vmatprep.subr.mxu0 0.0
        %2677 = vmatpush1.msra.mxu0 0.0
        %2678 = vmatprep.subr.mxu0 0.0
        %2679 = vmatpush1.msra.mxu0 0.0
        %2680 = vmatprep.subr.mxu0 0.0
        %2681 = vmatpush1.msra.mxu0 0.0
        %2682 = vmatprep.subr.mxu0 0.0
        %2683 = vmatpush1.msra.mxu0 0.0
        %2684 = vmatprep.subr.mxu0 0.0
        %2685 = vmatpush1.msra.mxu0 0.0
        %2686 = vmatprep.subr.mxu0 0.0
        %2687 = vmatpush1.msra.mxu0 0.0
        %2688 = vmatprep.subr.mxu0 0.0
        %2689 = vmatpush1.msra.mxu0 0.0
        %2690 = vmatprep.subr.mxu0 0.0
        %2691 = vmatpush1.msra.mxu0 0.0
        %2692 = vmatprep.subr.mxu0 0.0
        %2693 = vmatpush1.msra.mxu0 0.0
        %2694 = vmatprep.subr.mxu0 0.0
        %2695 = vmatpush1.msra.mxu0 0.0
        %2696 = vmatprep.subr.mxu0 0.0
        %2697 = vmatpush1.msra.mxu0 0.0
        %2698 = vmatprep.subr.mxu0 0.0
        %2699 = vmatpush1.msra.mxu0 %v933
        %2700 = vmatprep.subr.mxu0 0.0
        %2701 = vmatpush2.msra.mxu0 0.0
        %2702 = vmatprep.subr.mxu0 0.0
        %2703 = vmatpush2.msra.mxu0 0.0
        %2704 = vmatprep.subr.mxu0 0.0
        %2705 = vmatpush2.msra.mxu0 0.0
        %2706 = vmatprep.subr.mxu0 0.0
        %2707 = vmatpush2.msra.mxu0 0.0
        %2708 = vmatprep.subr.mxu0 0.0
        %2709 = vmatpush2.msra.mxu0 0.0
        %2710 = vmatprep.subr.mxu0 0.0
        %2711 = vmatpush2.msra.mxu0 0.0
        %2712 = vmatprep.subr.mxu0 0.0
        %2713 = vmatpush2.msra.mxu0 0.0
        %2714 = vmatprep.subr.mxu0 0.0
        %2715 = vmatpush2.msra.mxu0 0.0
        %2716 = vmatprep.subr.mxu0 0.0
        %2717 = vmatpush2.msra.mxu0 0.0
        %2718 = vmatprep.subr.mxu0 0.0
        %2719 = vmatpush2.msra.mxu0 0.0
        %2720 = vmatprep.subr.mxu0 0.0
        %2721 = vmatpush2.msra.mxu0 0.0
        %2722 = vmatprep.subr.mxu0 0.0
        %2723 = vmatpush2.msra.mxu0 0.0
        %2724 = vmatprep.subr.mxu0 0.0
        %2725 = vmatpush2.msra.mxu0 0.0
        %2726 = vmatprep.subr.mxu0 0.0
        %2727 = vmatpush2.msra.mxu0 0.0
        %2728 = vmatprep.subr.mxu0 0.0
        %2729 = vmatpush2.msra.mxu0 0.0
        %2730 = vmatprep.subr.mxu0 0.0
        %2731 = vmatpush2.msra.mxu0 0.0
        %2732 = vmatprep.mubr.f32.mxu0 0.0
        %2733 = vmatmul.mubr.f32.gmra.mxu0 %v2666
        %v2734 = vpop.f32.mrf.mxu0
        %v2735 = vadd.f32 %v2500, %v2734
        %v2736 = vpop.f32.mrf.mxu0
        %2737 = vdwg.mxu0
        %2739 = vrot.lane.b32.xlu0 %v2578, 124
        %v2740 = vpop.permute.xlu0 %2739
        %v2742 = vadd.f32 %v2735, %v2740
        %v2743 = vxor.u32 %v2742, 2147483648
        %v2744 = vmul.f32 %v2743, 1.442695
        %v2745 = vpow.pop %v2744
        %v2746 = vadd.f32 %v2745, 1.0
        %v2747 = vrcp.pop %v2746
        %v2748 = vmul.f32 1.0, %v2747
        %v2749 = vadd.f32 %v2578, %v1022
        %2751 = vrot.lane.b32.xlu0 %v2749, 60
        %v2752 = vpop.permute.xlu0 %2751
        %v2754 = vmul.f32 %v2748, %v2752
        %2756 = vrot.lane.b32.xlu0 %v2754, 64
        %v2757 = vpop.permute.xlu0 %2756
        %v2759 = vadd.f32 %v2735, %v2757
        %v2760 = vtanh.pop %v2759
        %v2761 = vsub.f32 1.0, %v2748
        %2763 = vrot.lane.b32.xlu0 %v2760, 96
        %v2764 = vpop.permute.xlu0 %2763
        %v2766 = vmul.f32 %v2761, %v2764
        %v2767 = vmul.f32 %v2748, %v2505
        %v2768 = vadd.f32 %v2766, %v2767
        %2769 = vst.msk [vmem:[%s716 + $0x6] sm:$0x1] %vm1051, %v2664
        %2770 = vst.msk [vmem:[%s723 + $0x6] sm:$0x1] %vm1051, %v2656
        %v2771 = vsub.f32 %v2496, %v2662
        %v2772 = vand.u32 2147483647, %v2771
        %v2773 = vmul.f32 %v2772, %v2497
        %v2774 = vsel %vm1051, %v2773, 0.0
        %2775 = vadd.xlane.f32.xlu0 %v2774
        %v2776 = vpop.xlane.xlu0 %2775
        %2777 = vst.msk [vmem:[%s730 + $0x6] sm:$0x1] %vm1060, %v2776
        %v2778 = vsel %vm1051, %v2497, 0.0
        %2779 = vadd.xlane.f32.xlu0 %v2778
        %v2780 = vpop.xlane.xlu0 %2779
        %2781 = vst.msk [vmem:[%s737 + $0x6] sm:$0x1] %vm1060, %v2780
        %v2782 = vld [vmem:[%s681 + $0x7] sm:$0x1]
        %v2783 = vld [vmem:[%s688 + $0x7] sm:$0x1]
        %v2784 = vld [vmem:[%s695 + $0x7] sm:$0x1]
        %v2785 = vld [vmem:[%s702 + $0x7] sm:$0x1]
        %v2786 = vld [vmem:[%s709 + $0x7] sm:$0x1]
        %2788 = vrot.lane.b32.xlu0 %v2785, 32
        %v2789 = vpop.permute.xlu0 %2788
        %v2791 = vmul.f32 %v2768, %v2789
        %2793 = vrot.lane.b32.xlu0 %v2791, 96
        %v2794 = vpop.permute.xlu0 %2793
        %v2795 = vsel %vm763, %v2794, 0
        %2797 = vmatprep.subr.mxu0 0.0
        %2798 = vmatpush1.msra.mxu0 0.0
        %2799 = vmatprep.subr.mxu0 0.0
        %2800 = vmatpush1.msra.mxu0 0.0
        %2801 = vmatprep.subr.mxu0 0.0
        %2802 = vmatpush1.msra.mxu0 0.0
        %2803 = vmatprep.subr.mxu0 0.0
        %2804 = vmatpush1.msra.mxu0 0.0
        %2805 = vmatprep.subr.mxu0 0.0
        %2806 = vmatpush1.msra.mxu0 0.0
        %2807 = vmatprep.subr.mxu0 0.0
        %2808 = vmatpush1.msra.mxu0 0.0
        %2809 = vmatprep.subr.mxu0 0.0
        %2810 = vmatpush1.msra.mxu0 0.0
        %2811 = vmatprep.subr.mxu0 0.0
        %2812 = vmatpush1.msra.mxu0 0.0
        %2813 = vmatprep.subr.mxu0 0.0
        %2814 = vmatpush1.msra.mxu0 0.0
        %2815 = vmatprep.subr.mxu0 0.0
        %2816 = vmatpush1.msra.mxu0 0.0
        %2817 = vmatprep.subr.mxu0 0.0
        %2818 = vmatpush1.msra.mxu0 0.0
        %2819 = vmatprep.subr.mxu0 0.0
        %2820 = vmatpush1.msra.mxu0 0.0
        %2821 = vmatprep.subr.mxu0 0.0
        %2822 = vmatpush1.msra.mxu0 %v747
        %2823 = vmatprep.subr.mxu0 0.0
        %2824 = vmatpush1.msra.mxu0 %v746
        %2825 = vmatprep.subr.mxu0 0.0
        %2826 = vmatpush1.msra.mxu0 %v745
        %2827 = vmatprep.subr.mxu0 0.0
        %2828 = vmatpush1.msra.mxu0 %v744
        %2829 = vmatprep.subr.mxu0 0.0
        %2830 = vmatpush2.msra.mxu0 0.0
        %2831 = vmatprep.subr.mxu0 0.0
        %2832 = vmatpush2.msra.mxu0 0.0
        %2833 = vmatprep.subr.mxu0 0.0
        %2834 = vmatpush2.msra.mxu0 0.0
        %2835 = vmatprep.subr.mxu0 0.0
        %2836 = vmatpush2.msra.mxu0 0.0
        %2837 = vmatprep.subr.mxu0 0.0
        %2838 = vmatpush2.msra.mxu0 0.0
        %2839 = vmatprep.subr.mxu0 0.0
        %2840 = vmatpush2.msra.mxu0 0.0
        %2841 = vmatprep.subr.mxu0 0.0
        %2842 = vmatpush2.msra.mxu0 0.0
        %2843 = vmatprep.subr.mxu0 0.0
        %2844 = vmatpush2.msra.mxu0 0.0
        %2845 = vmatprep.subr.mxu0 0.0
        %2846 = vmatpush2.msra.mxu0 0.0
        %2847 = vmatprep.subr.mxu0 0.0
        %2848 = vmatpush2.msra.mxu0 0.0
        %2849 = vmatprep.subr.mxu0 0.0
        %2850 = vmatpush2.msra.mxu0 0.0
        %2851 = vmatprep.subr.mxu0 0.0
        %2852 = vmatpush2.msra.mxu0 0.0
        %2853 = vmatprep.subr.mxu0 0.0
        %2854 = vmatpush2.msra.mxu0 0.0
        %2855 = vmatprep.subr.mxu0 0.0
        %2856 = vmatpush2.msra.mxu0 0.0
        %2857 = vmatprep.subr.mxu0 0.0
        %2858 = vmatpush2.msra.mxu0 0.0
        %2859 = vmatprep.subr.mxu0 0.0
        %2860 = vmatpush2.msra.mxu0 0.0
        %2861 = vmatprep.mubr.f32.mxu0 0.0
        %2862 = vmatmul.mubr.f32.gmra.mxu0 %v2795
        %v2863 = vpop.f32.mrf.mxu0
        %v2864 = vadd.f32 0.0, %v2863
        %v2865 = vpop.f32.mrf.mxu0
        %2866 = vdwg.mxu0
        %v2867 = vadd.f32 %v2864, %v748
        %v2868 = vsub.f32 1.0, %v2783
        %v2869 = vmul.f32 %v2783, %v2782
        %v2870 = vmul.f32 %v2868, %v2867
        %v2871 = vadd.f32 %v2869, %v2870
        %v2873 = vsel %vm842, %v2871, 0
        %2875 = vmatprep.subr.mxu0 0.0
        %2876 = vmatpush1.msra.mxu0 0.0
        %2877 = vmatprep.subr.mxu0 0.0
        %2878 = vmatpush1.msra.mxu0 0.0
        %2879 = vmatprep.subr.mxu0 0.0
        %2880 = vmatpush1.msra.mxu0 0.0
        %2881 = vmatprep.subr.mxu0 0.0
        %2882 = vmatpush1.msra.mxu0 0.0
        %2883 = vmatprep.subr.mxu0 0.0
        %2884 = vmatpush1.msra.mxu0 0.0
        %2885 = vmatprep.subr.mxu0 0.0
        %2886 = vmatpush1.msra.mxu0 0.0
        %2887 = vmatprep.subr.mxu0 0.0
        %2888 = vmatpush1.msra.mxu0 0.0
        %2889 = vmatprep.subr.mxu0 0.0
        %2890 = vmatpush1.msra.mxu0 0.0
        %2891 = vmatprep.subr.mxu0 0.0
        %2892 = vmatpush1.msra.mxu0 0.0
        %2893 = vmatprep.subr.mxu0 0.0
        %2894 = vmatpush1.msra.mxu0 0.0
        %2895 = vmatprep.subr.mxu0 0.0
        %2896 = vmatpush1.msra.mxu0 0.0
        %2897 = vmatprep.subr.mxu0 0.0
        %2898 = vmatpush1.msra.mxu0 0.0
        %2899 = vmatprep.subr.mxu0 0.0
        %2900 = vmatpush1.msra.mxu0 0.0
        %2901 = vmatprep.subr.mxu0 0.0
        %2902 = vmatpush1.msra.mxu0 0.0
        %2903 = vmatprep.subr.mxu0 0.0
        %2904 = vmatpush1.msra.mxu0 0.0
        %2905 = vmatprep.subr.mxu0 0.0
        %2906 = vmatpush1.msra.mxu0 %v848
        %2907 = vmatprep.subr.mxu0 0.0
        %2908 = vmatpush2.msra.mxu0 0.0
        %2909 = vmatprep.subr.mxu0 0.0
        %2910 = vmatpush2.msra.mxu0 0.0
        %2911 = vmatprep.subr.mxu0 0.0
        %2912 = vmatpush2.msra.mxu0 0.0
        %2913 = vmatprep.subr.mxu0 0.0
        %2914 = vmatpush2.msra.mxu0 0.0
        %2915 = vmatprep.subr.mxu0 0.0
        %2916 = vmatpush2.msra.mxu0 0.0
        %2917 = vmatprep.subr.mxu0 0.0
        %2918 = vmatpush2.msra.mxu0 0.0
        %2919 = vmatprep.subr.mxu0 0.0
        %2920 = vmatpush2.msra.mxu0 0.0
        %2921 = vmatprep.subr.mxu0 0.0
        %2922 = vmatpush2.msra.mxu0 0.0
        %2923 = vmatprep.subr.mxu0 0.0
        %2924 = vmatpush2.msra.mxu0 0.0
        %2925 = vmatprep.subr.mxu0 0.0
        %2926 = vmatpush2.msra.mxu0 0.0
        %2927 = vmatprep.subr.mxu0 0.0
        %2928 = vmatpush2.msra.mxu0 0.0
        %2929 = vmatprep.subr.mxu0 0.0
        %2930 = vmatpush2.msra.mxu0 0.0
        %2931 = vmatprep.subr.mxu0 0.0
        %2932 = vmatpush2.msra.mxu0 0.0
        %2933 = vmatprep.subr.mxu0 0.0
        %2934 = vmatpush2.msra.mxu0 0.0
        %2935 = vmatprep.subr.mxu0 0.0
        %2936 = vmatpush2.msra.mxu0 0.0
        %2937 = vmatprep.subr.mxu0 0.0
        %2938 = vmatpush2.msra.mxu0 0.0
        %2939 = vmatprep.mubr.f32.mxu0 0.0
        %2940 = vmatmul.mubr.f32.gmra.mxu0 %v2873
        %v2941 = vpop.f32.mrf.mxu0
        %v2942 = vadd.f32 %v750, %v2941
        %v2943 = vpop.f32.mrf.mxu0
        %2944 = vdwg.mxu0
        %v2945 = vmul.f32 %v920, %v2784
        %v2946 = vmul.f32 %v922, %v2942
        %v2947 = vadd.f32 %v2945, %v2946
        %v2948 = vadd.f32 %v2947, %v925
        %v2949 = vmul.f32 %v2868, %v2948
        %v2950 = vadd.f32 %v2869, %v2949
        %v2952 = vsel %vm842, %v2950, 0
        %2954 = vmatprep.subr.mxu0 0.0
        %2955 = vmatpush1.msra.mxu0 0.0
        %2956 = vmatprep.subr.mxu0 0.0
        %2957 = vmatpush1.msra.mxu0 0.0
        %2958 = vmatprep.subr.mxu0 0.0
        %2959 = vmatpush1.msra.mxu0 0.0
        %2960 = vmatprep.subr.mxu0 0.0
        %2961 = vmatpush1.msra.mxu0 0.0
        %2962 = vmatprep.subr.mxu0 0.0
        %2963 = vmatpush1.msra.mxu0 0.0
        %2964 = vmatprep.subr.mxu0 0.0
        %2965 = vmatpush1.msra.mxu0 0.0
        %2966 = vmatprep.subr.mxu0 0.0
        %2967 = vmatpush1.msra.mxu0 0.0
        %2968 = vmatprep.subr.mxu0 0.0
        %2969 = vmatpush1.msra.mxu0 0.0
        %2970 = vmatprep.subr.mxu0 0.0
        %2971 = vmatpush1.msra.mxu0 0.0
        %2972 = vmatprep.subr.mxu0 0.0
        %2973 = vmatpush1.msra.mxu0 0.0
        %2974 = vmatprep.subr.mxu0 0.0
        %2975 = vmatpush1.msra.mxu0 0.0
        %2976 = vmatprep.subr.mxu0 0.0
        %2977 = vmatpush1.msra.mxu0 0.0
        %2978 = vmatprep.subr.mxu0 0.0
        %2979 = vmatpush1.msra.mxu0 0.0
        %2980 = vmatprep.subr.mxu0 0.0
        %2981 = vmatpush1.msra.mxu0 0.0
        %2982 = vmatprep.subr.mxu0 0.0
        %2983 = vmatpush1.msra.mxu0 0.0
        %2984 = vmatprep.subr.mxu0 0.0
        %2985 = vmatpush1.msra.mxu0 %v933
        %2986 = vmatprep.subr.mxu0 0.0
        %2987 = vmatpush2.msra.mxu0 0.0
        %2988 = vmatprep.subr.mxu0 0.0
        %2989 = vmatpush2.msra.mxu0 0.0
        %2990 = vmatprep.subr.mxu0 0.0
        %2991 = vmatpush2.msra.mxu0 0.0
        %2992 = vmatprep.subr.mxu0 0.0
        %2993 = vmatpush2.msra.mxu0 0.0
        %2994 = vmatprep.subr.mxu0 0.0
        %2995 = vmatpush2.msra.mxu0 0.0
        %2996 = vmatprep.subr.mxu0 0.0
        %2997 = vmatpush2.msra.mxu0 0.0
        %2998 = vmatprep.subr.mxu0 0.0
        %2999 = vmatpush2.msra.mxu0 0.0
        %3000 = vmatprep.subr.mxu0 0.0
        %3001 = vmatpush2.msra.mxu0 0.0
        %3002 = vmatprep.subr.mxu0 0.0
        %3003 = vmatpush2.msra.mxu0 0.0
        %3004 = vmatprep.subr.mxu0 0.0
        %3005 = vmatpush2.msra.mxu0 0.0
        %3006 = vmatprep.subr.mxu0 0.0
        %3007 = vmatpush2.msra.mxu0 0.0
        %3008 = vmatprep.subr.mxu0 0.0
        %3009 = vmatpush2.msra.mxu0 0.0
        %3010 = vmatprep.subr.mxu0 0.0
        %3011 = vmatpush2.msra.mxu0 0.0
        %3012 = vmatprep.subr.mxu0 0.0
        %3013 = vmatpush2.msra.mxu0 0.0
        %3014 = vmatprep.subr.mxu0 0.0
        %3015 = vmatpush2.msra.mxu0 0.0
        %3016 = vmatprep.subr.mxu0 0.0
        %3017 = vmatpush2.msra.mxu0 0.0
        %3018 = vmatprep.mubr.f32.mxu0 0.0
        %3019 = vmatmul.mubr.f32.gmra.mxu0 %v2952
        %v3020 = vpop.f32.mrf.mxu0
        %v3021 = vadd.f32 %v2786, %v3020
        %v3022 = vpop.f32.mrf.mxu0
        %3023 = vdwg.mxu0
        %3025 = vrot.lane.b32.xlu0 %v2864, 124
        %v3026 = vpop.permute.xlu0 %3025
        %v3028 = vadd.f32 %v3021, %v3026
        %v3029 = vxor.u32 %v3028, 2147483648
        %v3030 = vmul.f32 %v3029, 1.442695
        %v3031 = vpow.pop %v3030
        %v3032 = vadd.f32 %v3031, 1.0
        %v3033 = vrcp.pop %v3032
        %v3034 = vmul.f32 1.0, %v3033
        %v3035 = vadd.f32 %v2864, %v1022
        %3037 = vrot.lane.b32.xlu0 %v3035, 60
        %v3038 = vpop.permute.xlu0 %3037
        %v3040 = vmul.f32 %v3034, %v3038
        %3042 = vrot.lane.b32.xlu0 %v3040, 64
        %v3043 = vpop.permute.xlu0 %3042
        %v3045 = vadd.f32 %v3021, %v3043
        %v3046 = vtanh.pop %v3045
        %v3047 = vsub.f32 1.0, %v3034
        %3049 = vrot.lane.b32.xlu0 %v3046, 96
        %v3050 = vpop.permute.xlu0 %3049
        %v3052 = vmul.f32 %v3047, %v3050
        %v3053 = vmul.f32 %v3034, %v2791
        %v3054 = vadd.f32 %v3052, %v3053
        %3055 = vst.msk [vmem:[%s716 + $0x7] sm:$0x1] %vm1051, %v2950
        %3056 = vst.msk [vmem:[%s723 + $0x7] sm:$0x1] %vm1051, %v2942
        %v3057 = vsub.f32 %v2782, %v2948
        %v3058 = vand.u32 2147483647, %v3057
        %v3059 = vmul.f32 %v3058, %v2783
        %v3060 = vsel %vm1051, %v3059, 0.0
        %3061 = vadd.xlane.f32.xlu0 %v3060
        %v3062 = vpop.xlane.xlu0 %3061
        %3063 = vst.msk [vmem:[%s730 + $0x7] sm:$0x1] %vm1060, %v3062
        %v3064 = vsel %vm1051, %v2783, 0.0
        %3065 = vadd.xlane.f32.xlu0 %v3064
        %v3066 = vpop.xlane.xlu0 %3065
        %3067 = vst.msk [vmem:[%s737 + $0x7] sm:$0x1] %vm1060, %v3066
        %3069 = vrot.lane.b32.xlu0 %v3054, 96
        %v3070 = vpop.permute.xlu0 %3069
        %vm3072 = vcmask 253952
        %3073 = vst.msk [vmem:[#allocation2] sm:$0x1] %vm3072, %v3070
        // Predicated region
        $region77: #{rin_forward.3} parent=67 // pred_check
          %p3074 = pneg %p738
        $region78: #{rin_forward.3} parent=67 // pred_check_branch
          %3076 = sbr.rel (%p3074) target = $region80
        $region79: #{rin_forward.3} parent=67 // pred_region
          %3077 = vst.msk [vmem:[%s674] sm:$0x1] %vm3072, %v3070
        $region80: #{rin_forward.3} parent=67 // pred_fallthru
          _
        %p3078 = scmp.lt.s32.totalorder %s36, 1
        %s3079 = scalar_select %p3078, %s36, 1
        %p3080 = scmp.lt.s32.totalorder %s37, 0
        %s3081 = scalar_select %p3080, %s37, 0
        %s3082 = sadd.s32 %s3081, %s3079
        %s3083 = smul.addr %s3082, 8
        %s3084 = scalar_lea.vmem %s12, %s3083
        %p3085 = scmp.lt.s32.totalorder %s36, 1
        %s3086 = scalar_select %p3085, %s36, 1
        %p3087 = scmp.lt.s32.totalorder %s37, 0
        %s3088 = scalar_select %p3087, %s37, 0
        %s3089 = sadd.s32 %s3088, %s3086
        %s3090 = smul.addr %s3089, 8
        %s3091 = scalar_lea.vmem %s13, %s3090
        %p3092 = scmp.lt.s32.totalorder %s36, 1
        %s3093 = scalar_select %p3092, %s36, 1
        %p3094 = scmp.lt.s32.totalorder %s37, 0
        %s3095 = scalar_select %p3094, %s37, 0
        %s3096 = sadd.s32 %s3095, %s3093
        %s3097 = smul.addr %s3096, 8
        %s3098 = scalar_lea.vmem %s14, %s3097
        %p3099 = scmp.lt.s32.totalorder %s36, 1
        %s3100 = scalar_select %p3099, %s36, 1
        %p3101 = scmp.lt.s32.totalorder %s37, 0
        %s3102 = scalar_select %p3101, %s37, 0
        %s3103 = sadd.s32 %s3102, %s3100
        %s3104 = smul.addr %s3103, 8
        %s3105 = scalar_lea.vmem %s15, %s3104
        %s3106 = sand.u32 %s451, 1
        %s3107 = scalar_lea.sflag [#allocation4], %s3106
        %s3108 = sand.u32 %s451, 1
        %s3109 = scalar_lea.vmem [#allocation6], %s3108
        // Predicated region
        $region81: #{rin_forward.3} parent=67 // pred_check
          %p3110 = pneg %p351
        $region82: #{rin_forward.3} parent=67 // pred_check_branch
          %3112 = sbr.rel (%p3110) target = $region84
        $region83: #{rin_forward.3} parent=67 // pred_region
          _
        $region84: #{rin_forward.3} parent=67 // pred_fallthru
          _
        // Predicated region
        $region85: #{rin_forward.3} parent=67 // pred_check
          %p3113 = pneg %p379
        $region86: #{rin_forward.3} parent=67 // pred_check_branch
          %3115 = sbr.rel (%p3113) target = $region88
        $region87: #{rin_forward.3} parent=67 // pred_region
          _
        $region88: #{rin_forward.3} parent=67 // pred_fallthru
          _
        // Predicated region
        $region89: #{rin_forward.3} parent=67 // pred_check
          %p3116 = pneg %p407
        $region90: #{rin_forward.3} parent=67 // pred_check_branch
          %3118 = sbr.rel (%p3116) target = $region92
        $region91: #{rin_forward.3} parent=67 // pred_region
          _
        $region92: #{rin_forward.3} parent=67 // pred_fallthru
          _
        // Predicated region
        $region93: #{rin_forward.3} parent=67 // pred_check
          %p3119 = pneg %p435
        $region94: #{rin_forward.3} parent=67 // pred_check_branch
          %3121 = sbr.rel (%p3119) target = $region96
        $region95: #{rin_forward.3} parent=67 // pred_region
          _
        $region96: #{rin_forward.3} parent=67 // pred_fallthru
          _
        // Predicated region
        $region97: #{rin_forward.3} parent=67 // pred_check
          %p3122 = pneg %p461
        $region98: #{rin_forward.3} parent=67 // pred_check_branch
          %3124 = sbr.rel (%p3122) target = $region100
        $region99: #{rin_forward.3} parent=67 // pred_region
          %s3126 = ssub.s32 16, 16
          %3127 = vsyncadd %s3107, %s3126
          %s3128 = smul.addr %s36, 16
          %s3129 = scalar_lea.hbm %s16, %s3128
          %s3131 = sshll.u32 %s3109, 4
          %s3132 = int_to_ptr.vmem [resolvable:$true] %s3131
          %3134 = dma.vmem_to_hbm [thread:$0]  %s3132, 16, %s3129, %s3107
        $region100: #{rin_forward.3} parent=67 // pred_fallthru
          _
      $region68: #{rin_forward.3} parent=5 // pred_fallthru
        _
      %p3135 = scmp.le.s32.totalorder 2, %s27
      // Predicated region
      $region101: #{rin_forward.3} parent=5 // pred_check
        %p3136 = pneg %p3135
      $region102: #{rin_forward.3} parent=5 // pred_check_branch
        %3138 = sbr.rel (%p3136) target = $region104
      $region103: #{rin_forward.3} parent=5 // pred_region
        %s3139 = ssub.s32 %s27, 2
        // Predicated region
        $region105: #{rin_forward.3} parent=103 // pred_check
          %p3140 = pneg %p357
        $region106: #{rin_forward.3} parent=103 // pred_check_branch
          %3142 = sbr.rel (%p3140) target = $region108
        $region107: #{rin_forward.3} parent=103 // pred_region
          %p3143 = scmp.lt.s32.totalorder %s38, 1
          %s3144 = scalar_select %p3143, %s38, 1
          %p3145 = scmp.lt.s32.totalorder %s39, 0
          %s3146 = scalar_select %p3145, %s39, 0
          %s3147 = sadd.s32 %s3146, %s3144
          %s3148 = smul.addr %s3147, 8
          %s3149 = scalar_lea.vmem %s12, %s3148
        $region108: #{rin_forward.3} parent=103 // pred_fallthru
          _
        // Predicated region
        $region109: #{rin_forward.3} parent=103 // pred_check
          %p3150 = pneg %p385
        $region110: #{rin_forward.3} parent=103 // pred_check_branch
          %3152 = sbr.rel (%p3150) target = $region112
        $region111: #{rin_forward.3} parent=103 // pred_region
          %p3153 = scmp.lt.s32.totalorder %s38, 1
          %s3154 = scalar_select %p3153, %s38, 1
          %p3155 = scmp.lt.s32.totalorder %s39, 0
          %s3156 = scalar_select %p3155, %s39, 0
          %s3157 = sadd.s32 %s3156, %s3154
          %s3158 = smul.addr %s3157, 8
          %s3159 = scalar_lea.vmem %s13, %s3158
        $region112: #{rin_forward.3} parent=103 // pred_fallthru
          _
        // Predicated region
        $region113: #{rin_forward.3} parent=103 // pred_check
          %p3160 = pneg %p413
        $region114: #{rin_forward.3} parent=103 // pred_check_branch
          %3162 = sbr.rel (%p3160) target = $region116
        $region115: #{rin_forward.3} parent=103 // pred_region
          %p3163 = scmp.lt.s32.totalorder %s38, 1
          %s3164 = scalar_select %p3163, %s38, 1
          %p3165 = scmp.lt.s32.totalorder %s39, 0
          %s3166 = scalar_select %p3165, %s39, 0
          %s3167 = sadd.s32 %s3166, %s3164
          %s3168 = smul.addr %s3167, 8
          %s3169 = scalar_lea.vmem %s14, %s3168
        $region116: #{rin_forward.3} parent=103 // pred_fallthru
          _
        // Predicated region
        $region117: #{rin_forward.3} parent=103 // pred_check
          %p3170 = pneg %p441
        $region118: #{rin_forward.3} parent=103 // pred_check_branch
          %3172 = sbr.rel (%p3170) target = $region120
        $region119: #{rin_forward.3} parent=103 // pred_region
          %p3173 = scmp.lt.s32.totalorder %s38, 1
          %s3174 = scalar_select %p3173, %s38, 1
          %p3175 = scmp.lt.s32.totalorder %s39, 0
          %s3176 = scalar_select %p3175, %s39, 0
          %s3177 = sadd.s32 %s3176, %s3174
          %s3178 = smul.addr %s3177, 8
          %s3179 = scalar_lea.vmem %s15, %s3178
        $region120: #{rin_forward.3} parent=103 // pred_fallthru
          _
        // Predicated region
        $region121: #{rin_forward.3} parent=103 // pred_check
          %p3180 = pneg %p467
        $region122: #{rin_forward.3} parent=103 // pred_check_branch
          %3182 = sbr.rel (%p3180) target = $region124
        $region123: #{rin_forward.3} parent=103 // pred_region
          %s3183 = sand.u32 %s452, 1
          %s3184 = scalar_lea.sflag [#allocation4], %s3183
          %s3185 = sand.u32 %s452, 1
          %s3186 = scalar_lea.vmem [#allocation6], %s3185
          %3187 = dma.done %s3184, 16
        $region124: #{rin_forward.3} parent=103 // pred_fallthru
          _
      $region104: #{rin_forward.3} parent=5 // pred_fallthru
        _
    $region6: #{rin_forward.3} parent=1 // loop_footer
      %s31 = sadd.s32 1, %s27
    $region7: #{rin_forward.3} parent=1 // loop_footer_branch
      %26 = sbr.rel target = $region3
    $region8: #{rin_forward.3} parent=1 // loop_exit
      _
    %3188 = vsyncpa [#allocation4], 1
    %s3189 = scalar_lea.sflag [#allocation4], 1
    %3190 = vsyncpa %s3189, 1
    %3191 = vsyncpa [#allocation5], 1
    %s3192 = scalar_lea.sflag [#allocation5], 1
    %3193 = vsyncpa %s3192, 1

</llo_original>
